<compile_context>
chip_gen: v6e
topology: v6e:2x2x1
jax: 0.10.0
libtpu: 0.0.40
codegen_flags: <defaults>
</compile_context>

<pallas_src>
import jax
import jax.numpy as jnp
import numpy as np
from jax.experimental import pallas as pl
from jax.experimental.pallas import tpu as pltpu

NUM_CLASSES = 1
INPUT_SIZE = 8            # stands in for train_data.shape[1]
HIDDEN_SIZE = 64          # H
HP = 2 * HIDDEN_SIZE      # 128: one vreg holds [h_self | h_below], [r | z], [n_h | n_i]
GCOLS = 4 * HIDDEN_SIZE   # 256 packed gate columns: [ r | z | n_h | n_i ]
NUM_LAYERS = 4
SEQ_LENGTH = 7
FC1_SIZE = 128
BATCH = 2

assert INPUT_SIZE <= HIDDEN_SIZE and HP == 128  # layout assumptions (f32 (8,128) vregs)


# --------------------------------------------------------------------------
# Kernel
# --------------------------------------------------------------------------
def gru_forward_kernel(xp_ref,      # (T, BP, HP)    layer-0 "below": x at lanes [H, H+D)
                       bias_ref,    # (L, 1, GCOLS)  packed biases
                       w_fc1_ref,   # (HP, 128)
                       b_fc1_ref,   # (1, 128)
                       w_fc_ref,    # (128, 128)     only column 0 is real
                       b_fc_ref,    # (1, 128)
                       w_hbm_ref,   # (L, HP, GCOLS) in HBM (pl.ANY) — streamed in
                       out_ref,     # (BP, 128)
                       w_vmem,      # VMEM scratch (L, HP, GCOLS)
                       w_sems):     # DMA semaphores (L,)
    T, BP, hp = xp_ref.shape
    L = w_hbm_ref.shape[0]
    H = hp // 2

    # Kick off all per-layer weight DMAs now; layer l's copy is awaited just
    # before layer l runs, so layers 1..L-1 land behind layer-0 compute.
    for l in range(L):
        pltpu.make_async_copy(w_hbm_ref.at[l], w_vmem.at[l], w_sems.at[l]).start()

    lane = jax.lax.broadcasted_iota(jnp.int32, (BP, hp), 1)
    keep_f = jnp.where(lane < H, 1.0, 0.0)        # keeps lanes 0..H-1, zeroes the rest

    # Layer-0 "below" sequence: x already sits at lanes [H, H+D) (wrapper padding).
    below = [xp_ref[t] for t in range(T)]

    h = jnp.zeros((BP, hp), jnp.float32)
    for l in range(L):                             # static unroll over layers
        pltpu.make_async_copy(w_hbm_ref.at[l], w_vmem.at[l], w_sems.at[l]).wait()
        w_l = w_vmem[l]                            # (HP, GCOLS)
        bb = jnp.broadcast_to(bias_ref[l], (BP, 2 * hp))   # broadcast hoisted out of loop
        last = (l == L - 1)

        h = jnp.zeros((BP, hp), jnp.float32)       # h_0 = 0 (matches torch module)
        new_below = []
        for t in range(T):                         # static unroll (T = 7): one MXU op/cell
            combined = h + below[t]                # [h_{l,t-1} | h_{l-1,t}] in one vreg
            g = jnp.dot(combined, w_l, preferred_element_type=jnp.float32) + bb
            rz = jax.nn.sigmoid(g[:, :hp])         # [ r | z ]           (one EUP pass)
            nv = g[:, hp:]                         # [ Wh_n·h + b_hn | Wi_n·x + b_in ]
            nvs = pltpu.roll(nv, shift=H, axis=1)  # [ n_i | n_h ]       (XLU, off-chain)
            n = jnp.tanh(rz * nv + nvs)            # lanes 0..H-1: tanh(n_i + r * n_h)
            rzs = pltpu.roll(rz, shift=H, axis=1)  # [ z | r ]           (XLU, off-chain)
            h = (keep_f * (1.0 - rzs)) * n + rzs * h   # low: (1-z)n + z h ; upper lanes 0
            if not last:
                new_below.append(pltpu.roll(h, shift=H, axis=1))   # feeds layer l+1
        below = new_below

    # ----- head: relu -> fc_1 -> relu -> fc -----
    out = jnp.maximum(h, 0.0)
    out = jnp.maximum(jnp.dot(out, w_fc1_ref[...],
                              preferred_element_type=jnp.float32) + b_fc1_ref[...], 0.0)
    out_ref[...] = jnp.dot(out, w_fc_ref[...],
                           preferred_element_type=jnp.float32) + b_fc_ref[...]


# --------------------------------------------------------------------------
# Wrapper: pack weights for the fused-cell layout and call the kernel
# --------------------------------------------------------------------------
def _pack_layer(w_ih, w_hh, b_ih, b_hh):
    """Pack one GRU layer.

    Packed weight rows:  0..H-1   -> recurrent (h_{l,t-1}) weights
                         H..2H-1  -> input (h_{l-1,t} / x_t) weights (zero-padded rows)
    Packed columns: [ r | z | n_h | n_i ], each H wide.  torch gate order (r,z,n).
    """
    H = HIDDEN_SIZE
    in_dim = w_ih.shape[0]
    top = jnp.concatenate([w_hh[:, :H], w_hh[:, H:2 * H], w_hh[:, 2 * H:],
                           jnp.zeros((H, H), jnp.float32)], axis=1)          # (H, 4H)
    bot = jnp.concatenate([w_ih[:, :H], w_ih[:, H:2 * H],
                           jnp.zeros((in_dim, H), jnp.float32),
                           w_ih[:, 2 * H:]], axis=1)                          # (in, 4H)
    bot = jnp.pad(bot, ((0, H - in_dim), (0, 0)))
    w = jnp.concatenate([top, bot], axis=0)                                   # (2H, 4H)
    b = jnp.concatenate([b_ih[:H] + b_hh[:H],
                         b_ih[H:2 * H] + b_hh[H:2 * H],
                         b_hh[2 * H:],
                         b_ih[2 * H:]])[None, :]                              # (1, 4H)
    return w, b


@jax.jit
def gru_model(x, params):
    """x: (B, T, D) float32 (PyTorch batch_first convention)."""
    (w_ih0, w_hh0, b_ih0, b_hh0, w_ih_r, w_hh_r, b_ih_r, b_hh_r,
     w_fc1, b_fc1, w_fc, b_fc) = params
    B, T, D = x.shape
    H = HIDDEN_SIZE
    BP = ((B + 7) // 8) * 8                               # pad batch to sublane multiple

    # Layer-0 "below": time-major, batch-padded, features placed at lanes [H, H+D)
    # so rows [H, H+D) of the packed layer-0 weight contract against them.
    x_tm = jnp.transpose(x, (1, 0, 2))                    # (T, B, D)
    x_tm = jnp.pad(x_tm, ((0, 0), (0, BP - B), (0, 0)))   # (T, BP, D)
    xp = jnp.pad(x_tm, ((0, 0), (0, 0), (H, HP - H - D))) # (T, BP, HP)

    ws, bs = [], []
    w0, b0 = _pack_layer(w_ih0, w_hh0, b_ih0, b_hh0)
    ws.append(w0); bs.append(b0)
    for l in range(NUM_LAYERS - 1):
        wl, bl = _pack_layer(w_ih_r[l], w_hh_r[l], b_ih_r[l], b_hh_r[l])
        ws.append(wl); bs.append(bl)
    w_all = jnp.stack(ws)                                 # (L, HP, GCOLS)  ~512 KB
    bias_all = jnp.stack(bs)                              # (L, 1, GCOLS)

    w_fc1_p = jnp.pad(w_fc1, ((0, HP - H), (0, 0)))       # (HP, 128)
    b_fc1_p = b_fc1[None, :]                              # (1, 128)
    w_fc_p = jnp.pad(w_fc, ((0, 0), (0, FC1_SIZE - NUM_CLASSES)))   # (128, 128) lane-dense
    b_fc_p = jnp.pad(b_fc, (0, FC1_SIZE - NUM_CLASSES))[None, :]    # (1, 128)

    vmem = pl.BlockSpec(memory_space=pltpu.MemorySpace.VMEM)
    out_padded = pl.pallas_call(
        gru_forward_kernel,
        out_shape=jax.ShapeDtypeStruct((BP, FC1_SIZE), jnp.float32),
        in_specs=[vmem] * 6 + [pl.BlockSpec(memory_space=pl.ANY)],
        out_specs=vmem,
        scratch_shapes=[pltpu.VMEM((NUM_LAYERS, HP, GCOLS), jnp.float32),
                        pltpu.SemaphoreType.DMA((NUM_LAYERS,))],
    )(xp, bias_all, w_fc1_p, b_fc1_p, w_fc_p, b_fc_p, w_all)

    return out_padded[:B, :NUM_CLASSES]


# --------------------------------------------------------------------------
# Params + pure-JAX reference (torch.nn.GRU semantics)
# --------------------------------------------------------------------------
def init_params(key):
    H, D = HIDDEN_SIZE, INPUT_SIZE
    kg = 1.0 / np.sqrt(H)
    keys = jax.random.split(key, 16)
    u = lambda k, shape, s: jax.random.uniform(k, shape, jnp.float32, -s, s)

    w_ih0 = u(keys[0], (D, 3 * H), kg)                    # (in, out) layout, gates (r,z,n)
    w_hh0 = u(keys[1], (H, 3 * H), kg)
    b_ih0 = u(keys[2], (3 * H,), kg)
    b_hh0 = u(keys[3], (3 * H,), kg)

    w_ih_r = u(keys[4], (NUM_LAYERS - 1, H, 3 * H), kg)
    w_hh_r = u(keys[5], (NUM_LAYERS - 1, H, 3 * H), kg)
    b_ih_r = u(keys[6], (NUM_LAYERS - 1, 3 * H), kg)
    b_hh_r = u(keys[7], (NUM_LAYERS - 1, 3 * H), kg)

    k1 = 1.0 / np.sqrt(H)
    w_fc1 = u(keys[8], (H, FC1_SIZE), k1)
    b_fc1 = u(keys[9], (FC1_SIZE,), k1)
    k2 = 1.0 / np.sqrt(FC1_SIZE)
    w_fc = u(keys[10], (FC1_SIZE, NUM_CLASSES), k2)
    b_fc = u(keys[11], (NUM_CLASSES,), k2)

    return (w_ih0, w_hh0, b_ih0, b_hh0,
            w_ih_r, w_hh_r, b_ih_r, b_hh_r,
            w_fc1, b_fc1, w_fc, b_fc)


def reference_forward(x, params):
    (w_ih0, w_hh0, b_ih0, b_hh0, w_ih_r, w_hh_r, b_ih_r, b_hh_r,
     w_fc1, b_fc1, w_fc, b_fc) = params
    B, T, D = x.shape
    H = HIDDEN_SIZE

    def run_layer(inp, w_ih, w_hh, b_ih, b_hh):
        h = jnp.zeros((B, H), jnp.float32)
        outs = []
        for t in range(T):
            gi = inp[:, t, :] @ w_ih + b_ih[None, :]
            gh = h @ w_hh + b_hh[None, :]
            r = jax.nn.sigmoid(gi[:, :H] + gh[:, :H])
            z = jax.nn.sigmoid(gi[:, H:2 * H] + gh[:, H:2 * H])
            n = jnp.tanh(gi[:, 2 * H:] + r * gh[:, 2 * H:])
            h = (1 - z) * n + z * h
            outs.append(h)
        return jnp.stack(outs, axis=1), h

    seq, h = run_layer(x, w_ih0, w_hh0, b_ih0, b_hh0)
    for l in range(NUM_LAYERS - 1):
        seq, h = run_layer(seq, w_ih_r[l], w_hh_r[l], b_ih_r[l], b_hh_r[l])
    out = jnp.maximum(h, 0.0)
    out = jnp.maximum(out @ w_fc1 + b_fc1[None, :], 0.0)
    return out @ w_fc + b_fc[None, :]


if __name__ == "__main__":
    key = jax.random.PRNGKey(0)
    kx, kp = jax.random.split(key)
    x = jax.random.normal(kx, (BATCH, SEQ_LENGTH, INPUT_SIZE), jnp.float32)
    params = init_params(kp)

    out = jax.block_until_ready(gru_model(x, params))
    ref = jax.block_until_ready(reference_forward(x, params))

    assert out.shape == (BATCH, NUM_CLASSES)
    np.testing.assert_allclose(np.asarray(out), np.asarray(ref),
                               rtol=2e-3, atol=2e-3)
    print("KERNEL_OK")
</pallas_src>

<mosaic_0001>
module attributes {stable_mosaic.version = 11 : i64} {
  func.func @gru_forward_kernel(%arg0: memref<7x8x128xf32, #tpu.memory_space<vmem>>, %arg1: memref<4x1x256xf32, #tpu.memory_space<vmem>>, %arg2: memref<128x128xf32, #tpu.memory_space<vmem>>, %arg3: memref<1x128xf32, #tpu.memory_space<vmem>>, %arg4: memref<128x128xf32, #tpu.memory_space<vmem>>, %arg5: memref<1x128xf32, #tpu.memory_space<vmem>>, %arg6: memref<4x128x256xf32, #tpu.memory_space<any>>, %arg7: memref<8x128xf32, #tpu.memory_space<vmem>>, %arg8: memref<4x128x256xf32, #tpu.memory_space<vmem>>, %arg9: memref<4x!tpu.dma_semaphore, #tpu.memory_space<semaphore_mem>>) attributes {dimension_semantics = [], scalar_prefetch = 0 : i64, scratch_operands = 2 : i64, tpu.core_type = #tpu.core_type<tc>} {
    %c0_i32 = arith.constant 0 : i32
    %c0_i32_0 = arith.constant 0 : i32
    %c0_i32_1 = arith.constant 0 : i32
    %c0_i32_2 = arith.constant 0 : i32
    %c0_i32_3 = arith.constant 0 : i32
    %0 = tpu.memref_slice %arg6[%c0_i32, %c0_i32_2, %c0_i32_3] : memref<4x128x256xf32, #tpu.memory_space<any>> -> memref<1x128x256xf32, #tpu.memory_space<any>>
    %1 = tpu.memref_squeeze %0 : memref<1x128x256xf32, #tpu.memory_space<any>> -> memref<128x256xf32, #tpu.memory_space<any>>
    %c0_i32_4 = arith.constant 0 : i32
    %c0_i32_5 = arith.constant 0 : i32
    %2 = tpu.memref_slice %arg8[%c0_i32_0, %c0_i32_4, %c0_i32_5] : memref<4x128x256xf32, #tpu.memory_space<vmem>> -> memref<1x128x256xf32, #tpu.memory_space<vmem>>
    %3 = tpu.memref_squeeze %2 : memref<1x128x256xf32, #tpu.memory_space<vmem>> -> memref<128x256xf32, #tpu.memory_space<vmem>>
    %4 = tpu.memref_slice %arg9[%c0_i32_1] : memref<4x!tpu.dma_semaphore, #tpu.memory_space<semaphore_mem>> -> memref<1x!tpu.dma_semaphore, #tpu.memory_space<semaphore_mem>>
    %5 = tpu.memref_squeeze %4 : memref<1x!tpu.dma_semaphore, #tpu.memory_space<semaphore_mem>> -> memref<!tpu.dma_semaphore, #tpu.memory_space<semaphore_mem>>
    tpu.enqueue_dma source(%1 : memref<128x256xf32, #tpu.memory_space<any>>) target(%3 : memref<128x256xf32, #tpu.memory_space<vmem>>) target_semaphore(%5 : memref<!tpu.dma_semaphore, #tpu.memory_space<semaphore_mem>>)
    %c1_i32 = arith.constant 1 : i32
    %c1_i32_6 = arith.constant 1 : i32
    %c1_i32_7 = arith.constant 1 : i32
    %c0_i32_8 = arith.constant 0 : i32
    %c0_i32_9 = arith.constant 0 : i32
    %6 = tpu.memref_slice %arg6[%c1_i32, %c0_i32_8, %c0_i32_9] : memref<4x128x256xf32, #tpu.memory_space<any>> -> memref<1x128x256xf32, #tpu.memory_space<any>>
    %7 = tpu.memref_squeeze %6 : memref<1x128x256xf32, #tpu.memory_space<any>> -> memref<128x256xf32, #tpu.memory_space<any>>
    %c0_i32_10 = arith.constant 0 : i32
    %c0_i32_11 = arith.constant 0 : i32
    %8 = tpu.memref_slice %arg8[%c1_i32_6, %c0_i32_10, %c0_i32_11] : memref<4x128x256xf32, #tpu.memory_space<vmem>> -> memref<1x128x256xf32, #tpu.memory_space<vmem>>
    %9 = tpu.memref_squeeze %8 : memref<1x128x256xf32, #tpu.memory_space<vmem>> -> memref<128x256xf32, #tpu.memory_space<vmem>>
    %10 = tpu.memref_slice %arg9[%c1_i32_7] : memref<4x!tpu.dma_semaphore, #tpu.memory_space<semaphore_mem>> -> memref<1x!tpu.dma_semaphore, #tpu.memory_space<semaphore_mem>>
    %11 = tpu.memref_squeeze %10 : memref<1x!tpu.dma_semaphore, #tpu.memory_space<semaphore_mem>> -> memref<!tpu.dma_semaphore, #tpu.memory_space<semaphore_mem>>
    tpu.enqueue_dma source(%7 : memref<128x256xf32, #tpu.memory_space<any>>) target(%9 : memref<128x256xf32, #tpu.memory_space<vmem>>) target_semaphore(%11 : memref<!tpu.dma_semaphore, #tpu.memory_space<semaphore_mem>>)
    %c2_i32 = arith.constant 2 : i32
    %c2_i32_12 = arith.constant 2 : i32
    %c2_i32_13 = arith.constant 2 : i32
    %c0_i32_14 = arith.constant 0 : i32
    %c0_i32_15 = arith.constant 0 : i32
    %12 = tpu.memref_slice %arg6[%c2_i32, %c0_i32_14, %c0_i32_15] : memref<4x128x256xf32, #tpu.memory_space<any>> -> memref<1x128x256xf32, #tpu.memory_space<any>>
    %13 = tpu.memref_squeeze %12 : memref<1x128x256xf32, #tpu.memory_space<any>> -> memref<128x256xf32, #tpu.memory_space<any>>
    %c0_i32_16 = arith.constant 0 : i32
    %c0_i32_17 = arith.constant 0 : i32
    %14 = tpu.memref_slice %arg8[%c2_i32_12, %c0_i32_16, %c0_i32_17] : memref<4x128x256xf32, #tpu.memory_space<vmem>> -> memref<1x128x256xf32, #tpu.memory_space<vmem>>
    %15 = tpu.memref_squeeze %14 : memref<1x128x256xf32, #tpu.memory_space<vmem>> -> memref<128x256xf32, #tpu.memory_space<vmem>>
    %16 = tpu.memref_slice %arg9[%c2_i32_13] : memref<4x!tpu.dma_semaphore, #tpu.memory_space<semaphore_mem>> -> memref<1x!tpu.dma_semaphore, #tpu.memory_space<semaphore_mem>>
    %17 = tpu.memref_squeeze %16 : memref<1x!tpu.dma_semaphore, #tpu.memory_space<semaphore_mem>> -> memref<!tpu.dma_semaphore, #tpu.memory_space<semaphore_mem>>
    tpu.enqueue_dma source(%13 : memref<128x256xf32, #tpu.memory_space<any>>) target(%15 : memref<128x256xf32, #tpu.memory_space<vmem>>) target_semaphore(%17 : memref<!tpu.dma_semaphore, #tpu.memory_space<semaphore_mem>>)
    %c3_i32 = arith.constant 3 : i32
    %c3_i32_18 = arith.constant 3 : i32
    %c3_i32_19 = arith.constant 3 : i32
    %c0_i32_20 = arith.constant 0 : i32
    %c0_i32_21 = arith.constant 0 : i32
    %18 = tpu.memref_slice %arg6[%c3_i32, %c0_i32_20, %c0_i32_21] : memref<4x128x256xf32, #tpu.memory_space<any>> -> memref<1x128x256xf32, #tpu.memory_space<any>>
    %19 = tpu.memref_squeeze %18 : memref<1x128x256xf32, #tpu.memory_space<any>> -> memref<128x256xf32, #tpu.memory_space<any>>
    %c0_i32_22 = arith.constant 0 : i32
    %c0_i32_23 = arith.constant 0 : i32
    %20 = tpu.memref_slice %arg8[%c3_i32_18, %c0_i32_22, %c0_i32_23] : memref<4x128x256xf32, #tpu.memory_space<vmem>> -> memref<1x128x256xf32, #tpu.memory_space<vmem>>
    %21 = tpu.memref_squeeze %20 : memref<1x128x256xf32, #tpu.memory_space<vmem>> -> memref<128x256xf32, #tpu.memory_space<vmem>>
    %22 = tpu.memref_slice %arg9[%c3_i32_19] : memref<4x!tpu.dma_semaphore, #tpu.memory_space<semaphore_mem>> -> memref<1x!tpu.dma_semaphore, #tpu.memory_space<semaphore_mem>>
    %23 = tpu.memref_squeeze %22 : memref<1x!tpu.dma_semaphore, #tpu.memory_space<semaphore_mem>> -> memref<!tpu.dma_semaphore, #tpu.memory_space<semaphore_mem>>
    tpu.enqueue_dma source(%19 : memref<128x256xf32, #tpu.memory_space<any>>) target(%21 : memref<128x256xf32, #tpu.memory_space<vmem>>) target_semaphore(%23 : memref<!tpu.dma_semaphore, #tpu.memory_space<semaphore_mem>>)
    %24 = tpu.iota {dimensions = array<i32: 1>} : vector<8x128xi32>
    %c64_i32 = arith.constant 64 : i32
    %25 = vector.broadcast %c64_i32 : i32 to vector<8x128xi32>
    %26 = arith.cmpi slt, %24, %25 : vector<8x128xi32>
    %cst = arith.constant 1.000000e+00 : f32
    %cst_24 = arith.constant 0.000000e+00 : f32
    %27 = vector.broadcast %cst : f32 to vector<8x128xf32>
    %28 = vector.broadcast %cst_24 : f32 to vector<8x128xf32>
    %29 = arith.select %26, %27, %28 : vector<8x128xi1>, vector<8x128xf32>
    %c0 = arith.constant 0 : index
    %c0_25 = arith.constant 0 : index
    %c0_26 = arith.constant 0 : index
    %30 = vector.load %arg0[%c0, %c0_25, %c0_26] : memref<7x8x128xf32, #tpu.memory_space<vmem>>, vector<1x8x128xf32>
    %31 = vector.shape_cast %30 : vector<1x8x128xf32> to vector<8x128xf32>
    %c1 = arith.constant 1 : index
    %c0_27 = arith.constant 0 : index
    %c0_28 = arith.constant 0 : index
    %32 = vector.load %arg0[%c1, %c0_27, %c0_28] : memref<7x8x128xf32, #tpu.memory_space<vmem>>, vector<1x8x128xf32>
    %33 = vector.shape_cast %32 : vector<1x8x128xf32> to vector<8x128xf32>
    %c2 = arith.constant 2 : index
    %c0_29 = arith.constant 0 : index
    %c0_30 = arith.constant 0 : index
    %34 = vector.load %arg0[%c2, %c0_29, %c0_30] : memref<7x8x128xf32, #tpu.memory_space<vmem>>, vector<1x8x128xf32>
    %35 = vector.shape_cast %34 : vector<1x8x128xf32> to vector<8x128xf32>
    %c3 = arith.constant 3 : index
    %c0_31 = arith.constant 0 : index
    %c0_32 = arith.constant 0 : index
    %36 = vector.load %arg0[%c3, %c0_31, %c0_32] : memref<7x8x128xf32, #tpu.memory_space<vmem>>, vector<1x8x128xf32>
    %37 = vector.shape_cast %36 : vector<1x8x128xf32> to vector<8x128xf32>
    %c4 = arith.constant 4 : index
    %c0_33 = arith.constant 0 : index
    %c0_34 = arith.constant 0 : index
    %38 = vector.load %arg0[%c4, %c0_33, %c0_34] : memref<7x8x128xf32, #tpu.memory_space<vmem>>, vector<1x8x128xf32>
    %39 = vector.shape_cast %38 : vector<1x8x128xf32> to vector<8x128xf32>
    %c5 = arith.constant 5 : index
    %c0_35 = arith.constant 0 : index
    %c0_36 = arith.constant 0 : index
    %40 = vector.load %arg0[%c5, %c0_35, %c0_36] : memref<7x8x128xf32, #tpu.memory_space<vmem>>, vector<1x8x128xf32>
    %41 = vector.shape_cast %40 : vector<1x8x128xf32> to vector<8x128xf32>
    %c6 = arith.constant 6 : index
    %c0_37 = arith.constant 0 : index
    %c0_38 = arith.constant 0 : index
    %42 = vector.load %arg0[%c6, %c0_37, %c0_38] : memref<7x8x128xf32, #tpu.memory_space<vmem>>, vector<1x8x128xf32>
    %43 = vector.shape_cast %42 : vector<1x8x128xf32> to vector<8x128xf32>
    %c0_i32_39 = arith.constant 0 : i32
    %c0_i32_40 = arith.constant 0 : i32
    %c0_i32_41 = arith.constant 0 : i32
    %c0_i32_42 = arith.constant 0 : i32
    %c0_i32_43 = arith.constant 0 : i32
    %44 = tpu.memref_slice %arg6[%c0_i32_39, %c0_i32_42, %c0_i32_43] : memref<4x128x256xf32, #tpu.memory_space<any>> -> memref<1x128x256xf32, #tpu.memory_space<any>>
    %45 = tpu.memref_squeeze %44 : memref<1x128x256xf32, #tpu.memory_space<any>> -> memref<128x256xf32, #tpu.memory_space<any>>
    %c0_i32_44 = arith.constant 0 : i32
    %c0_i32_45 = arith.constant 0 : i32
    %46 = tpu.memref_slice %arg8[%c0_i32_40, %c0_i32_44, %c0_i32_45] : memref<4x128x256xf32, #tpu.memory_space<vmem>> -> memref<1x128x256xf32, #tpu.memory_space<vmem>>
    %47 = tpu.memref_squeeze %46 : memref<1x128x256xf32, #tpu.memory_space<vmem>> -> memref<128x256xf32, #tpu.memory_space<vmem>>
    %48 = tpu.memref_slice %arg9[%c0_i32_41] : memref<4x!tpu.dma_semaphore, #tpu.memory_space<semaphore_mem>> -> memref<1x!tpu.dma_semaphore, #tpu.memory_space<semaphore_mem>>
    %49 = tpu.memref_squeeze %48 : memref<1x!tpu.dma_semaphore, #tpu.memory_space<semaphore_mem>> -> memref<!tpu.dma_semaphore, #tpu.memory_space<semaphore_mem>>
    tpu.wait_dma2 semaphore(%49 : memref<!tpu.dma_semaphore, #tpu.memory_space<semaphore_mem>>) src(%45 : memref<128x256xf32, #tpu.memory_space<any>>) dst(%47 : memref<128x256xf32, #tpu.memory_space<vmem>>)
    %c0_46 = arith.constant 0 : index
    %c0_47 = arith.constant 0 : index
    %c0_48 = arith.constant 0 : index
    %50 = vector.load %arg8[%c0_46, %c0_47, %c0_48] : memref<4x128x256xf32, #tpu.memory_space<vmem>>, vector<1x128x256xf32>
    %51 = vector.shape_cast %50 : vector<1x128x256xf32> to vector<128x256xf32>
    %c0_49 = arith.constant 0 : index
    %c0_50 = arith.constant 0 : index
    %c0_51 = arith.constant 0 : index
    %52 = vector.load %arg1[%c0_49, %c0_50, %c0_51] : memref<4x1x256xf32, #tpu.memory_space<vmem>>, vector<1x1x256xf32>
    %53 = vector.shape_cast %52 : vector<1x1x256xf32> to vector<1x256xf32>
    %54 = vector.shape_cast %53 : vector<1x256xf32> to vector<1x256xf32>
    %55 = vector.broadcast %54 : vector<1x256xf32> to vector<8x256xf32>
    %cst_52 = arith.constant 0.000000e+00 : f32
    %56 = vector.broadcast %cst_52 : f32 to vector<8x128xf32>
    %57 = arith.addf %56, %31 : vector<8x128xf32>
    %cst_53 = arith.constant dense<0.000000e+00> : vector<8x256xf32>
    %58 = tpu.matmul %57, %51, %cst_53 {dimension_numbers = #tpu.dot_dimension_numbers<[1], [0], [0], [1], [0, 0, 1, 1], [], []>} : vector<8x128xf32>, vector<128x256xf32>, vector<8x256xf32> -> vector<8x256xf32>
    %59 = arith.addf %58, %55 : vector<8x256xf32>
    %60 = vector.extract_strided_slice %59 {offsets = [0, 0], sizes = [8, 128], strides = [1, 1]} : vector<8x256xf32> to vector<8x128xf32>
    %61 = arith.negf %60 : vector<8x128xf32>
    %62 = math.exp %61 : vector<8x128xf32>
    %cst_54 = arith.constant 1.000000e+00 : f32
    %63 = vector.broadcast %cst_54 : f32 to vector<8x128xf32>
    %64 = arith.addf %63, %62 : vector<8x128xf32>
    %65 = arith.divf %63, %64 : vector<8x128xf32>
    %66 = vector.extract_strided_slice %59 {offsets = [0, 128], sizes = [8, 128], strides = [1, 1]} : vector<8x256xf32> to vector<8x128xf32>
    %c64_i32_55 = arith.constant 64 : i32
    %67 = tpu.dynamic_rotate %66 by %c64_i32_55 dim 1 : vector<8x128xf32>, i32 -> vector<8x128xf32>
    %68 = arith.mulf %65, %66 : vector<8x128xf32>
    %69 = arith.addf %68, %67 : vector<8x128xf32>
    %70 = math.tanh %69 : vector<8x128xf32>
    %c64_i32_56 = arith.constant 64 : i32
    %71 = tpu.dynamic_rotate %65 by %c64_i32_56 dim 1 : vector<8x128xf32>, i32 -> vector<8x128xf32>
    %cst_57 = arith.constant 1.000000e+00 : f32
    %72 = vector.broadcast %cst_57 : f32 to vector<8x128xf32>
    %73 = arith.subf %72, %71 : vector<8x128xf32>
    %74 = arith.mulf %29, %73 : vector<8x128xf32>
    %75 = arith.mulf %74, %70 : vector<8x128xf32>
    %76 = arith.mulf %71, %56 : vector<8x128xf32>
    %77 = arith.addf %75, %76 : vector<8x128xf32>
    %c64_i32_58 = arith.constant 64 : i32
    %78 = tpu.dynamic_rotate %77 by %c64_i32_58 dim 1 : vector<8x128xf32>, i32 -> vector<8x128xf32>
    %79 = arith.addf %77, %33 : vector<8x128xf32>
    %cst_59 = arith.constant dense<0.000000e+00> : vector<8x256xf32>
    %80 = tpu.matmul %79, %51, %cst_59 {dimension_numbers = #tpu.dot_dimension_numbers<[1], [0], [0], [1], [0, 0, 1, 1], [], []>} : vector<8x128xf32>, vector<128x256xf32>, vector<8x256xf32> -> vector<8x256xf32>
    %81 = arith.addf %80, %55 : vector<8x256xf32>
    %82 = vector.extract_strided_slice %81 {offsets = [0, 0], sizes = [8, 128], strides = [1, 1]} : vector<8x256xf32> to vector<8x128xf32>
    %83 = arith.negf %82 : vector<8x128xf32>
    %84 = math.exp %83 : vector<8x128xf32>
    %cst_60 = arith.constant 1.000000e+00 : f32
    %85 = vector.broadcast %cst_60 : f32 to vector<8x128xf32>
    %86 = arith.addf %85, %84 : vector<8x128xf32>
    %87 = arith.divf %85, %86 : vector<8x128xf32>
    %88 = vector.extract_strided_slice %81 {offsets = [0, 128], sizes = [8, 128], strides = [1, 1]} : vector<8x256xf32> to vector<8x128xf32>
    %c64_i32_61 = arith.constant 64 : i32
    %89 = tpu.dynamic_rotate %88 by %c64_i32_61 dim 1 : vector<8x128xf32>, i32 -> vector<8x128xf32>
    %90 = arith.mulf %87, %88 : vector<8x128xf32>
    %91 = arith.addf %90, %89 : vector<8x128xf32>
    %92 = math.tanh %91 : vector<8x128xf32>
    %c64_i32_62 = arith.constant 64 : i32
    %93 = tpu.dynamic_rotate %87 by %c64_i32_62 dim 1 : vector<8x128xf32>, i32 -> vector<8x128xf32>
    %cst_63 = arith.constant 1.000000e+00 : f32
    %94 = vector.broadcast %cst_63 : f32 to vector<8x128xf32>
    %95 = arith.subf %94, %93 : vector<8x128xf32>
    %96 = arith.mulf %29, %95 : vector<8x128xf32>
    %97 = arith.mulf %96, %92 : vector<8x128xf32>
    %98 = arith.mulf %93, %77 : vector<8x128xf32>
    %99 = arith.addf %97, %98 : vector<8x128xf32>
    %c64_i32_64 = arith.constant 64 : i32
    %100 = tpu.dynamic_rotate %99 by %c64_i32_64 dim 1 : vector<8x128xf32>, i32 -> vector<8x128xf32>
    %101 = arith.addf %99, %35 : vector<8x128xf32>
    %cst_65 = arith.constant dense<0.000000e+00> : vector<8x256xf32>
    %102 = tpu.matmul %101, %51, %cst_65 {dimension_numbers = #tpu.dot_dimension_numbers<[1], [0], [0], [1], [0, 0, 1, 1], [], []>} : vector<8x128xf32>, vector<128x256xf32>, vector<8x256xf32> -> vector<8x256xf32>
    %103 = arith.addf %102, %55 : vector<8x256xf32>
    %104 = vector.extract_strided_slice %103 {offsets = [0, 0], sizes = [8, 128], strides = [1, 1]} : vector<8x256xf32> to vector<8x128xf32>
    %105 = arith.negf %104 : vector<8x128xf32>
    %106 = math.exp %105 : vector<8x128xf32>
    %cst_66 = arith.constant 1.000000e+00 : f32
    %107 = vector.broadcast %cst_66 : f32 to vector<8x128xf32>
    %108 = arith.addf %107, %106 : vector<8x128xf32>
    %109 = arith.divf %107, %108 : vector<8x128xf32>
    %110 = vector.extract_strided_slice %103 {offsets = [0, 128], sizes = [8, 128], strides = [1, 1]} : vector<8x256xf32> to vector<8x128xf32>
    %c64_i32_67 = arith.constant 64 : i32
    %111 = tpu.dynamic_rotate %110 by %c64_i32_67 dim 1 : vector<8x128xf32>, i32 -> vector<8x128xf32>
    %112 = arith.mulf %109, %110 : vector<8x128xf32>
    %113 = arith.addf %112, %111 : vector<8x128xf32>
    %114 = math.tanh %113 : vector<8x128xf32>
    %c64_i32_68 = arith.constant 64 : i32
    %115 = tpu.dynamic_rotate %109 by %c64_i32_68 dim 1 : vector<8x128xf32>, i32 -> vector<8x128xf32>
    %cst_69 = arith.constant 1.000000e+00 : f32
    %116 = vector.broadcast %cst_69 : f32 to vector<8x128xf32>
    %117 = arith.subf %116, %115 : vector<8x128xf32>
    %118 = arith.mulf %29, %117 : vector<8x128xf32>
    %119 = arith.mulf %118, %114 : vector<8x128xf32>
    %120 = arith.mulf %115, %99 : vector<8x128xf32>
    %121 = arith.addf %119, %120 : vector<8x128xf32>
    %c64_i32_70 = arith.constant 64 : i32
    %122 = tpu.dynamic_rotate %121 by %c64_i32_70 dim 1 : vector<8x128xf32>, i32 -> vector<8x128xf32>
    %123 = arith.addf %121, %37 : vector<8x128xf32>
    %cst_71 = arith.constant dense<0.000000e+00> : vector<8x256xf32>
    %124 = tpu.matmul %123, %51, %cst_71 {dimension_numbers = #tpu.dot_dimension_numbers<[1], [0], [0], [1], [0, 0, 1, 1], [], []>} : vector<8x128xf32>, vector<128x256xf32>, vector<8x256xf32> -> vector<8x256xf32>
    %125 = arith.addf %124, %55 : vector<8x256xf32>
    %126 = vector.extract_strided_slice %125 {offsets = [0, 0], sizes = [8, 128], strides = [1, 1]} : vector<8x256xf32> to vector<8x128xf32>
    %127 = arith.negf %126 : vector<8x128xf32>
    %128 = math.exp %127 : vector<8x128xf32>
    %cst_72 = arith.constant 1.000000e+00 : f32
    %129 = vector.broadcast %cst_72 : f32 to vector<8x128xf32>
    %130 = arith.addf %129, %128 : vector<8x128xf32>
    %131 = arith.divf %129, %130 : vector<8x128xf32>
    %132 = vector.extract_strided_slice %125 {offsets = [0, 128], sizes = [8, 128], strides = [1, 1]} : vector<8x256xf32> to vector<8x128xf32>
    %c64_i32_73 = arith.constant 64 : i32
    %133 = tpu.dynamic_rotate %132 by %c64_i32_73 dim 1 : vector<8x128xf32>, i32 -> vector<8x128xf32>
    %134 = arith.mulf %131, %132 : vector<8x128xf32>
    %135 = arith.addf %134, %133 : vector<8x128xf32>
    %136 = math.tanh %135 : vector<8x128xf32>
    %c64_i32_74 = arith.constant 64 : i32
    %137 = tpu.dynamic_rotate %131 by %c64_i32_74 dim 1 : vector<8x128xf32>, i32 -> vector<8x128xf32>
    %cst_75 = arith.constant 1.000000e+00 : f32
    %138 = vector.broadcast %cst_75 : f32 to vector<8x128xf32>
    %139 = arith.subf %138, %137 : vector<8x128xf32>
    %140 = arith.mulf %29, %139 : vector<8x128xf32>
    %141 = arith.mulf %140, %136 : vector<8x128xf32>
    %142 = arith.mulf %137, %121 : vector<8x128xf32>
    %143 = arith.addf %141, %142 : vector<8x128xf32>
    %c64_i32_76 = arith.constant 64 : i32
    %144 = tpu.dynamic_rotate %143 by %c64_i32_76 dim 1 : vector<8x128xf32>, i32 -> vector<8x128xf32>
    %145 = arith.addf %143, %39 : vector<8x128xf32>
    %cst_77 = arith.constant dense<0.000000e+00> : vector<8x256xf32>
    %146 = tpu.matmul %145, %51, %cst_77 {dimension_numbers = #tpu.dot_dimension_numbers<[1], [0], [0], [1], [0, 0, 1, 1], [], []>} : vector<8x128xf32>, vector<128x256xf32>, vector<8x256xf32> -> vector<8x256xf32>
    %147 = arith.addf %146, %55 : vector<8x256xf32>
    %148 = vector.extract_strided_slice %147 {offsets = [0, 0], sizes = [8, 128], strides = [1, 1]} : vector<8x256xf32> to vector<8x128xf32>
    %149 = arith.negf %148 : vector<8x128xf32>
    %150 = math.exp %149 : vector<8x128xf32>
    %cst_78 = arith.constant 1.000000e+00 : f32
    %151 = vector.broadcast %cst_78 : f32 to vector<8x128xf32>
    %152 = arith.addf %151, %150 : vector<8x128xf32>
    %153 = arith.divf %151, %152 : vector<8x128xf32>
    %154 = vector.extract_strided_slice %147 {offsets = [0, 128], sizes = [8, 128], strides = [1, 1]} : vector<8x256xf32> to vector<8x128xf32>
    %c64_i32_79 = arith.constant 64 : i32
    %155 = tpu.dynamic_rotate %154 by %c64_i32_79 dim 1 : vector<8x128xf32>, i32 -> vector<8x128xf32>
    %156 = arith.mulf %153, %154 : vector<8x128xf32>
    %157 = arith.addf %156, %155 : vector<8x128xf32>
    %158 = math.tanh %157 : vector<8x128xf32>
    %c64_i32_80 = arith.constant 64 : i32
    %159 = tpu.dynamic_rotate %153 by %c64_i32_80 dim 1 : vector<8x128xf32>, i32 -> vector<8x128xf32>
    %cst_81 = arith.constant 1.000000e+00 : f32
    %160 = vector.broadcast %cst_81 : f32 to vector<8x128xf32>
    %161 = arith.subf %160, %159 : vector<8x128xf32>
    %162 = arith.mulf %29, %161 : vector<8x128xf32>
    %163 = arith.mulf %162, %158 : vector<8x128xf32>
    %164 = arith.mulf %159, %143 : vector<8x128xf32>
    %165 = arith.addf %163, %164 : vector<8x128xf32>
    %c64_i32_82 = arith.constant 64 : i32
    %166 = tpu.dynamic_rotate %165 by %c64_i32_82 dim 1 : vector<8x128xf32>, i32 -> vector<8x128xf32>
    %167 = arith.addf %165, %41 : vector<8x128xf32>
    %cst_83 = arith.constant dense<0.000000e+00> : vector<8x256xf32>
    %168 = tpu.matmul %167, %51, %cst_83 {dimension_numbers = #tpu.dot_dimension_numbers<[1], [0], [0], [1], [0, 0, 1, 1], [], []>} : vector<8x128xf32>, vector<128x256xf32>, vector<8x256xf32> -> vector<8x256xf32>
    %169 = arith.addf %168, %55 : vector<8x256xf32>
    %170 = vector.extract_strided_slice %169 {offsets = [0, 0], sizes = [8, 128], strides = [1, 1]} : vector<8x256xf32> to vector<8x128xf32>
    %171 = arith.negf %170 : vector<8x128xf32>
    %172 = math.exp %171 : vector<8x128xf32>
    %cst_84 = arith.constant 1.000000e+00 : f32
    %173 = vector.broadcast %cst_84 : f32 to vector<8x128xf32>
    %174 = arith.addf %173, %172 : vector<8x128xf32>
    %175 = arith.divf %173, %174 : vector<8x128xf32>
    %176 = vector.extract_strided_slice %169 {offsets = [0, 128], sizes = [8, 128], strides = [1, 1]} : vector<8x256xf32> to vector<8x128xf32>
    %c64_i32_85 = arith.constant 64 : i32
    %177 = tpu.dynamic_rotate %176 by %c64_i32_85 dim 1 : vector<8x128xf32>, i32 -> vector<8x128xf32>
    %178 = arith.mulf %175, %176 : vector<8x128xf32>
    %179 = arith.addf %178, %177 : vector<8x128xf32>
    %180 = math.tanh %179 : vector<8x128xf32>
    %c64_i32_86 = arith.constant 64 : i32
    %181 = tpu.dynamic_rotate %175 by %c64_i32_86 dim 1 : vector<8x128xf32>, i32 -> vector<8x128xf32>
    %cst_87 = arith.constant 1.000000e+00 : f32
    %182 = vector.broadcast %cst_87 : f32 to vector<8x128xf32>
    %183 = arith.subf %182, %181 : vector<8x128xf32>
    %184 = arith.mulf %29, %183 : vector<8x128xf32>
    %185 = arith.mulf %184, %180 : vector<8x128xf32>
    %186 = arith.mulf %181, %165 : vector<8x128xf32>
    %187 = arith.addf %185, %186 : vector<8x128xf32>
    %c64_i32_88 = arith.constant 64 : i32
    %188 = tpu.dynamic_rotate %187 by %c64_i32_88 dim 1 : vector<8x128xf32>, i32 -> vector<8x128xf32>
    %189 = arith.addf %187, %43 : vector<8x128xf32>
    %cst_89 = arith.constant dense<0.000000e+00> : vector<8x256xf32>
    %190 = tpu.matmul %189, %51, %cst_89 {dimension_numbers = #tpu.dot_dimension_numbers<[1], [0], [0], [1], [0, 0, 1, 1], [], []>} : vector<8x128xf32>, vector<128x256xf32>, vector<8x256xf32> -> vector<8x256xf32>
    %191 = arith.addf %190, %55 : vector<8x256xf32>
    %192 = vector.extract_strided_slice %191 {offsets = [0, 0], sizes = [8, 128], strides = [1, 1]} : vector<8x256xf32> to vector<8x128xf32>
    %193 = arith.negf %192 : vector<8x128xf32>
    %194 = math.exp %193 : vector<8x128xf32>
    %cst_90 = arith.constant 1.000000e+00 : f32
    %195 = vector.broadcast %cst_90 : f32 to vector<8x128xf32>
    %196 = arith.addf %195, %194 : vector<8x128xf32>
    %197 = arith.divf %195, %196 : vector<8x128xf32>
    %198 = vector.extract_strided_slice %191 {offsets = [0, 128], sizes = [8, 128], strides = [1, 1]} : vector<8x256xf32> to vector<8x128xf32>
    %c64_i32_91 = arith.constant 64 : i32
    %199 = tpu.dynamic_rotate %198 by %c64_i32_91 dim 1 : vector<8x128xf32>, i32 -> vector<8x128xf32>
    %200 = arith.mulf %197, %198 : vector<8x128xf32>
    %201 = arith.addf %200, %199 : vector<8x128xf32>
    %202 = math.tanh %201 : vector<8x128xf32>
    %c64_i32_92 = arith.constant 64 : i32
    %203 = tpu.dynamic_rotate %197 by %c64_i32_92 dim 1 : vector<8x128xf32>, i32 -> vector<8x128xf32>
    %cst_93 = arith.constant 1.000000e+00 : f32
    %204 = vector.broadcast %cst_93 : f32 to vector<8x128xf32>
    %205 = arith.subf %204, %203 : vector<8x128xf32>
    %206 = arith.mulf %29, %205 : vector<8x128xf32>
    %207 = arith.mulf %206, %202 : vector<8x128xf32>
    %208 = arith.mulf %203, %187 : vector<8x128xf32>
    %209 = arith.addf %207, %208 : vector<8x128xf32>
    %c64_i32_94 = arith.constant 64 : i32
    %210 = tpu.dynamic_rotate %209 by %c64_i32_94 dim 1 : vector<8x128xf32>, i32 -> vector<8x128xf32>
    %c1_i32_95 = arith.constant 1 : i32
    %c1_i32_96 = arith.constant 1 : i32
    %c1_i32_97 = arith.constant 1 : i32
    %c0_i32_98 = arith.constant 0 : i32
    %c0_i32_99 = arith.constant 0 : i32
    %211 = tpu.memref_slice %arg6[%c1_i32_95, %c0_i32_98, %c0_i32_99] : memref<4x128x256xf32, #tpu.memory_space<any>> -> memref<1x128x256xf32, #tpu.memory_space<any>>
    %212 = tpu.memref_squeeze %211 : memref<1x128x256xf32, #tpu.memory_space<any>> -> memref<128x256xf32, #tpu.memory_space<any>>
    %c0_i32_100 = arith.constant 0 : i32
    %c0_i32_101 = arith.constant 0 : i32
    %213 = tpu.memref_slice %arg8[%c1_i32_96, %c0_i32_100, %c0_i32_101] : memref<4x128x256xf32, #tpu.memory_space<vmem>> -> memref<1x128x256xf32, #tpu.memory_space<vmem>>
    %214 = tpu.memref_squeeze %213 : memref<1x128x256xf32, #tpu.memory_space<vmem>> -> memref<128x256xf32, #tpu.memory_space<vmem>>
    %215 = tpu.memref_slice %arg9[%c1_i32_97] : memref<4x!tpu.dma_semaphore, #tpu.memory_space<semaphore_mem>> -> memref<1x!tpu.dma_semaphore, #tpu.memory_space<semaphore_mem>>
    %216 = tpu.memref_squeeze %215 : memref<1x!tpu.dma_semaphore, #tpu.memory_space<semaphore_mem>> -> memref<!tpu.dma_semaphore, #tpu.memory_space<semaphore_mem>>
    tpu.wait_dma2 semaphore(%216 : memref<!tpu.dma_semaphore, #tpu.memory_space<semaphore_mem>>) src(%212 : memref<128x256xf32, #tpu.memory_space<any>>) dst(%214 : memref<128x256xf32, #tpu.memory_space<vmem>>)
    %c1_102 = arith.constant 1 : index
    %c0_103 = arith.constant 0 : index
    %c0_104 = arith.constant 0 : index
    %217 = vector.load %arg8[%c1_102, %c0_103, %c0_104] : memref<4x128x256xf32, #tpu.memory_space<vmem>>, vector<1x128x256xf32>
    %218 = vector.shape_cast %217 : vector<1x128x256xf32> to vector<128x256xf32>
    %c1_105 = arith.constant 1 : index
    %c0_106 = arith.constant 0 : index
    %c0_107 = arith.constant 0 : index
    %219 = vector.load %arg1[%c1_105, %c0_106, %c0_107] : memref<4x1x256xf32, #tpu.memory_space<vmem>>, vector<1x1x256xf32>
    %220 = vector.shape_cast %219 : vector<1x1x256xf32> to vector<1x256xf32>
    %221 = vector.shape_cast %220 : vector<1x256xf32> to vector<1x256xf32>
    %222 = vector.broadcast %221 : vector<1x256xf32> to vector<8x256xf32>
    %cst_108 = arith.constant 0.000000e+00 : f32
    %223 = vector.broadcast %cst_108 : f32 to vector<8x128xf32>
    %224 = arith.addf %223, %78 : vector<8x128xf32>
    %cst_109 = arith.constant dense<0.000000e+00> : vector<8x256xf32>
    %225 = tpu.matmul %224, %218, %cst_109 {dimension_numbers = #tpu.dot_dimension_numbers<[1], [0], [0], [1], [0, 0, 1, 1], [], []>} : vector<8x128xf32>, vector<128x256xf32>, vector<8x256xf32> -> vector<8x256xf32>
    %226 = arith.addf %225, %222 : vector<8x256xf32>
    %227 = vector.extract_strided_slice %226 {offsets = [0, 0], sizes = [8, 128], strides = [1, 1]} : vector<8x256xf32> to vector<8x128xf32>
    %228 = arith.negf %227 : vector<8x128xf32>
    %229 = math.exp %228 : vector<8x128xf32>
    %cst_110 = arith.constant 1.000000e+00 : f32
    %230 = vector.broadcast %cst_110 : f32 to vector<8x128xf32>
    %231 = arith.addf %230, %229 : vector<8x128xf32>
    %232 = arith.divf %230, %231 : vector<8x128xf32>
    %233 = vector.extract_strided_slice %226 {offsets = [0, 128], sizes = [8, 128], strides = [1, 1]} : vector<8x256xf32> to vector<8x128xf32>
    %c64_i32_111 = arith.constant 64 : i32
    %234 = tpu.dynamic_rotate %233 by %c64_i32_111 dim 1 : vector<8x128xf32>, i32 -> vector<8x128xf32>
    %235 = arith.mulf %232, %233 : vector<8x128xf32>
    %236 = arith.addf %235, %234 : vector<8x128xf32>
    %237 = math.tanh %236 : vector<8x128xf32>
    %c64_i32_112 = arith.constant 64 : i32
    %238 = tpu.dynamic_rotate %232 by %c64_i32_112 dim 1 : vector<8x128xf32>, i32 -> vector<8x128xf32>
    %cst_113 = arith.constant 1.000000e+00 : f32
    %239 = vector.broadcast %cst_113 : f32 to vector<8x128xf32>
    %240 = arith.subf %239, %238 : vector<8x128xf32>
    %241 = arith.mulf %29, %240 : vector<8x128xf32>
    %242 = arith.mulf %241, %237 : vector<8x128xf32>
    %243 = arith.mulf %238, %223 : vector<8x128xf32>
    %244 = arith.addf %242, %243 : vector<8x128xf32>
    %c64_i32_114 = arith.constant 64 : i32
    %245 = tpu.dynamic_rotate %244 by %c64_i32_114 dim 1 : vector<8x128xf32>, i32 -> vector<8x128xf32>
    %246 = arith.addf %244, %100 : vector<8x128xf32>
    %cst_115 = arith.constant dense<0.000000e+00> : vector<8x256xf32>
    %247 = tpu.matmul %246, %218, %cst_115 {dimension_numbers = #tpu.dot_dimension_numbers<[1], [0], [0], [1], [0, 0, 1, 1], [], []>} : vector<8x128xf32>, vector<128x256xf32>, vector<8x256xf32> -> vector<8x256xf32>
    %248 = arith.addf %247, %222 : vector<8x256xf32>
    %249 = vector.extract_strided_slice %248 {offsets = [0, 0], sizes = [8, 128], strides = [1, 1]} : vector<8x256xf32> to vector<8x128xf32>
    %250 = arith.negf %249 : vector<8x128xf32>
    %251 = math.exp %250 : vector<8x128xf32>
    %cst_116 = arith.constant 1.000000e+00 : f32
    %252 = vector.broadcast %cst_116 : f32 to vector<8x128xf32>
    %253 = arith.addf %252, %251 : vector<8x128xf32>
    %254 = arith.divf %252, %253 : vector<8x128xf32>
    %255 = vector.extract_strided_slice %248 {offsets = [0, 128], sizes = [8, 128], strides = [1, 1]} : vector<8x256xf32> to vector<8x128xf32>
    %c64_i32_117 = arith.constant 64 : i32
    %256 = tpu.dynamic_rotate %255 by %c64_i32_117 dim 1 : vector<8x128xf32>, i32 -> vector<8x128xf32>
    %257 = arith.mulf %254, %255 : vector<8x128xf32>
    %258 = arith.addf %257, %256 : vector<8x128xf32>
    %259 = math.tanh %258 : vector<8x128xf32>
    %c64_i32_118 = arith.constant 64 : i32
    %260 = tpu.dynamic_rotate %254 by %c64_i32_118 dim 1 : vector<8x128xf32>, i32 -> vector<8x128xf32>
    %cst_119 = arith.constant 1.000000e+00 : f32
    %261 = vector.broadcast %cst_119 : f32 to vector<8x128xf32>
    %262 = arith.subf %261, %260 : vector<8x128xf32>
    %263 = arith.mulf %29, %262 : vector<8x128xf32>
    %264 = arith.mulf %263, %259 : vector<8x128xf32>
    %265 = arith.mulf %260, %244 : vector<8x128xf32>
    %266 = arith.addf %264, %265 : vector<8x128xf32>
    %c64_i32_120 = arith.constant 64 : i32
    %267 = tpu.dynamic_rotate %266 by %c64_i32_120 dim 1 : vector<8x128xf32>, i32 -> vector<8x128xf32>
    %268 = arith.addf %266, %122 : vector<8x128xf32>
    %cst_121 = arith.constant dense<0.000000e+00> : vector<8x256xf32>
    %269 = tpu.matmul %268, %218, %cst_121 {dimension_numbers = #tpu.dot_dimension_numbers<[1], [0], [0], [1], [0, 0, 1, 1], [], []>} : vector<8x128xf32>, vector<128x256xf32>, vector<8x256xf32> -> vector<8x256xf32>
    %270 = arith.addf %269, %222 : vector<8x256xf32>
    %271 = vector.extract_strided_slice %270 {offsets = [0, 0], sizes = [8, 128], strides = [1, 1]} : vector<8x256xf32> to vector<8x128xf32>
    %272 = arith.negf %271 : vector<8x128xf32>
    %273 = math.exp %272 : vector<8x128xf32>
    %cst_122 = arith.constant 1.000000e+00 : f32
    %274 = vector.broadcast %cst_122 : f32 to vector<8x128xf32>
    %275 = arith.addf %274, %273 : vector<8x128xf32>
    %276 = arith.divf %274, %275 : vector<8x128xf32>
    %277 = vector.extract_strided_slice %270 {offsets = [0, 128], sizes = [8, 128], strides = [1, 1]} : vector<8x256xf32> to vector<8x128xf32>
    %c64_i32_123 = arith.constant 64 : i32
    %278 = tpu.dynamic_rotate %277 by %c64_i32_123 dim 1 : vector<8x128xf32>, i32 -> vector<8x128xf32>
    %279 = arith.mulf %276, %277 : vector<8x128xf32>
    %280 = arith.addf %279, %278 : vector<8x128xf32>
    %281 = math.tanh %280 : vector<8x128xf32>
    %c64_i32_124 = arith.constant 64 : i32
    %282 = tpu.dynamic_rotate %276 by %c64_i32_124 dim 1 : vector<8x128xf32>, i32 -> vector<8x128xf32>
    %cst_125 = arith.constant 1.000000e+00 : f32
    %283 = vector.broadcast %cst_125 : f32 to vector<8x128xf32>
    %284 = arith.subf %283, %282 : vector<8x128xf32>
    %285 = arith.mulf %29, %284 : vector<8x128xf32>
    %286 = arith.mulf %285, %281 : vector<8x128xf32>
    %287 = arith.mulf %282, %266 : vector<8x128xf32>
    %288 = arith.addf %286, %287 : vector<8x128xf32>
    %c64_i32_126 = arith.constant 64 : i32
    %289 = tpu.dynamic_rotate %288 by %c64_i32_126 dim 1 : vector<8x128xf32>, i32 -> vector<8x128xf32>
    %290 = arith.addf %288, %144 : vector<8x128xf32>
    %cst_127 = arith.constant dense<0.000000e+00> : vector<8x256xf32>
    %291 = tpu.matmul %290, %218, %cst_127 {dimension_numbers = #tpu.dot_dimension_numbers<[1], [0], [0], [1], [0, 0, 1, 1], [], []>} : vector<8x128xf32>, vector<128x256xf32>, vector<8x256xf32> -> vector<8x256xf32>
    %292 = arith.addf %291, %222 : vector<8x256xf32>
    %293 = vector.extract_strided_slice %292 {offsets = [0, 0], sizes = [8, 128], strides = [1, 1]} : vector<8x256xf32> to vector<8x128xf32>
    %294 = arith.negf %293 : vector<8x128xf32>
    %295 = math.exp %294 : vector<8x128xf32>
    %cst_128 = arith.constant 1.000000e+00 : f32
    %296 = vector.broadcast %cst_128 : f32 to vector<8x128xf32>
    %297 = arith.addf %296, %295 : vector<8x128xf32>
    %298 = arith.divf %296, %297 : vector<8x128xf32>
    %299 = vector.extract_strided_slice %292 {offsets = [0, 128], sizes = [8, 128], strides = [1, 1]} : vector<8x256xf32> to vector<8x128xf32>
    %c64_i32_129 = arith.constant 64 : i32
    %300 = tpu.dynamic_rotate %299 by %c64_i32_129 dim 1 : vector<8x128xf32>, i32 -> vector<8x128xf32>
    %301 = arith.mulf %298, %299 : vector<8x128xf32>
    %302 = arith.addf %301, %300 : vector<8x128xf32>
    %303 = math.tanh %302 : vector<8x128xf32>
    %c64_i32_130 = arith.constant 64 : i32
    %304 = tpu.dynamic_rotate %298 by %c64_i32_130 dim 1 : vector<8x128xf32>, i32 -> vector<8x128xf32>
    %cst_131 = arith.constant 1.000000e+00 : f32
    %305 = vector.broadcast %cst_131 : f32 to vector<8x128xf32>
    %306 = arith.subf %305, %304 : vector<8x128xf32>
    %307 = arith.mulf %29, %306 : vector<8x128xf32>
    %308 = arith.mulf %307, %303 : vector<8x128xf32>
    %309 = arith.mulf %304, %288 : vector<8x128xf32>
    %310 = arith.addf %308, %309 : vector<8x128xf32>
    %c64_i32_132 = arith.constant 64 : i32
    %311 = tpu.dynamic_rotate %310 by %c64_i32_132 dim 1 : vector<8x128xf32>, i32 -> vector<8x128xf32>
    %312 = arith.addf %310, %166 : vector<8x128xf32>
    %cst_133 = arith.constant dense<0.000000e+00> : vector<8x256xf32>
    %313 = tpu.matmul %312, %218, %cst_133 {dimension_numbers = #tpu.dot_dimension_numbers<[1], [0], [0], [1], [0, 0, 1, 1], [], []>} : vector<8x128xf32>, vector<128x256xf32>, vector<8x256xf32> -> vector<8x256xf32>
    %314 = arith.addf %313, %222 : vector<8x256xf32>
    %315 = vector.extract_strided_slice %314 {offsets = [0, 0], sizes = [8, 128], strides = [1, 1]} : vector<8x256xf32> to vector<8x128xf32>
    %316 = arith.negf %315 : vector<8x128xf32>
    %317 = math.exp %316 : vector<8x128xf32>
    %cst_134 = arith.constant 1.000000e+00 : f32
    %318 = vector.broadcast %cst_134 : f32 to vector<8x128xf32>
    %319 = arith.addf %318, %317 : vector<8x128xf32>
    %320 = arith.divf %318, %319 : vector<8x128xf32>
    %321 = vector.extract_strided_slice %314 {offsets = [0, 128], sizes = [8, 128], strides = [1, 1]} : vector<8x256xf32> to vector<8x128xf32>
    %c64_i32_135 = arith.constant 64 : i32
    %322 = tpu.dynamic_rotate %321 by %c64_i32_135 dim 1 : vector<8x128xf32>, i32 -> vector<8x128xf32>
    %323 = arith.mulf %320, %321 : vector<8x128xf32>
    %324 = arith.addf %323, %322 : vector<8x128xf32>
    %325 = math.tanh %324 : vector<8x128xf32>
    %c64_i32_136 = arith.constant 64 : i32
    %326 = tpu.dynamic_rotate %320 by %c64_i32_136 dim 1 : vector<8x128xf32>, i32 -> vector<8x128xf32>
    %cst_137 = arith.constant 1.000000e+00 : f32
    %327 = vector.broadcast %cst_137 : f32 to vector<8x128xf32>
    %328 = arith.subf %327, %326 : vector<8x128xf32>
    %329 = arith.mulf %29, %328 : vector<8x128xf32>
    %330 = arith.mulf %329, %325 : vector<8x128xf32>
    %331 = arith.mulf %326, %310 : vector<8x128xf32>
    %332 = arith.addf %330, %331 : vector<8x128xf32>
    %c64_i32_138 = arith.constant 64 : i32
    %333 = tpu.dynamic_rotate %332 by %c64_i32_138 dim 1 : vector<8x128xf32>, i32 -> vector<8x128xf32>
    %334 = arith.addf %332, %188 : vector<8x128xf32>
    %cst_139 = arith.constant dense<0.000000e+00> : vector<8x256xf32>
    %335 = tpu.matmul %334, %218, %cst_139 {dimension_numbers = #tpu.dot_dimension_numbers<[1], [0], [0], [1], [0, 0, 1, 1], [], []>} : vector<8x128xf32>, vector<128x256xf32>, vector<8x256xf32> -> vector<8x256xf32>
    %336 = arith.addf %335, %222 : vector<8x256xf32>
    %337 = vector.extract_strided_slice %336 {offsets = [0, 0], sizes = [8, 128], strides = [1, 1]} : vector<8x256xf32> to vector<8x128xf32>
    %338 = arith.negf %337 : vector<8x128xf32>
    %339 = math.exp %338 : vector<8x128xf32>
    %cst_140 = arith.constant 1.000000e+00 : f32
    %340 = vector.broadcast %cst_140 : f32 to vector<8x128xf32>
    %341 = arith.addf %340, %339 : vector<8x128xf32>
    %342 = arith.divf %340, %341 : vector<8x128xf32>
    %343 = vector.extract_strided_slice %336 {offsets = [0, 128], sizes = [8, 128], strides = [1, 1]} : vector<8x256xf32> to vector<8x128xf32>
    %c64_i32_141 = arith.constant 64 : i32
    %344 = tpu.dynamic_rotate %343 by %c64_i32_141 dim 1 : vector<8x128xf32>, i32 -> vector<8x128xf32>
    %345 = arith.mulf %342, %343 : vector<8x128xf32>
    %346 = arith.addf %345, %344 : vector<8x128xf32>
    %347 = math.tanh %346 : vector<8x128xf32>
    %c64_i32_142 = arith.constant 64 : i32
    %348 = tpu.dynamic_rotate %342 by %c64_i32_142 dim 1 : vector<8x128xf32>, i32 -> vector<8x128xf32>
    %cst_143 = arith.constant 1.000000e+00 : f32
    %349 = vector.broadcast %cst_143 : f32 to vector<8x128xf32>
    %350 = arith.subf %349, %348 : vector<8x128xf32>
    %351 = arith.mulf %29, %350 : vector<8x128xf32>
    %352 = arith.mulf %351, %347 : vector<8x128xf32>
    %353 = arith.mulf %348, %332 : vector<8x128xf32>
    %354 = arith.addf %352, %353 : vector<8x128xf32>
    %c64_i32_144 = arith.constant 64 : i32
    %355 = tpu.dynamic_rotate %354 by %c64_i32_144 dim 1 : vector<8x128xf32>, i32 -> vector<8x128xf32>
    %356 = arith.addf %354, %210 : vector<8x128xf32>
    %cst_145 = arith.constant dense<0.000000e+00> : vector<8x256xf32>
    %357 = tpu.matmul %356, %218, %cst_145 {dimension_numbers = #tpu.dot_dimension_numbers<[1], [0], [0], [1], [0, 0, 1, 1], [], []>} : vector<8x128xf32>, vector<128x256xf32>, vector<8x256xf32> -> vector<8x256xf32>
    %358 = arith.addf %357, %222 : vector<8x256xf32>
    %359 = vector.extract_strided_slice %358 {offsets = [0, 0], sizes = [8, 128], strides = [1, 1]} : vector<8x256xf32> to vector<8x128xf32>
    %360 = arith.negf %359 : vector<8x128xf32>
    %361 = math.exp %360 : vector<8x128xf32>
    %cst_146 = arith.constant 1.000000e+00 : f32
    %362 = vector.broadcast %cst_146 : f32 to vector<8x128xf32>
    %363 = arith.addf %362, %361 : vector<8x128xf32>
    %364 = arith.divf %362, %363 : vector<8x128xf32>
    %365 = vector.extract_strided_slice %358 {offsets = [0, 128], sizes = [8, 128], strides = [1, 1]} : vector<8x256xf32> to vector<8x128xf32>
    %c64_i32_147 = arith.constant 64 : i32
    %366 = tpu.dynamic_rotate %365 by %c64_i32_147 dim 1 : vector<8x128xf32>, i32 -> vector<8x128xf32>
    %367 = arith.mulf %364, %365 : vector<8x128xf32>
    %368 = arith.addf %367, %366 : vector<8x128xf32>
    %369 = math.tanh %368 : vector<8x128xf32>
    %c64_i32_148 = arith.constant 64 : i32
    %370 = tpu.dynamic_rotate %364 by %c64_i32_148 dim 1 : vector<8x128xf32>, i32 -> vector<8x128xf32>
    %cst_149 = arith.constant 1.000000e+00 : f32
    %371 = vector.broadcast %cst_149 : f32 to vector<8x128xf32>
    %372 = arith.subf %371, %370 : vector<8x128xf32>
    %373 = arith.mulf %29, %372 : vector<8x128xf32>
    %374 = arith.mulf %373, %369 : vector<8x128xf32>
    %375 = arith.mulf %370, %354 : vector<8x128xf32>
    %376 = arith.addf %374, %375 : vector<8x128xf32>
    %c64_i32_150 = arith.constant 64 : i32
    %377 = tpu.dynamic_rotate %376 by %c64_i32_150 dim 1 : vector<8x128xf32>, i32 -> vector<8x128xf32>
    %c2_i32_151 = arith.constant 2 : i32
    %c2_i32_152 = arith.constant 2 : i32
    %c2_i32_153 = arith.constant 2 : i32
    %c0_i32_154 = arith.constant 0 : i32
    %c0_i32_155 = arith.constant 0 : i32
    %378 = tpu.memref_slice %arg6[%c2_i32_151, %c0_i32_154, %c0_i32_155] : memref<4x128x256xf32, #tpu.memory_space<any>> -> memref<1x128x256xf32, #tpu.memory_space<any>>
    %379 = tpu.memref_squeeze %378 : memref<1x128x256xf32, #tpu.memory_space<any>> -> memref<128x256xf32, #tpu.memory_space<any>>
    %c0_i32_156 = arith.constant 0 : i32
    %c0_i32_157 = arith.constant 0 : i32
    %380 = tpu.memref_slice %arg8[%c2_i32_152, %c0_i32_156, %c0_i32_157] : memref<4x128x256xf32, #tpu.memory_space<vmem>> -> memref<1x128x256xf32, #tpu.memory_space<vmem>>
    %381 = tpu.memref_squeeze %380 : memref<1x128x256xf32, #tpu.memory_space<vmem>> -> memref<128x256xf32, #tpu.memory_space<vmem>>
    %382 = tpu.memref_slice %arg9[%c2_i32_153] : memref<4x!tpu.dma_semaphore, #tpu.memory_space<semaphore_mem>> -> memref<1x!tpu.dma_semaphore, #tpu.memory_space<semaphore_mem>>
    %383 = tpu.memref_squeeze %382 : memref<1x!tpu.dma_semaphore, #tpu.memory_space<semaphore_mem>> -> memref<!tpu.dma_semaphore, #tpu.memory_space<semaphore_mem>>
    tpu.wait_dma2 semaphore(%383 : memref<!tpu.dma_semaphore, #tpu.memory_space<semaphore_mem>>) src(%379 : memref<128x256xf32, #tpu.memory_space<any>>) dst(%381 : memref<128x256xf32, #tpu.memory_space<vmem>>)
    %c2_158 = arith.constant 2 : index
    %c0_159 = arith.constant 0 : index
    %c0_160 = arith.constant 0 : index
    %384 = vector.load %arg8[%c2_158, %c0_159, %c0_160] : memref<4x128x256xf32, #tpu.memory_space<vmem>>, vector<1x128x256xf32>
    %385 = vector.shape_cast %384 : vector<1x128x256xf32> to vector<128x256xf32>
    %c2_161 = arith.constant 2 : index
    %c0_162 = arith.constant 0 : index
    %c0_163 = arith.constant 0 : index
    %386 = vector.load %arg1[%c2_161, %c0_162, %c0_163] : memref<4x1x256xf32, #tpu.memory_space<vmem>>, vector<1x1x256xf32>
    %387 = vector.shape_cast %386 : vector<1x1x256xf32> to vector<1x256xf32>
    %388 = vector.shape_cast %387 : vector<1x256xf32> to vector<1x256xf32>
    %389 = vector.broadcast %388 : vector<1x256xf32> to vector<8x256xf32>
    %cst_164 = arith.constant 0.000000e+00 : f32
    %390 = vector.broadcast %cst_164 : f32 to vector<8x128xf32>
    %391 = arith.addf %390, %245 : vector<8x128xf32>
    %cst_165 = arith.constant dense<0.000000e+00> : vector<8x256xf32>
    %392 = tpu.matmul %391, %385, %cst_165 {dimension_numbers = #tpu.dot_dimension_numbers<[1], [0], [0], [1], [0, 0, 1, 1], [], []>} : vector<8x128xf32>, vector<128x256xf32>, vector<8x256xf32> -> vector<8x256xf32>
    %393 = arith.addf %392, %389 : vector<8x256xf32>
    %394 = vector.extract_strided_slice %393 {offsets = [0, 0], sizes = [8, 128], strides = [1, 1]} : vector<8x256xf32> to vector<8x128xf32>
    %395 = arith.negf %394 : vector<8x128xf32>
    %396 = math.exp %395 : vector<8x128xf32>
    %cst_166 = arith.constant 1.000000e+00 : f32
    %397 = vector.broadcast %cst_166 : f32 to vector<8x128xf32>
    %398 = arith.addf %397, %396 : vector<8x128xf32>
    %399 = arith.divf %397, %398 : vector<8x128xf32>
    %400 = vector.extract_strided_slice %393 {offsets = [0, 128], sizes = [8, 128], strides = [1, 1]} : vector<8x256xf32> to vector<8x128xf32>
    %c64_i32_167 = arith.constant 64 : i32
    %401 = tpu.dynamic_rotate %400 by %c64_i32_167 dim 1 : vector<8x128xf32>, i32 -> vector<8x128xf32>
    %402 = arith.mulf %399, %400 : vector<8x128xf32>
    %403 = arith.addf %402, %401 : vector<8x128xf32>
    %404 = math.tanh %403 : vector<8x128xf32>
    %c64_i32_168 = arith.constant 64 : i32
    %405 = tpu.dynamic_rotate %399 by %c64_i32_168 dim 1 : vector<8x128xf32>, i32 -> vector<8x128xf32>
    %cst_169 = arith.constant 1.000000e+00 : f32
    %406 = vector.broadcast %cst_169 : f32 to vector<8x128xf32>
    %407 = arith.subf %406, %405 : vector<8x128xf32>
    %408 = arith.mulf %29, %407 : vector<8x128xf32>
    %409 = arith.mulf %408, %404 : vector<8x128xf32>
    %410 = arith.mulf %405, %390 : vector<8x128xf32>
    %411 = arith.addf %409, %410 : vector<8x128xf32>
    %c64_i32_170 = arith.constant 64 : i32
    %412 = tpu.dynamic_rotate %411 by %c64_i32_170 dim 1 : vector<8x128xf32>, i32 -> vector<8x128xf32>
    %413 = arith.addf %411, %267 : vector<8x128xf32>
    %cst_171 = arith.constant dense<0.000000e+00> : vector<8x256xf32>
    %414 = tpu.matmul %413, %385, %cst_171 {dimension_numbers = #tpu.dot_dimension_numbers<[1], [0], [0], [1], [0, 0, 1, 1], [], []>} : vector<8x128xf32>, vector<128x256xf32>, vector<8x256xf32> -> vector<8x256xf32>
    %415 = arith.addf %414, %389 : vector<8x256xf32>
    %416 = vector.extract_strided_slice %415 {offsets = [0, 0], sizes = [8, 128], strides = [1, 1]} : vector<8x256xf32> to vector<8x128xf32>
    %417 = arith.negf %416 : vector<8x128xf32>
    %418 = math.exp %417 : vector<8x128xf32>
    %cst_172 = arith.constant 1.000000e+00 : f32
    %419 = vector.broadcast %cst_172 : f32 to vector<8x128xf32>
    %420 = arith.addf %419, %418 : vector<8x128xf32>
    %421 = arith.divf %419, %420 : vector<8x128xf32>
    %422 = vector.extract_strided_slice %415 {offsets = [0, 128], sizes = [8, 128], strides = [1, 1]} : vector<8x256xf32> to vector<8x128xf32>
    %c64_i32_173 = arith.constant 64 : i32
    %423 = tpu.dynamic_rotate %422 by %c64_i32_173 dim 1 : vector<8x128xf32>, i32 -> vector<8x128xf32>
    %424 = arith.mulf %421, %422 : vector<8x128xf32>
    %425 = arith.addf %424, %423 : vector<8x128xf32>
    %426 = math.tanh %425 : vector<8x128xf32>
    %c64_i32_174 = arith.constant 64 : i32
    %427 = tpu.dynamic_rotate %421 by %c64_i32_174 dim 1 : vector<8x128xf32>, i32 -> vector<8x128xf32>
    %cst_175 = arith.constant 1.000000e+00 : f32
    %428 = vector.broadcast %cst_175 : f32 to vector<8x128xf32>
    %429 = arith.subf %428, %427 : vector<8x128xf32>
    %430 = arith.mulf %29, %429 : vector<8x128xf32>
    %431 = arith.mulf %430, %426 : vector<8x128xf32>
    %432 = arith.mulf %427, %411 : vector<8x128xf32>
    %433 = arith.addf %431, %432 : vector<8x128xf32>
    %c64_i32_176 = arith.constant 64 : i32
    %434 = tpu.dynamic_rotate %433 by %c64_i32_176 dim 1 : vector<8x128xf32>, i32 -> vector<8x128xf32>
    %435 = arith.addf %433, %289 : vector<8x128xf32>
    %cst_177 = arith.constant dense<0.000000e+00> : vector<8x256xf32>
    %436 = tpu.matmul %435, %385, %cst_177 {dimension_numbers = #tpu.dot_dimension_numbers<[1], [0], [0], [1], [0, 0, 1, 1], [], []>} : vector<8x128xf32>, vector<128x256xf32>, vector<8x256xf32> -> vector<8x256xf32>
    %437 = arith.addf %436, %389 : vector<8x256xf32>
    %438 = vector.extract_strided_slice %437 {offsets = [0, 0], sizes = [8, 128], strides = [1, 1]} : vector<8x256xf32> to vector<8x128xf32>
    %439 = arith.negf %438 : vector<8x128xf32>
    %440 = math.exp %439 : vector<8x128xf32>
    %cst_178 = arith.constant 1.000000e+00 : f32
    %441 = vector.broadcast %cst_178 : f32 to vector<8x128xf32>
    %442 = arith.addf %441, %440 : vector<8x128xf32>
    %443 = arith.divf %441, %442 : vector<8x128xf32>
    %444 = vector.extract_strided_slice %437 {offsets = [0, 128], sizes = [8, 128], strides = [1, 1]} : vector<8x256xf32> to vector<8x128xf32>
    %c64_i32_179 = arith.constant 64 : i32
    %445 = tpu.dynamic_rotate %444 by %c64_i32_179 dim 1 : vector<8x128xf32>, i32 -> vector<8x128xf32>
    %446 = arith.mulf %443, %444 : vector<8x128xf32>
    %447 = arith.addf %446, %445 : vector<8x128xf32>
    %448 = math.tanh %447 : vector<8x128xf32>
    %c64_i32_180 = arith.constant 64 : i32
    %449 = tpu.dynamic_rotate %443 by %c64_i32_180 dim 1 : vector<8x128xf32>, i32 -> vector<8x128xf32>
    %cst_181 = arith.constant 1.000000e+00 : f32
    %450 = vector.broadcast %cst_181 : f32 to vector<8x128xf32>
    %451 = arith.subf %450, %449 : vector<8x128xf32>
    %452 = arith.mulf %29, %451 : vector<8x128xf32>
    %453 = arith.mulf %452, %448 : vector<8x128xf32>
    %454 = arith.mulf %449, %433 : vector<8x128xf32>
    %455 = arith.addf %453, %454 : vector<8x128xf32>
    %c64_i32_182 = arith.constant 64 : i32
    %456 = tpu.dynamic_rotate %455 by %c64_i32_182 dim 1 : vector<8x128xf32>, i32 -> vector<8x128xf32>
    %457 = arith.addf %455, %311 : vector<8x128xf32>
    %cst_183 = arith.constant dense<0.000000e+00> : vector<8x256xf32>
    %458 = tpu.matmul %457, %385, %cst_183 {dimension_numbers = #tpu.dot_dimension_numbers<[1], [0], [0], [1], [0, 0, 1, 1], [], []>} : vector<8x128xf32>, vector<128x256xf32>, vector<8x256xf32> -> vector<8x256xf32>
    %459 = arith.addf %458, %389 : vector<8x256xf32>
    %460 = vector.extract_strided_slice %459 {offsets = [0, 0], sizes = [8, 128], strides = [1, 1]} : vector<8x256xf32> to vector<8x128xf32>
    %461 = arith.negf %460 : vector<8x128xf32>
    %462 = math.exp %461 : vector<8x128xf32>
    %cst_184 = arith.constant 1.000000e+00 : f32
    %463 = vector.broadcast %cst_184 : f32 to vector<8x128xf32>
    %464 = arith.addf %463, %462 : vector<8x128xf32>
    %465 = arith.divf %463, %464 : vector<8x128xf32>
    %466 = vector.extract_strided_slice %459 {offsets = [0, 128], sizes = [8, 128], strides = [1, 1]} : vector<8x256xf32> to vector<8x128xf32>
    %c64_i32_185 = arith.constant 64 : i32
    %467 = tpu.dynamic_rotate %466 by %c64_i32_185 dim 1 : vector<8x128xf32>, i32 -> vector<8x128xf32>
    %468 = arith.mulf %465, %466 : vector<8x128xf32>
    %469 = arith.addf %468, %467 : vector<8x128xf32>
    %470 = math.tanh %469 : vector<8x128xf32>
    %c64_i32_186 = arith.constant 64 : i32
    %471 = tpu.dynamic_rotate %465 by %c64_i32_186 dim 1 : vector<8x128xf32>, i32 -> vector<8x128xf32>
    %cst_187 = arith.constant 1.000000e+00 : f32
    %472 = vector.broadcast %cst_187 : f32 to vector<8x128xf32>
    %473 = arith.subf %472, %471 : vector<8x128xf32>
    %474 = arith.mulf %29, %473 : vector<8x128xf32>
    %475 = arith.mulf %474, %470 : vector<8x128xf32>
    %476 = arith.mulf %471, %455 : vector<8x128xf32>
    %477 = arith.addf %475, %476 : vector<8x128xf32>
    %c64_i32_188 = arith.constant 64 : i32
    %478 = tpu.dynamic_rotate %477 by %c64_i32_188 dim 1 : vector<8x128xf32>, i32 -> vector<8x128xf32>
    %479 = arith.addf %477, %333 : vector<8x128xf32>
    %cst_189 = arith.constant dense<0.000000e+00> : vector<8x256xf32>
    %480 = tpu.matmul %479, %385, %cst_189 {dimension_numbers = #tpu.dot_dimension_numbers<[1], [0], [0], [1], [0, 0, 1, 1], [], []>} : vector<8x128xf32>, vector<128x256xf32>, vector<8x256xf32> -> vector<8x256xf32>
    %481 = arith.addf %480, %389 : vector<8x256xf32>
    %482 = vector.extract_strided_slice %481 {offsets = [0, 0], sizes = [8, 128], strides = [1, 1]} : vector<8x256xf32> to vector<8x128xf32>
    %483 = arith.negf %482 : vector<8x128xf32>
    %484 = math.exp %483 : vector<8x128xf32>
    %cst_190 = arith.constant 1.000000e+00 : f32
    %485 = vector.broadcast %cst_190 : f32 to vector<8x128xf32>
    %486 = arith.addf %485, %484 : vector<8x128xf32>
    %487 = arith.divf %485, %486 : vector<8x128xf32>
    %488 = vector.extract_strided_slice %481 {offsets = [0, 128], sizes = [8, 128], strides = [1, 1]} : vector<8x256xf32> to vector<8x128xf32>
    %c64_i32_191 = arith.constant 64 : i32
    %489 = tpu.dynamic_rotate %488 by %c64_i32_191 dim 1 : vector<8x128xf32>, i32 -> vector<8x128xf32>
    %490 = arith.mulf %487, %488 : vector<8x128xf32>
    %491 = arith.addf %490, %489 : vector<8x128xf32>
    %492 = math.tanh %491 : vector<8x128xf32>
    %c64_i32_192 = arith.constant 64 : i32
    %493 = tpu.dynamic_rotate %487 by %c64_i32_192 dim 1 : vector<8x128xf32>, i32 -> vector<8x128xf32>
    %cst_193 = arith.constant 1.000000e+00 : f32
    %494 = vector.broadcast %cst_193 : f32 to vector<8x128xf32>
    %495 = arith.subf %494, %493 : vector<8x128xf32>
    %496 = arith.mulf %29, %495 : vector<8x128xf32>
    %497 = arith.mulf %496, %492 : vector<8x128xf32>
    %498 = arith.mulf %493, %477 : vector<8x128xf32>
    %499 = arith.addf %497, %498 : vector<8x128xf32>
    %c64_i32_194 = arith.constant 64 : i32
    %500 = tpu.dynamic_rotate %499 by %c64_i32_194 dim 1 : vector<8x128xf32>, i32 -> vector<8x128xf32>
    %501 = arith.addf %499, %355 : vector<8x128xf32>
    %cst_195 = arith.constant dense<0.000000e+00> : vector<8x256xf32>
    %502 = tpu.matmul %501, %385, %cst_195 {dimension_numbers = #tpu.dot_dimension_numbers<[1], [0], [0], [1], [0, 0, 1, 1], [], []>} : vector<8x128xf32>, vector<128x256xf32>, vector<8x256xf32> -> vector<8x256xf32>
    %503 = arith.addf %502, %389 : vector<8x256xf32>
    %504 = vector.extract_strided_slice %503 {offsets = [0, 0], sizes = [8, 128], strides = [1, 1]} : vector<8x256xf32> to vector<8x128xf32>
    %505 = arith.negf %504 : vector<8x128xf32>
    %506 = math.exp %505 : vector<8x128xf32>
    %cst_196 = arith.constant 1.000000e+00 : f32
    %507 = vector.broadcast %cst_196 : f32 to vector<8x128xf32>
    %508 = arith.addf %507, %506 : vector<8x128xf32>
    %509 = arith.divf %507, %508 : vector<8x128xf32>
    %510 = vector.extract_strided_slice %503 {offsets = [0, 128], sizes = [8, 128], strides = [1, 1]} : vector<8x256xf32> to vector<8x128xf32>
    %c64_i32_197 = arith.constant 64 : i32
    %511 = tpu.dynamic_rotate %510 by %c64_i32_197 dim 1 : vector<8x128xf32>, i32 -> vector<8x128xf32>
    %512 = arith.mulf %509, %510 : vector<8x128xf32>
    %513 = arith.addf %512, %511 : vector<8x128xf32>
    %514 = math.tanh %513 : vector<8x128xf32>
    %c64_i32_198 = arith.constant 64 : i32
    %515 = tpu.dynamic_rotate %509 by %c64_i32_198 dim 1 : vector<8x128xf32>, i32 -> vector<8x128xf32>
    %cst_199 = arith.constant 1.000000e+00 : f32
    %516 = vector.broadcast %cst_199 : f32 to vector<8x128xf32>
    %517 = arith.subf %516, %515 : vector<8x128xf32>
    %518 = arith.mulf %29, %517 : vector<8x128xf32>
    %519 = arith.mulf %518, %514 : vector<8x128xf32>
    %520 = arith.mulf %515, %499 : vector<8x128xf32>
    %521 = arith.addf %519, %520 : vector<8x128xf32>
    %c64_i32_200 = arith.constant 64 : i32
    %522 = tpu.dynamic_rotate %521 by %c64_i32_200 dim 1 : vector<8x128xf32>, i32 -> vector<8x128xf32>
    %523 = arith.addf %521, %377 : vector<8x128xf32>
    %cst_201 = arith.constant dense<0.000000e+00> : vector<8x256xf32>
    %524 = tpu.matmul %523, %385, %cst_201 {dimension_numbers = #tpu.dot_dimension_numbers<[1], [0], [0], [1], [0, 0, 1, 1], [], []>} : vector<8x128xf32>, vector<128x256xf32>, vector<8x256xf32> -> vector<8x256xf32>
    %525 = arith.addf %524, %389 : vector<8x256xf32>
    %526 = vector.extract_strided_slice %525 {offsets = [0, 0], sizes = [8, 128], strides = [1, 1]} : vector<8x256xf32> to vector<8x128xf32>
    %527 = arith.negf %526 : vector<8x128xf32>
    %528 = math.exp %527 : vector<8x128xf32>
    %cst_202 = arith.constant 1.000000e+00 : f32
    %529 = vector.broadcast %cst_202 : f32 to vector<8x128xf32>
    %530 = arith.addf %529, %528 : vector<8x128xf32>
    %531 = arith.divf %529, %530 : vector<8x128xf32>
    %532 = vector.extract_strided_slice %525 {offsets = [0, 128], sizes = [8, 128], strides = [1, 1]} : vector<8x256xf32> to vector<8x128xf32>
    %c64_i32_203 = arith.constant 64 : i32
    %533 = tpu.dynamic_rotate %532 by %c64_i32_203 dim 1 : vector<8x128xf32>, i32 -> vector<8x128xf32>
    %534 = arith.mulf %531, %532 : vector<8x128xf32>
    %535 = arith.addf %534, %533 : vector<8x128xf32>
    %536 = math.tanh %535 : vector<8x128xf32>
    %c64_i32_204 = arith.constant 64 : i32
    %537 = tpu.dynamic_rotate %531 by %c64_i32_204 dim 1 : vector<8x128xf32>, i32 -> vector<8x128xf32>
    %cst_205 = arith.constant 1.000000e+00 : f32
    %538 = vector.broadcast %cst_205 : f32 to vector<8x128xf32>
    %539 = arith.subf %538, %537 : vector<8x128xf32>
    %540 = arith.mulf %29, %539 : vector<8x128xf32>
    %541 = arith.mulf %540, %536 : vector<8x128xf32>
    %542 = arith.mulf %537, %521 : vector<8x128xf32>
    %543 = arith.addf %541, %542 : vector<8x128xf32>
    %c64_i32_206 = arith.constant 64 : i32
    %544 = tpu.dynamic_rotate %543 by %c64_i32_206 dim 1 : vector<8x128xf32>, i32 -> vector<8x128xf32>
    %c3_i32_207 = arith.constant 3 : i32
    %c3_i32_208 = arith.constant 3 : i32
    %c3_i32_209 = arith.constant 3 : i32
    %c0_i32_210 = arith.constant 0 : i32
    %c0_i32_211 = arith.constant 0 : i32
    %545 = tpu.memref_slice %arg6[%c3_i32_207, %c0_i32_210, %c0_i32_211] : memref<4x128x256xf32, #tpu.memory_space<any>> -> memref<1x128x256xf32, #tpu.memory_space<any>>
    %546 = tpu.memref_squeeze %545 : memref<1x128x256xf32, #tpu.memory_space<any>> -> memref<128x256xf32, #tpu.memory_space<any>>
    %c0_i32_212 = arith.constant 0 : i32
    %c0_i32_213 = arith.constant 0 : i32
    %547 = tpu.memref_slice %arg8[%c3_i32_208, %c0_i32_212, %c0_i32_213] : memref<4x128x256xf32, #tpu.memory_space<vmem>> -> memref<1x128x256xf32, #tpu.memory_space<vmem>>
    %548 = tpu.memref_squeeze %547 : memref<1x128x256xf32, #tpu.memory_space<vmem>> -> memref<128x256xf32, #tpu.memory_space<vmem>>
    %549 = tpu.memref_slice %arg9[%c3_i32_209] : memref<4x!tpu.dma_semaphore, #tpu.memory_space<semaphore_mem>> -> memref<1x!tpu.dma_semaphore, #tpu.memory_space<semaphore_mem>>
    %550 = tpu.memref_squeeze %549 : memref<1x!tpu.dma_semaphore, #tpu.memory_space<semaphore_mem>> -> memref<!tpu.dma_semaphore, #tpu.memory_space<semaphore_mem>>
    tpu.wait_dma2 semaphore(%550 : memref<!tpu.dma_semaphore, #tpu.memory_space<semaphore_mem>>) src(%546 : memref<128x256xf32, #tpu.memory_space<any>>) dst(%548 : memref<128x256xf32, #tpu.memory_space<vmem>>)
    %c3_214 = arith.constant 3 : index
    %c0_215 = arith.constant 0 : index
    %c0_216 = arith.constant 0 : index
    %551 = vector.load %arg8[%c3_214, %c0_215, %c0_216] : memref<4x128x256xf32, #tpu.memory_space<vmem>>, vector<1x128x256xf32>
    %552 = vector.shape_cast %551 : vector<1x128x256xf32> to vector<128x256xf32>
    %c3_217 = arith.constant 3 : index
    %c0_218 = arith.constant 0 : index
    %c0_219 = arith.constant 0 : index
    %553 = vector.load %arg1[%c3_217, %c0_218, %c0_219] : memref<4x1x256xf32, #tpu.memory_space<vmem>>, vector<1x1x256xf32>
    %554 = vector.shape_cast %553 : vector<1x1x256xf32> to vector<1x256xf32>
    %555 = vector.shape_cast %554 : vector<1x256xf32> to vector<1x256xf32>
    %556 = vector.broadcast %555 : vector<1x256xf32> to vector<8x256xf32>
    %cst_220 = arith.constant 0.000000e+00 : f32
    %557 = vector.broadcast %cst_220 : f32 to vector<8x128xf32>
    %558 = arith.addf %557, %412 : vector<8x128xf32>
    %cst_221 = arith.constant dense<0.000000e+00> : vector<8x256xf32>
    %559 = tpu.matmul %558, %552, %cst_221 {dimension_numbers = #tpu.dot_dimension_numbers<[1], [0], [0], [1], [0, 0, 1, 1], [], []>} : vector<8x128xf32>, vector<128x256xf32>, vector<8x256xf32> -> vector<8x256xf32>
    %560 = arith.addf %559, %556 : vector<8x256xf32>
    %561 = vector.extract_strided_slice %560 {offsets = [0, 0], sizes = [8, 128], strides = [1, 1]} : vector<8x256xf32> to vector<8x128xf32>
    %562 = arith.negf %561 : vector<8x128xf32>
    %563 = math.exp %562 : vector<8x128xf32>
    %cst_222 = arith.constant 1.000000e+00 : f32
    %564 = vector.broadcast %cst_222 : f32 to vector<8x128xf32>
    %565 = arith.addf %564, %563 : vector<8x128xf32>
    %566 = arith.divf %564, %565 : vector<8x128xf32>
    %567 = vector.extract_strided_slice %560 {offsets = [0, 128], sizes = [8, 128], strides = [1, 1]} : vector<8x256xf32> to vector<8x128xf32>
    %c64_i32_223 = arith.constant 64 : i32
    %568 = tpu.dynamic_rotate %567 by %c64_i32_223 dim 1 : vector<8x128xf32>, i32 -> vector<8x128xf32>
    %569 = arith.mulf %566, %567 : vector<8x128xf32>
    %570 = arith.addf %569, %568 : vector<8x128xf32>
    %571 = math.tanh %570 : vector<8x128xf32>
    %c64_i32_224 = arith.constant 64 : i32
    %572 = tpu.dynamic_rotate %566 by %c64_i32_224 dim 1 : vector<8x128xf32>, i32 -> vector<8x128xf32>
    %cst_225 = arith.constant 1.000000e+00 : f32
    %573 = vector.broadcast %cst_225 : f32 to vector<8x128xf32>
    %574 = arith.subf %573, %572 : vector<8x128xf32>
    %575 = arith.mulf %29, %574 : vector<8x128xf32>
    %576 = arith.mulf %575, %571 : vector<8x128xf32>
    %577 = arith.mulf %572, %557 : vector<8x128xf32>
    %578 = arith.addf %576, %577 : vector<8x128xf32>
    %579 = arith.addf %578, %434 : vector<8x128xf32>
    %cst_226 = arith.constant dense<0.000000e+00> : vector<8x256xf32>
    %580 = tpu.matmul %579, %552, %cst_226 {dimension_numbers = #tpu.dot_dimension_numbers<[1], [0], [0], [1], [0, 0, 1, 1], [], []>} : vector<8x128xf32>, vector<128x256xf32>, vector<8x256xf32> -> vector<8x256xf32>
    %581 = arith.addf %580, %556 : vector<8x256xf32>
    %582 = vector.extract_strided_slice %581 {offsets = [0, 0], sizes = [8, 128], strides = [1, 1]} : vector<8x256xf32> to vector<8x128xf32>
    %583 = arith.negf %582 : vector<8x128xf32>
    %584 = math.exp %583 : vector<8x128xf32>
    %cst_227 = arith.constant 1.000000e+00 : f32
    %585 = vector.broadcast %cst_227 : f32 to vector<8x128xf32>
    %586 = arith.addf %585, %584 : vector<8x128xf32>
    %587 = arith.divf %585, %586 : vector<8x128xf32>
    %588 = vector.extract_strided_slice %581 {offsets = [0, 128], sizes = [8, 128], strides = [1, 1]} : vector<8x256xf32> to vector<8x128xf32>
    %c64_i32_228 = arith.constant 64 : i32
    %589 = tpu.dynamic_rotate %588 by %c64_i32_228 dim 1 : vector<8x128xf32>, i32 -> vector<8x128xf32>
    %590 = arith.mulf %587, %588 : vector<8x128xf32>
    %591 = arith.addf %590, %589 : vector<8x128xf32>
    %592 = math.tanh %591 : vector<8x128xf32>
    %c64_i32_229 = arith.constant 64 : i32
    %593 = tpu.dynamic_rotate %587 by %c64_i32_229 dim 1 : vector<8x128xf32>, i32 -> vector<8x128xf32>
    %cst_230 = arith.constant 1.000000e+00 : f32
    %594 = vector.broadcast %cst_230 : f32 to vector<8x128xf32>
    %595 = arith.subf %594, %593 : vector<8x128xf32>
    %596 = arith.mulf %29, %595 : vector<8x128xf32>
    %597 = arith.mulf %596, %592 : vector<8x128xf32>
    %598 = arith.mulf %593, %578 : vector<8x128xf32>
    %599 = arith.addf %597, %598 : vector<8x128xf32>
    %600 = arith.addf %599, %456 : vector<8x128xf32>
    %cst_231 = arith.constant dense<0.000000e+00> : vector<8x256xf32>
    %601 = tpu.matmul %600, %552, %cst_231 {dimension_numbers = #tpu.dot_dimension_numbers<[1], [0], [0], [1], [0, 0, 1, 1], [], []>} : vector<8x128xf32>, vector<128x256xf32>, vector<8x256xf32> -> vector<8x256xf32>
    %602 = arith.addf %601, %556 : vector<8x256xf32>
    %603 = vector.extract_strided_slice %602 {offsets = [0, 0], sizes = [8, 128], strides = [1, 1]} : vector<8x256xf32> to vector<8x128xf32>
    %604 = arith.negf %603 : vector<8x128xf32>
    %605 = math.exp %604 : vector<8x128xf32>
    %cst_232 = arith.constant 1.000000e+00 : f32
    %606 = vector.broadcast %cst_232 : f32 to vector<8x128xf32>
    %607 = arith.addf %606, %605 : vector<8x128xf32>
    %608 = arith.divf %606, %607 : vector<8x128xf32>
    %609 = vector.extract_strided_slice %602 {offsets = [0, 128], sizes = [8, 128], strides = [1, 1]} : vector<8x256xf32> to vector<8x128xf32>
    %c64_i32_233 = arith.constant 64 : i32
    %610 = tpu.dynamic_rotate %609 by %c64_i32_233 dim 1 : vector<8x128xf32>, i32 -> vector<8x128xf32>
    %611 = arith.mulf %608, %609 : vector<8x128xf32>
    %612 = arith.addf %611, %610 : vector<8x128xf32>
    %613 = math.tanh %612 : vector<8x128xf32>
    %c64_i32_234 = arith.constant 64 : i32
    %614 = tpu.dynamic_rotate %608 by %c64_i32_234 dim 1 : vector<8x128xf32>, i32 -> vector<8x128xf32>
    %cst_235 = arith.constant 1.000000e+00 : f32
    %615 = vector.broadcast %cst_235 : f32 to vector<8x128xf32>
    %616 = arith.subf %615, %614 : vector<8x128xf32>
    %617 = arith.mulf %29, %616 : vector<8x128xf32>
    %618 = arith.mulf %617, %613 : vector<8x128xf32>
    %619 = arith.mulf %614, %599 : vector<8x128xf32>
    %620 = arith.addf %618, %619 : vector<8x128xf32>
    %621 = arith.addf %620, %478 : vector<8x128xf32>
    %cst_236 = arith.constant dense<0.000000e+00> : vector<8x256xf32>
    %622 = tpu.matmul %621, %552, %cst_236 {dimension_numbers = #tpu.dot_dimension_numbers<[1], [0], [0], [1], [0, 0, 1, 1], [], []>} : vector<8x128xf32>, vector<128x256xf32>, vector<8x256xf32> -> vector<8x256xf32>
    %623 = arith.addf %622, %556 : vector<8x256xf32>
    %624 = vector.extract_strided_slice %623 {offsets = [0, 0], sizes = [8, 128], strides = [1, 1]} : vector<8x256xf32> to vector<8x128xf32>
    %625 = arith.negf %624 : vector<8x128xf32>
    %626 = math.exp %625 : vector<8x128xf32>
    %cst_237 = arith.constant 1.000000e+00 : f32
    %627 = vector.broadcast %cst_237 : f32 to vector<8x128xf32>
    %628 = arith.addf %627, %626 : vector<8x128xf32>
    %629 = arith.divf %627, %628 : vector<8x128xf32>
    %630 = vector.extract_strided_slice %623 {offsets = [0, 128], sizes = [8, 128], strides = [1, 1]} : vector<8x256xf32> to vector<8x128xf32>
    %c64_i32_238 = arith.constant 64 : i32
    %631 = tpu.dynamic_rotate %630 by %c64_i32_238 dim 1 : vector<8x128xf32>, i32 -> vector<8x128xf32>
    %632 = arith.mulf %629, %630 : vector<8x128xf32>
    %633 = arith.addf %632, %631 : vector<8x128xf32>
    %634 = math.tanh %633 : vector<8x128xf32>
    %c64_i32_239 = arith.constant 64 : i32
    %635 = tpu.dynamic_rotate %629 by %c64_i32_239 dim 1 : vector<8x128xf32>, i32 -> vector<8x128xf32>
    %cst_240 = arith.constant 1.000000e+00 : f32
    %636 = vector.broadcast %cst_240 : f32 to vector<8x128xf32>
    %637 = arith.subf %636, %635 : vector<8x128xf32>
    %638 = arith.mulf %29, %637 : vector<8x128xf32>
    %639 = arith.mulf %638, %634 : vector<8x128xf32>
    %640 = arith.mulf %635, %620 : vector<8x128xf32>
    %641 = arith.addf %639, %640 : vector<8x128xf32>
    %642 = arith.addf %641, %500 : vector<8x128xf32>
    %cst_241 = arith.constant dense<0.000000e+00> : vector<8x256xf32>
    %643 = tpu.matmul %642, %552, %cst_241 {dimension_numbers = #tpu.dot_dimension_numbers<[1], [0], [0], [1], [0, 0, 1, 1], [], []>} : vector<8x128xf32>, vector<128x256xf32>, vector<8x256xf32> -> vector<8x256xf32>
    %644 = arith.addf %643, %556 : vector<8x256xf32>
    %645 = vector.extract_strided_slice %644 {offsets = [0, 0], sizes = [8, 128], strides = [1, 1]} : vector<8x256xf32> to vector<8x128xf32>
    %646 = arith.negf %645 : vector<8x128xf32>
    %647 = math.exp %646 : vector<8x128xf32>
    %cst_242 = arith.constant 1.000000e+00 : f32
    %648 = vector.broadcast %cst_242 : f32 to vector<8x128xf32>
    %649 = arith.addf %648, %647 : vector<8x128xf32>
    %650 = arith.divf %648, %649 : vector<8x128xf32>
    %651 = vector.extract_strided_slice %644 {offsets = [0, 128], sizes = [8, 128], strides = [1, 1]} : vector<8x256xf32> to vector<8x128xf32>
    %c64_i32_243 = arith.constant 64 : i32
    %652 = tpu.dynamic_rotate %651 by %c64_i32_243 dim 1 : vector<8x128xf32>, i32 -> vector<8x128xf32>
    %653 = arith.mulf %650, %651 : vector<8x128xf32>
    %654 = arith.addf %653, %652 : vector<8x128xf32>
    %655 = math.tanh %654 : vector<8x128xf32>
    %c64_i32_244 = arith.constant 64 : i32
    %656 = tpu.dynamic_rotate %650 by %c64_i32_244 dim 1 : vector<8x128xf32>, i32 -> vector<8x128xf32>
    %cst_245 = arith.constant 1.000000e+00 : f32
    %657 = vector.broadcast %cst_245 : f32 to vector<8x128xf32>
    %658 = arith.subf %657, %656 : vector<8x128xf32>
    %659 = arith.mulf %29, %658 : vector<8x128xf32>
    %660 = arith.mulf %659, %655 : vector<8x128xf32>
    %661 = arith.mulf %656, %641 : vector<8x128xf32>
    %662 = arith.addf %660, %661 : vector<8x128xf32>
    %663 = arith.addf %662, %522 : vector<8x128xf32>
    %cst_246 = arith.constant dense<0.000000e+00> : vector<8x256xf32>
    %664 = tpu.matmul %663, %552, %cst_246 {dimension_numbers = #tpu.dot_dimension_numbers<[1], [0], [0], [1], [0, 0, 1, 1], [], []>} : vector<8x128xf32>, vector<128x256xf32>, vector<8x256xf32> -> vector<8x256xf32>
    %665 = arith.addf %664, %556 : vector<8x256xf32>
    %666 = vector.extract_strided_slice %665 {offsets = [0, 0], sizes = [8, 128], strides = [1, 1]} : vector<8x256xf32> to vector<8x128xf32>
    %667 = arith.negf %666 : vector<8x128xf32>
    %668 = math.exp %667 : vector<8x128xf32>
    %cst_247 = arith.constant 1.000000e+00 : f32
    %669 = vector.broadcast %cst_247 : f32 to vector<8x128xf32>
    %670 = arith.addf %669, %668 : vector<8x128xf32>
    %671 = arith.divf %669, %670 : vector<8x128xf32>
    %672 = vector.extract_strided_slice %665 {offsets = [0, 128], sizes = [8, 128], strides = [1, 1]} : vector<8x256xf32> to vector<8x128xf32>
    %c64_i32_248 = arith.constant 64 : i32
    %673 = tpu.dynamic_rotate %672 by %c64_i32_248 dim 1 : vector<8x128xf32>, i32 -> vector<8x128xf32>
    %674 = arith.mulf %671, %672 : vector<8x128xf32>
    %675 = arith.addf %674, %673 : vector<8x128xf32>
    %676 = math.tanh %675 : vector<8x128xf32>
    %c64_i32_249 = arith.constant 64 : i32
    %677 = tpu.dynamic_rotate %671 by %c64_i32_249 dim 1 : vector<8x128xf32>, i32 -> vector<8x128xf32>
    %cst_250 = arith.constant 1.000000e+00 : f32
    %678 = vector.broadcast %cst_250 : f32 to vector<8x128xf32>
    %679 = arith.subf %678, %677 : vector<8x128xf32>
    %680 = arith.mulf %29, %679 : vector<8x128xf32>
    %681 = arith.mulf %680, %676 : vector<8x128xf32>
    %682 = arith.mulf %677, %662 : vector<8x128xf32>
    %683 = arith.addf %681, %682 : vector<8x128xf32>
    %684 = arith.addf %683, %544 : vector<8x128xf32>
    %cst_251 = arith.constant dense<0.000000e+00> : vector<8x256xf32>
    %685 = tpu.matmul %684, %552, %cst_251 {dimension_numbers = #tpu.dot_dimension_numbers<[1], [0], [0], [1], [0, 0, 1, 1], [], []>} : vector<8x128xf32>, vector<128x256xf32>, vector<8x256xf32> -> vector<8x256xf32>
    %686 = arith.addf %685, %556 : vector<8x256xf32>
    %687 = vector.extract_strided_slice %686 {offsets = [0, 0], sizes = [8, 128], strides = [1, 1]} : vector<8x256xf32> to vector<8x128xf32>
    %688 = arith.negf %687 : vector<8x128xf32>
    %689 = math.exp %688 : vector<8x128xf32>
    %cst_252 = arith.constant 1.000000e+00 : f32
    %690 = vector.broadcast %cst_252 : f32 to vector<8x128xf32>
    %691 = arith.addf %690, %689 : vector<8x128xf32>
    %692 = arith.divf %690, %691 : vector<8x128xf32>
    %693 = vector.extract_strided_slice %686 {offsets = [0, 128], sizes = [8, 128], strides = [1, 1]} : vector<8x256xf32> to vector<8x128xf32>
    %c64_i32_253 = arith.constant 64 : i32
    %694 = tpu.dynamic_rotate %693 by %c64_i32_253 dim 1 : vector<8x128xf32>, i32 -> vector<8x128xf32>
    %695 = arith.mulf %692, %693 : vector<8x128xf32>
    %696 = arith.addf %695, %694 : vector<8x128xf32>
    %697 = math.tanh %696 : vector<8x128xf32>
    %c64_i32_254 = arith.constant 64 : i32
    %698 = tpu.dynamic_rotate %692 by %c64_i32_254 dim 1 : vector<8x128xf32>, i32 -> vector<8x128xf32>
    %cst_255 = arith.constant 1.000000e+00 : f32
    %699 = vector.broadcast %cst_255 : f32 to vector<8x128xf32>
    %700 = arith.subf %699, %698 : vector<8x128xf32>
    %701 = arith.mulf %29, %700 : vector<8x128xf32>
    %702 = arith.mulf %701, %697 : vector<8x128xf32>
    %703 = arith.mulf %698, %683 : vector<8x128xf32>
    %704 = arith.addf %702, %703 : vector<8x128xf32>
    %cst_256 = arith.constant 0.000000e+00 : f32
    %705 = vector.broadcast %cst_256 : f32 to vector<8x128xf32>
    %706 = arith.maximumf %704, %705 : vector<8x128xf32>
    %c0_257 = arith.constant 0 : index
    %c0_258 = arith.constant 0 : index
    %707 = vector.load %arg2[%c0_257, %c0_258] : memref<128x128xf32, #tpu.memory_space<vmem>>, vector<128x128xf32>
    %cst_259 = arith.constant dense<0.000000e+00> : vector<8x128xf32>
    %708 = tpu.matmul %706, %707, %cst_259 {dimension_numbers = #tpu.dot_dimension_numbers<[1], [0], [0], [1], [0, 0, 1, 1], [], []>} : vector<8x128xf32>, vector<128x128xf32>, vector<8x128xf32> -> vector<8x128xf32>
    %c0_260 = arith.constant 0 : index
    %c0_261 = arith.constant 0 : index
    %709 = vector.load %arg3[%c0_260, %c0_261] : memref<1x128xf32, #tpu.memory_space<vmem>>, vector<1x128xf32>
    %710 = vector.broadcast %709 : vector<1x128xf32> to vector<8x128xf32>
    %711 = arith.addf %708, %710 : vector<8x128xf32>
    %cst_262 = arith.constant 0.000000e+00 : f32
    %712 = vector.broadcast %cst_262 : f32 to vector<8x128xf32>
    %713 = arith.maximumf %711, %712 : vector<8x128xf32>
    %c0_263 = arith.constant 0 : index
    %c0_264 = arith.constant 0 : index
    %714 = vector.load %arg4[%c0_263, %c0_264] : memref<128x128xf32, #tpu.memory_space<vmem>>, vector<128x128xf32>
    %cst_265 = arith.constant dense<0.000000e+00> : vector<8x128xf32>
    %715 = tpu.matmul %713, %714, %cst_265 {dimension_numbers = #tpu.dot_dimension_numbers<[1], [0], [0], [1], [0, 0, 1, 1], [], []>} : vector<8x128xf32>, vector<128x128xf32>, vector<8x128xf32> -> vector<8x128xf32>
    %c0_266 = arith.constant 0 : index
    %c0_267 = arith.constant 0 : index
    %716 = vector.load %arg5[%c0_266, %c0_267] : memref<1x128xf32, #tpu.memory_space<vmem>>, vector<1x128xf32>
    %717 = vector.broadcast %716 : vector<1x128xf32> to vector<8x128xf32>
    %718 = arith.addf %715, %717 : vector<8x128xf32>
    %c0_268 = arith.constant 0 : index
    %c0_269 = arith.constant 0 : index
    %719 = vector.load %arg7[%c0_268, %c0_269] : memref<8x128xf32, #tpu.memory_space<vmem>>, vector<8x128xf32>
    tpu.vector_store %arg7[%c0_268, %c0_269], %718 {strides = array<i32>} : memref<8x128xf32, #tpu.memory_space<vmem>>, vector<8x128xf32>,
    return
  }
}

</mosaic_0001>

<llo_original>
// kernel: gru_model.1
$region0: #{gru_model.1}
  #allocation0 [shape = 'u32[]', space=smem, size = 0x4, offset = 0x4, fixed_abs, tag = 'smem constant byte address 0x4 - core index']
  #allocation1 [shape = 'u32[144,128]{1,0:T(1,128)}', space=vmem, size = 0x12000, scoped, tag = 'internal scratch']
  #allocation2 [shape = 'f32[4,128,256]{2,1,0:T(8,128)}', space=vmem, size = 0x80000, scoped, tag = 'scratch operand']
  #allocation3 [shape = 's32[4]{0}', space=sflag, size = 0x10, scoped, tag = 'scratch operand']
  #allocation4 [shape = 's32[]', space=sflag, size = 0x4, offset = 0, fixed_abs, tag = 'sflag constant byte address 0x0 - dummy sync flag']
  #allocation5 [shape = 's32[]', space=sflag, size = 0x4, offset = 0, fixed_abs, tag = 'sflag constant byte address 0x0 - dummy sync flag']
  #allocation6 [shape = 's32[]', space=sflag, size = 0x4, offset = 0, fixed_abs, tag = 'sflag constant byte address 0x0 - dummy sync flag']
  #allocation7 [shape = 's32[]', space=sflag, size = 0x4, offset = 0, fixed_abs, tag = 'sflag constant byte address 0x0 - dummy sync flag']
  %s0 = inlined_call_operand.vmem [shape: f32[7,8,128], index: 0, kind: input, shape index: {}]
  %s1 = inlined_call_operand.vmem [shape: f32[4,1,256], index: 1, kind: input, shape index: {}]
  %s2 = inlined_call_operand.vmem [shape: f32[128,128], index: 2, kind: input, shape index: {}]
  %s3 = inlined_call_operand.vmem [shape: f32[1,128], index: 3, kind: input, shape index: {}]
  %s4 = inlined_call_operand.vmem [shape: f32[128,128], index: 4, kind: input, shape index: {}]
  %s5 = inlined_call_operand.vmem [shape: f32[1,128], index: 5, kind: input, shape index: {}]
  %s6 = inlined_call_operand.vmem [shape: f32[4,128,256], index: 6, kind: input, shape index: {}]
  %s7 = inlined_call_operand.vmem [shape: f32[8,128], index: 7, kind: output, shape index: {}]
  %s8 = sld [smem:[#allocation0]]
  $region170: #{gru_model.1} parent=0
    _
  %s10 = ssub.s32 1, %s8
  %s11 = scalar_select 0, %s10, %s8
  // Predicated region
  $region2: #{gru_model.1} parent=0 // pred_check
    _
  $region3: #{gru_model.1} parent=0 // pred_check_branch
    %13 = sbr.rel (0) target = $region5
  $region4: #{gru_model.1} parent=0 // pred_region
    _
  $region5: #{gru_model.1} parent=0 // pred_fallthru
    _
  // Predicated region
  $region6: #{gru_model.1} parent=0 // pred_check
    _
  $region7: #{gru_model.1} parent=0 // pred_check_branch
    %15 = sbr.rel (0) target = $region9
  $region8: #{gru_model.1} parent=0 // pred_region
    _
  $region9: #{gru_model.1} parent=0 // pred_fallthru
    _
  // Predicated region
  $region10: #{gru_model.1} parent=0 // pred_check
    _
  $region11: #{gru_model.1} parent=0 // pred_check_branch
    %17 = sbr.rel (0) target = $region13
  $region12: #{gru_model.1} parent=0 // pred_region
    _
  $region13: #{gru_model.1} parent=0 // pred_fallthru
    _
  // Predicated region
  $region14: #{gru_model.1} parent=0 // pred_check
    _
  $region15: #{gru_model.1} parent=0 // pred_check_branch
    %19 = sbr.rel (0) target = $region17
  $region16: #{gru_model.1} parent=0 // pred_region
    _
  $region17: #{gru_model.1} parent=0 // pred_fallthru
    _
  // Predicated region
  $region18: #{gru_model.1} parent=0 // pred_check
    _
  $region19: #{gru_model.1} parent=0 // pred_check_branch
    %21 = sbr.rel (0) target = $region21
  $region20: #{gru_model.1} parent=0 // pred_region
    _
  $region21: #{gru_model.1} parent=0 // pred_fallthru
    _
  // Predicated region
  $region22: #{gru_model.1} parent=0 // pred_check
    _
  $region23: #{gru_model.1} parent=0 // pred_check_branch
    %23 = sbr.rel (0) target = $region25
  $region24: #{gru_model.1} parent=0 // pred_region
    _
  $region25: #{gru_model.1} parent=0 // pred_fallthru
    _
  %p25 = scmp.lt.u32.totalorder 256, 8
  %p26 = pneg %p25
  // Predicated region
  $region26: #{gru_model.1} parent=0 // pred_check
    _
  $region27: #{gru_model.1} parent=0 // pred_check_branch
    %28 = sbr.rel (%p25) target = $region29
  $region28: #{gru_model.1} parent=0 // pred_region
    %s44 = sand.u32 256, 7
    %p45 = scmp.eq.s32.totalorder %s44, 0
    // Predicated region
    $region41: #{gru_model.1} parent=28 // pred_check
      %p46 = pneg %p45
    $region42: #{gru_model.1} parent=28 // pred_check_branch
      %48 = sbr.rel (%p46) target = $region44
    $region43: #{gru_model.1} parent=28 // pred_region
      loop: start=0, step=1, limit=1
      $region45: #{gru_model.1} parent=43 // loop_pre_header
        _
      $region46: #{gru_model.1} parent=43 // loop_header
        %s50 = sphi 0, %s54
        %p51 = scmp.ge.s32.totalorder %s50, 1
        %s55 = sphi %s6, %s6
        %s56 = sphi [#allocation2], [#allocation2]
      $region47: #{gru_model.1} parent=43 // loop_header_branch
        %53 = sbr.rel (%p51) target = $region51
      $region48: #{gru_model.1} parent=43 // loop_body
        %v57 = vld [vmem:[%s55] sm:$0xff]
        %58 = vst [vmem:[%s56] sm:$0xff] %v57
        %v59 = vld [vmem:[%s55 + $0x8] sm:$0xff]
        %60 = vst [vmem:[%s56 + $0x8] sm:$0xff] %v59
        %v61 = vld [vmem:[%s55 + $0x10] sm:$0xff]
        %62 = vst [vmem:[%s56 + $0x10] sm:$0xff] %v61
        %v63 = vld [vmem:[%s55 + $0x18] sm:$0xff]
        %64 = vst [vmem:[%s56 + $0x18] sm:$0xff] %v63
        %v65 = vld [vmem:[%s55 + $0x20] sm:$0xff]
        %66 = vst [vmem:[%s56 + $0x20] sm:$0xff] %v65
        %v67 = vld [vmem:[%s55 + $0x28] sm:$0xff]
        %68 = vst [vmem:[%s56 + $0x28] sm:$0xff] %v67
        %v69 = vld [vmem:[%s55 + $0x30] sm:$0xff]
        %70 = vst [vmem:[%s56 + $0x30] sm:$0xff] %v69
        %v71 = vld [vmem:[%s55 + $0x38] sm:$0xff]
        %72 = vst [vmem:[%s56 + $0x38] sm:$0xff] %v71
        %v73 = vld [vmem:[%s55 + $0x40] sm:$0xff]
        %74 = vst [vmem:[%s56 + $0x40] sm:$0xff] %v73
        %v75 = vld [vmem:[%s55 + $0x48] sm:$0xff]
        %76 = vst [vmem:[%s56 + $0x48] sm:$0xff] %v75
        %v77 = vld [vmem:[%s55 + $0x50] sm:$0xff]
        %78 = vst [vmem:[%s56 + $0x50] sm:$0xff] %v77
        %v79 = vld [vmem:[%s55 + $0x58] sm:$0xff]
        %80 = vst [vmem:[%s56 + $0x58] sm:$0xff] %v79
        %v81 = vld [vmem:[%s55 + $0x60] sm:$0xff]
        %82 = vst [vmem:[%s56 + $0x60] sm:$0xff] %v81
        %v83 = vld [vmem:[%s55 + $0x68] sm:$0xff]
        %84 = vst [vmem:[%s56 + $0x68] sm:$0xff] %v83
        %v85 = vld [vmem:[%s55 + $0x70] sm:$0xff]
        %86 = vst [vmem:[%s56 + $0x70] sm:$0xff] %v85
        %v87 = vld [vmem:[%s55 + $0x78] sm:$0xff]
        %88 = vst [vmem:[%s56 + $0x78] sm:$0xff] %v87
        %v89 = vld [vmem:[%s55 + $0x80] sm:$0xff]
        %90 = vst [vmem:[%s56 + $0x80] sm:$0xff] %v89
        %v91 = vld [vmem:[%s55 + $0x88] sm:$0xff]
        %92 = vst [vmem:[%s56 + $0x88] sm:$0xff] %v91
        %v93 = vld [vmem:[%s55 + $0x90] sm:$0xff]
        %94 = vst [vmem:[%s56 + $0x90] sm:$0xff] %v93
        %v95 = vld [vmem:[%s55 + $0x98] sm:$0xff]
        %96 = vst [vmem:[%s56 + $0x98] sm:$0xff] %v95
        %v97 = vld [vmem:[%s55 + $0xa0] sm:$0xff]
        %98 = vst [vmem:[%s56 + $0xa0] sm:$0xff] %v97
        %v99 = vld [vmem:[%s55 + $0xa8] sm:$0xff]
        %100 = vst [vmem:[%s56 + $0xa8] sm:$0xff] %v99
        %v101 = vld [vmem:[%s55 + $0xb0] sm:$0xff]
        %102 = vst [vmem:[%s56 + $0xb0] sm:$0xff] %v101
        %v103 = vld [vmem:[%s55 + $0xb8] sm:$0xff]
        %104 = vst [vmem:[%s56 + $0xb8] sm:$0xff] %v103
        %v105 = vld [vmem:[%s55 + $0xc0] sm:$0xff]
        %106 = vst [vmem:[%s56 + $0xc0] sm:$0xff] %v105
        %v107 = vld [vmem:[%s55 + $0xc8] sm:$0xff]
        %108 = vst [vmem:[%s56 + $0xc8] sm:$0xff] %v107
        %v109 = vld [vmem:[%s55 + $0xd0] sm:$0xff]
        %110 = vst [vmem:[%s56 + $0xd0] sm:$0xff] %v109
        %v111 = vld [vmem:[%s55 + $0xd8] sm:$0xff]
        %112 = vst [vmem:[%s56 + $0xd8] sm:$0xff] %v111
        %v113 = vld [vmem:[%s55 + $0xe0] sm:$0xff]
        %114 = vst [vmem:[%s56 + $0xe0] sm:$0xff] %v113
        %v115 = vld [vmem:[%s55 + $0xe8] sm:$0xff]
        %116 = vst [vmem:[%s56 + $0xe8] sm:$0xff] %v115
        %v117 = vld [vmem:[%s55 + $0xf0] sm:$0xff]
        %118 = vst [vmem:[%s56 + $0xf0] sm:$0xff] %v117
        %v119 = vld [vmem:[%s55 + $0xf8] sm:$0xff]
        %120 = vst [vmem:[%s56 + $0xf8] sm:$0xff] %v119
      $region49: #{gru_model.1} parent=43 // loop_footer
        %s54 = sadd.s32 1, %s50
      $region50: #{gru_model.1} parent=43 // loop_footer_branch
        %49 = sbr.rel target = $region46
      $region51: #{gru_model.1} parent=43 // loop_exit
        _
    $region44: #{gru_model.1} parent=28 // pred_fallthru
      _
    %p121 = pneg %p45
    // Predicated region
    $region52: #{gru_model.1} parent=28 // pred_check
      _
    $region53: #{gru_model.1} parent=28 // pred_check_branch
      %123 = sbr.rel (%p45) target = $region55
    $region54: #{gru_model.1} parent=28 // pred_region
      %s124 = sand.u32 256, 7
    $region55: #{gru_model.1} parent=28 // pred_fallthru
      _
  $region29: #{gru_model.1} parent=0 // pred_fallthru
    _
  // Predicated region
  $region30: #{gru_model.1} parent=0 // pred_check
    %p29 = pneg %p25
  $region31: #{gru_model.1} parent=0 // pred_check_branch
    %31 = sbr.rel (%p29) target = $region33
  $region32: #{gru_model.1} parent=0 // pred_region
    %s32 = sshll.u32 1, 256
    %s33 = ssub.s32 %s32, 1
    loop: start=0, step=1, limit=1
    $region34: #{gru_model.1} parent=32 // loop_pre_header
      _
    $region35: #{gru_model.1} parent=32 // loop_header
      %s35 = sphi 0, %s39
      %p36 = scmp.ge.s32.totalorder %s35, 1
      %s40 = sphi %s6, %s6
      %s41 = sphi [#allocation2], [#allocation2]
    $region36: #{gru_model.1} parent=32 // loop_header_branch
      %38 = sbr.rel (%p36) target = $region40
    $region37: #{gru_model.1} parent=32 // loop_body
      %v42 = vld [vmem:[%s40] sm:%s33]
      %43 = vst [vmem:[%s41] sm:%s33] %v42
    $region38: #{gru_model.1} parent=32 // loop_footer
      %s39 = sadd.s32 1, %s35
    $region39: #{gru_model.1} parent=32 // loop_footer_branch
      %34 = sbr.rel target = $region35
    $region40: #{gru_model.1} parent=32 // loop_exit
      _
  $region33: #{gru_model.1} parent=0 // pred_fallthru
    _
  // Predicated region
  $region56: #{gru_model.1} parent=0 // pred_check
    _
  $region57: #{gru_model.1} parent=0 // pred_check_branch
    %127 = sbr.rel (0) target = $region59
  $region58: #{gru_model.1} parent=0 // pred_region
    %128 = vsyncadd [#allocation3], 4096
  $region59: #{gru_model.1} parent=0 // pred_fallthru
    _
  %s129 = scalar_lea.vmem %s6, 256
  %s130 = scalar_lea.vmem [#allocation2], 256
  %s131 = scalar_lea.sflag [#allocation3], 1
  %p133 = scmp.lt.u32.totalorder 256, 8
  %p134 = pneg %p133
  // Predicated region
  $region60: #{gru_model.1} parent=0 // pred_check
    _
  $region61: #{gru_model.1} parent=0 // pred_check_branch
    %136 = sbr.rel (%p133) target = $region63
  $region62: #{gru_model.1} parent=0 // pred_region
    %s152 = sand.u32 256, 7
    %p153 = scmp.eq.s32.totalorder %s152, 0
    // Predicated region
    $region75: #{gru_model.1} parent=62 // pred_check
      %p154 = pneg %p153
    $region76: #{gru_model.1} parent=62 // pred_check_branch
      %156 = sbr.rel (%p154) target = $region78
    $region77: #{gru_model.1} parent=62 // pred_region
      loop: start=0, step=1, limit=1
      $region79: #{gru_model.1} parent=77 // loop_pre_header
        _
      $region80: #{gru_model.1} parent=77 // loop_header
        %s158 = sphi 0, %s162
        %p159 = scmp.ge.s32.totalorder %s158, 1
        %s163 = sphi %s129, %s129
        %s164 = sphi %s130, %s130
      $region81: #{gru_model.1} parent=77 // loop_header_branch
        %161 = sbr.rel (%p159) target = $region85
      $region82: #{gru_model.1} parent=77 // loop_body
        %v165 = vld [vmem:[%s163] sm:$0xff]
        %166 = vst [vmem:[%s164] sm:$0xff] %v165
        %v167 = vld [vmem:[%s163 + $0x8] sm:$0xff]
        %168 = vst [vmem:[%s164 + $0x8] sm:$0xff] %v167
        %v169 = vld [vmem:[%s163 + $0x10] sm:$0xff]
        %170 = vst [vmem:[%s164 + $0x10] sm:$0xff] %v169
        %v171 = vld [vmem:[%s163 + $0x18] sm:$0xff]
        %172 = vst [vmem:[%s164 + $0x18] sm:$0xff] %v171
        %v173 = vld [vmem:[%s163 + $0x20] sm:$0xff]
        %174 = vst [vmem:[%s164 + $0x20] sm:$0xff] %v173
        %v175 = vld [vmem:[%s163 + $0x28] sm:$0xff]
        %176 = vst [vmem:[%s164 + $0x28] sm:$0xff] %v175
        %v177 = vld [vmem:[%s163 + $0x30] sm:$0xff]
        %178 = vst [vmem:[%s164 + $0x30] sm:$0xff] %v177
        %v179 = vld [vmem:[%s163 + $0x38] sm:$0xff]
        %180 = vst [vmem:[%s164 + $0x38] sm:$0xff] %v179
        %v181 = vld [vmem:[%s163 + $0x40] sm:$0xff]
        %182 = vst [vmem:[%s164 + $0x40] sm:$0xff] %v181
        %v183 = vld [vmem:[%s163 + $0x48] sm:$0xff]
        %184 = vst [vmem:[%s164 + $0x48] sm:$0xff] %v183
        %v185 = vld [vmem:[%s163 + $0x50] sm:$0xff]
        %186 = vst [vmem:[%s164 + $0x50] sm:$0xff] %v185
        %v187 = vld [vmem:[%s163 + $0x58] sm:$0xff]
        %188 = vst [vmem:[%s164 + $0x58] sm:$0xff] %v187
        %v189 = vld [vmem:[%s163 + $0x60] sm:$0xff]
        %190 = vst [vmem:[%s164 + $0x60] sm:$0xff] %v189
        %v191 = vld [vmem:[%s163 + $0x68] sm:$0xff]
        %192 = vst [vmem:[%s164 + $0x68] sm:$0xff] %v191
        %v193 = vld [vmem:[%s163 + $0x70] sm:$0xff]
        %194 = vst [vmem:[%s164 + $0x70] sm:$0xff] %v193
        %v195 = vld [vmem:[%s163 + $0x78] sm:$0xff]
        %196 = vst [vmem:[%s164 + $0x78] sm:$0xff] %v195
        %v197 = vld [vmem:[%s163 + $0x80] sm:$0xff]
        %198 = vst [vmem:[%s164 + $0x80] sm:$0xff] %v197
        %v199 = vld [vmem:[%s163 + $0x88] sm:$0xff]
        %200 = vst [vmem:[%s164 + $0x88] sm:$0xff] %v199
        %v201 = vld [vmem:[%s163 + $0x90] sm:$0xff]
        %202 = vst [vmem:[%s164 + $0x90] sm:$0xff] %v201
        %v203 = vld [vmem:[%s163 + $0x98] sm:$0xff]
        %204 = vst [vmem:[%s164 + $0x98] sm:$0xff] %v203
        %v205 = vld [vmem:[%s163 + $0xa0] sm:$0xff]
        %206 = vst [vmem:[%s164 + $0xa0] sm:$0xff] %v205
        %v207 = vld [vmem:[%s163 + $0xa8] sm:$0xff]
        %208 = vst [vmem:[%s164 + $0xa8] sm:$0xff] %v207
        %v209 = vld [vmem:[%s163 + $0xb0] sm:$0xff]
        %210 = vst [vmem:[%s164 + $0xb0] sm:$0xff] %v209
        %v211 = vld [vmem:[%s163 + $0xb8] sm:$0xff]
        %212 = vst [vmem:[%s164 + $0xb8] sm:$0xff] %v211
        %v213 = vld [vmem:[%s163 + $0xc0] sm:$0xff]
        %214 = vst [vmem:[%s164 + $0xc0] sm:$0xff] %v213
        %v215 = vld [vmem:[%s163 + $0xc8] sm:$0xff]
        %216 = vst [vmem:[%s164 + $0xc8] sm:$0xff] %v215
        %v217 = vld [vmem:[%s163 + $0xd0] sm:$0xff]
        %218 = vst [vmem:[%s164 + $0xd0] sm:$0xff] %v217
        %v219 = vld [vmem:[%s163 + $0xd8] sm:$0xff]
        %220 = vst [vmem:[%s164 + $0xd8] sm:$0xff] %v219
        %v221 = vld [vmem:[%s163 + $0xe0] sm:$0xff]
        %222 = vst [vmem:[%s164 + $0xe0] sm:$0xff] %v221
        %v223 = vld [vmem:[%s163 + $0xe8] sm:$0xff]
        %224 = vst [vmem:[%s164 + $0xe8] sm:$0xff] %v223
        %v225 = vld [vmem:[%s163 + $0xf0] sm:$0xff]
        %226 = vst [vmem:[%s164 + $0xf0] sm:$0xff] %v225
        %v227 = vld [vmem:[%s163 + $0xf8] sm:$0xff]
        %228 = vst [vmem:[%s164 + $0xf8] sm:$0xff] %v227
      $region83: #{gru_model.1} parent=77 // loop_footer
        %s162 = sadd.s32 1, %s158
      $region84: #{gru_model.1} parent=77 // loop_footer_branch
        %157 = sbr.rel target = $region80
      $region85: #{gru_model.1} parent=77 // loop_exit
        _
    $region78: #{gru_model.1} parent=62 // pred_fallthru
      _
    %p229 = pneg %p153
    // Predicated region
    $region86: #{gru_model.1} parent=62 // pred_check
      _
    $region87: #{gru_model.1} parent=62 // pred_check_branch
      %231 = sbr.rel (%p153) target = $region89
    $region88: #{gru_model.1} parent=62 // pred_region
      %s232 = sand.u32 256, 7
    $region89: #{gru_model.1} parent=62 // pred_fallthru
      _
  $region63: #{gru_model.1} parent=0 // pred_fallthru
    _
  // Predicated region
  $region64: #{gru_model.1} parent=0 // pred_check
    %p137 = pneg %p133
  $region65: #{gru_model.1} parent=0 // pred_check_branch
    %139 = sbr.rel (%p137) target = $region67
  $region66: #{gru_model.1} parent=0 // pred_region
    %s140 = sshll.u32 1, 256
    %s141 = ssub.s32 %s140, 1
    loop: start=0, step=1, limit=1
    $region68: #{gru_model.1} parent=66 // loop_pre_header
      _
    $region69: #{gru_model.1} parent=66 // loop_header
      %s143 = sphi 0, %s147
      %p144 = scmp.ge.s32.totalorder %s143, 1
      %s148 = sphi %s129, %s129
      %s149 = sphi %s130, %s130
    $region70: #{gru_model.1} parent=66 // loop_header_branch
      %146 = sbr.rel (%p144) target = $region74
    $region71: #{gru_model.1} parent=66 // loop_body
      %v150 = vld [vmem:[%s148] sm:%s141]
      %151 = vst [vmem:[%s149] sm:%s141] %v150
    $region72: #{gru_model.1} parent=66 // loop_footer
      %s147 = sadd.s32 1, %s143
    $region73: #{gru_model.1} parent=66 // loop_footer_branch
      %142 = sbr.rel target = $region69
    $region74: #{gru_model.1} parent=66 // loop_exit
      _
  $region67: #{gru_model.1} parent=0 // pred_fallthru
    _
  // Predicated region
  $region90: #{gru_model.1} parent=0 // pred_check
    _
  $region91: #{gru_model.1} parent=0 // pred_check_branch
    %235 = sbr.rel (0) target = $region93
  $region92: #{gru_model.1} parent=0 // pred_region
    %236 = vsyncadd %s131, 4096
  $region93: #{gru_model.1} parent=0 // pred_fallthru
    _
  %s237 = scalar_lea.vmem %s6, 512
  %s238 = scalar_lea.vmem [#allocation2], 512
  %s239 = scalar_lea.sflag [#allocation3], 2
  %p241 = scmp.lt.u32.totalorder 256, 8
  %p242 = pneg %p241
  // Predicated region
  $region94: #{gru_model.1} parent=0 // pred_check
    _
  $region95: #{gru_model.1} parent=0 // pred_check_branch
    %244 = sbr.rel (%p241) target = $region97
  $region96: #{gru_model.1} parent=0 // pred_region
    %s260 = sand.u32 256, 7
    %p261 = scmp.eq.s32.totalorder %s260, 0
    // Predicated region
    $region109: #{gru_model.1} parent=96 // pred_check
      %p262 = pneg %p261
    $region110: #{gru_model.1} parent=96 // pred_check_branch
      %264 = sbr.rel (%p262) target = $region112
    $region111: #{gru_model.1} parent=96 // pred_region
      loop: start=0, step=1, limit=1
      $region113: #{gru_model.1} parent=111 // loop_pre_header
        _
      $region114: #{gru_model.1} parent=111 // loop_header
        %s266 = sphi 0, %s270
        %p267 = scmp.ge.s32.totalorder %s266, 1
        %s271 = sphi %s237, %s237
        %s272 = sphi %s238, %s238
      $region115: #{gru_model.1} parent=111 // loop_header_branch
        %269 = sbr.rel (%p267) target = $region119
      $region116: #{gru_model.1} parent=111 // loop_body
        %v273 = vld [vmem:[%s271] sm:$0xff]
        %274 = vst [vmem:[%s272] sm:$0xff] %v273
        %v275 = vld [vmem:[%s271 + $0x8] sm:$0xff]
        %276 = vst [vmem:[%s272 + $0x8] sm:$0xff] %v275
        %v277 = vld [vmem:[%s271 + $0x10] sm:$0xff]
        %278 = vst [vmem:[%s272 + $0x10] sm:$0xff] %v277
        %v279 = vld [vmem:[%s271 + $0x18] sm:$0xff]
        %280 = vst [vmem:[%s272 + $0x18] sm:$0xff] %v279
        %v281 = vld [vmem:[%s271 + $0x20] sm:$0xff]
        %282 = vst [vmem:[%s272 + $0x20] sm:$0xff] %v281
        %v283 = vld [vmem:[%s271 + $0x28] sm:$0xff]
        %284 = vst [vmem:[%s272 + $0x28] sm:$0xff] %v283
        %v285 = vld [vmem:[%s271 + $0x30] sm:$0xff]
        %286 = vst [vmem:[%s272 + $0x30] sm:$0xff] %v285
        %v287 = vld [vmem:[%s271 + $0x38] sm:$0xff]
        %288 = vst [vmem:[%s272 + $0x38] sm:$0xff] %v287
        %v289 = vld [vmem:[%s271 + $0x40] sm:$0xff]
        %290 = vst [vmem:[%s272 + $0x40] sm:$0xff] %v289
        %v291 = vld [vmem:[%s271 + $0x48] sm:$0xff]
        %292 = vst [vmem:[%s272 + $0x48] sm:$0xff] %v291
        %v293 = vld [vmem:[%s271 + $0x50] sm:$0xff]
        %294 = vst [vmem:[%s272 + $0x50] sm:$0xff] %v293
        %v295 = vld [vmem:[%s271 + $0x58] sm:$0xff]
        %296 = vst [vmem:[%s272 + $0x58] sm:$0xff] %v295
        %v297 = vld [vmem:[%s271 + $0x60] sm:$0xff]
        %298 = vst [vmem:[%s272 + $0x60] sm:$0xff] %v297
        %v299 = vld [vmem:[%s271 + $0x68] sm:$0xff]
        %300 = vst [vmem:[%s272 + $0x68] sm:$0xff] %v299
        %v301 = vld [vmem:[%s271 + $0x70] sm:$0xff]
        %302 = vst [vmem:[%s272 + $0x70] sm:$0xff] %v301
        %v303 = vld [vmem:[%s271 + $0x78] sm:$0xff]
        %304 = vst [vmem:[%s272 + $0x78] sm:$0xff] %v303
        %v305 = vld [vmem:[%s271 + $0x80] sm:$0xff]
        %306 = vst [vmem:[%s272 + $0x80] sm:$0xff] %v305
        %v307 = vld [vmem:[%s271 + $0x88] sm:$0xff]
        %308 = vst [vmem:[%s272 + $0x88] sm:$0xff] %v307
        %v309 = vld [vmem:[%s271 + $0x90] sm:$0xff]
        %310 = vst [vmem:[%s272 + $0x90] sm:$0xff] %v309
        %v311 = vld [vmem:[%s271 + $0x98] sm:$0xff]
        %312 = vst [vmem:[%s272 + $0x98] sm:$0xff] %v311
        %v313 = vld [vmem:[%s271 + $0xa0] sm:$0xff]
        %314 = vst [vmem:[%s272 + $0xa0] sm:$0xff] %v313
        %v315 = vld [vmem:[%s271 + $0xa8] sm:$0xff]
        %316 = vst [vmem:[%s272 + $0xa8] sm:$0xff] %v315
        %v317 = vld [vmem:[%s271 + $0xb0] sm:$0xff]
        %318 = vst [vmem:[%s272 + $0xb0] sm:$0xff] %v317
        %v319 = vld [vmem:[%s271 + $0xb8] sm:$0xff]
        %320 = vst [vmem:[%s272 + $0xb8] sm:$0xff] %v319
        %v321 = vld [vmem:[%s271 + $0xc0] sm:$0xff]
        %322 = vst [vmem:[%s272 + $0xc0] sm:$0xff] %v321
        %v323 = vld [vmem:[%s271 + $0xc8] sm:$0xff]
        %324 = vst [vmem:[%s272 + $0xc8] sm:$0xff] %v323
        %v325 = vld [vmem:[%s271 + $0xd0] sm:$0xff]
        %326 = vst [vmem:[%s272 + $0xd0] sm:$0xff] %v325
        %v327 = vld [vmem:[%s271 + $0xd8] sm:$0xff]
        %328 = vst [vmem:[%s272 + $0xd8] sm:$0xff] %v327
        %v329 = vld [vmem:[%s271 + $0xe0] sm:$0xff]
        %330 = vst [vmem:[%s272 + $0xe0] sm:$0xff] %v329
        %v331 = vld [vmem:[%s271 + $0xe8] sm:$0xff]
        %332 = vst [vmem:[%s272 + $0xe8] sm:$0xff] %v331
        %v333 = vld [vmem:[%s271 + $0xf0] sm:$0xff]
        %334 = vst [vmem:[%s272 + $0xf0] sm:$0xff] %v333
        %v335 = vld [vmem:[%s271 + $0xf8] sm:$0xff]
        %336 = vst [vmem:[%s272 + $0xf8] sm:$0xff] %v335
      $region117: #{gru_model.1} parent=111 // loop_footer
        %s270 = sadd.s32 1, %s266
      $region118: #{gru_model.1} parent=111 // loop_footer_branch
        %265 = sbr.rel target = $region114
      $region119: #{gru_model.1} parent=111 // loop_exit
        _
    $region112: #{gru_model.1} parent=96 // pred_fallthru
      _
    %p337 = pneg %p261
    // Predicated region
    $region120: #{gru_model.1} parent=96 // pred_check
      _
    $region121: #{gru_model.1} parent=96 // pred_check_branch
      %339 = sbr.rel (%p261) target = $region123
    $region122: #{gru_model.1} parent=96 // pred_region
      %s340 = sand.u32 256, 7
    $region123: #{gru_model.1} parent=96 // pred_fallthru
      _
  $region97: #{gru_model.1} parent=0 // pred_fallthru
    _
  // Predicated region
  $region98: #{gru_model.1} parent=0 // pred_check
    %p245 = pneg %p241
  $region99: #{gru_model.1} parent=0 // pred_check_branch
    %247 = sbr.rel (%p245) target = $region101
  $region100: #{gru_model.1} parent=0 // pred_region
    %s248 = sshll.u32 1, 256
    %s249 = ssub.s32 %s248, 1
    loop: start=0, step=1, limit=1
    $region102: #{gru_model.1} parent=100 // loop_pre_header
      _
    $region103: #{gru_model.1} parent=100 // loop_header
      %s251 = sphi 0, %s255
      %p252 = scmp.ge.s32.totalorder %s251, 1
      %s256 = sphi %s237, %s237
      %s257 = sphi %s238, %s238
    $region104: #{gru_model.1} parent=100 // loop_header_branch
      %254 = sbr.rel (%p252) target = $region108
    $region105: #{gru_model.1} parent=100 // loop_body
      %v258 = vld [vmem:[%s256] sm:%s249]
      %259 = vst [vmem:[%s257] sm:%s249] %v258
    $region106: #{gru_model.1} parent=100 // loop_footer
      %s255 = sadd.s32 1, %s251
    $region107: #{gru_model.1} parent=100 // loop_footer_branch
      %250 = sbr.rel target = $region103
    $region108: #{gru_model.1} parent=100 // loop_exit
      _
  $region101: #{gru_model.1} parent=0 // pred_fallthru
    _
  // Predicated region
  $region124: #{gru_model.1} parent=0 // pred_check
    _
  $region125: #{gru_model.1} parent=0 // pred_check_branch
    %343 = sbr.rel (0) target = $region127
  $region126: #{gru_model.1} parent=0 // pred_region
    %344 = vsyncadd %s239, 4096
  $region127: #{gru_model.1} parent=0 // pred_fallthru
    _
  %s345 = scalar_lea.vmem %s6, 768
  %s346 = scalar_lea.vmem [#allocation2], 768
  %s347 = scalar_lea.sflag [#allocation3], 3
  %p349 = scmp.lt.u32.totalorder 256, 8
  %p350 = pneg %p349
  // Predicated region
  $region128: #{gru_model.1} parent=0 // pred_check
    _
  $region129: #{gru_model.1} parent=0 // pred_check_branch
    %352 = sbr.rel (%p349) target = $region131
  $region130: #{gru_model.1} parent=0 // pred_region
    %s368 = sand.u32 256, 7
    %p369 = scmp.eq.s32.totalorder %s368, 0
    // Predicated region
    $region143: #{gru_model.1} parent=130 // pred_check
      %p370 = pneg %p369
    $region144: #{gru_model.1} parent=130 // pred_check_branch
      %372 = sbr.rel (%p370) target = $region146
    $region145: #{gru_model.1} parent=130 // pred_region
      loop: start=0, step=1, limit=1
      $region147: #{gru_model.1} parent=145 // loop_pre_header
        _
      $region148: #{gru_model.1} parent=145 // loop_header
        %s374 = sphi 0, %s378
        %p375 = scmp.ge.s32.totalorder %s374, 1
        %s379 = sphi %s345, %s345
        %s380 = sphi %s346, %s346
      $region149: #{gru_model.1} parent=145 // loop_header_branch
        %377 = sbr.rel (%p375) target = $region153
      $region150: #{gru_model.1} parent=145 // loop_body
        %v381 = vld [vmem:[%s379] sm:$0xff]
        %382 = vst [vmem:[%s380] sm:$0xff] %v381
        %v383 = vld [vmem:[%s379 + $0x8] sm:$0xff]
        %384 = vst [vmem:[%s380 + $0x8] sm:$0xff] %v383
        %v385 = vld [vmem:[%s379 + $0x10] sm:$0xff]
        %386 = vst [vmem:[%s380 + $0x10] sm:$0xff] %v385
        %v387 = vld [vmem:[%s379 + $0x18] sm:$0xff]
        %388 = vst [vmem:[%s380 + $0x18] sm:$0xff] %v387
        %v389 = vld [vmem:[%s379 + $0x20] sm:$0xff]
        %390 = vst [vmem:[%s380 + $0x20] sm:$0xff] %v389
        %v391 = vld [vmem:[%s379 + $0x28] sm:$0xff]
        %392 = vst [vmem:[%s380 + $0x28] sm:$0xff] %v391
        %v393 = vld [vmem:[%s379 + $0x30] sm:$0xff]
        %394 = vst [vmem:[%s380 + $0x30] sm:$0xff] %v393
        %v395 = vld [vmem:[%s379 + $0x38] sm:$0xff]
        %396 = vst [vmem:[%s380 + $0x38] sm:$0xff] %v395
        %v397 = vld [vmem:[%s379 + $0x40] sm:$0xff]
        %398 = vst [vmem:[%s380 + $0x40] sm:$0xff] %v397
        %v399 = vld [vmem:[%s379 + $0x48] sm:$0xff]
        %400 = vst [vmem:[%s380 + $0x48] sm:$0xff] %v399
        %v401 = vld [vmem:[%s379 + $0x50] sm:$0xff]
        %402 = vst [vmem:[%s380 + $0x50] sm:$0xff] %v401
        %v403 = vld [vmem:[%s379 + $0x58] sm:$0xff]
        %404 = vst [vmem:[%s380 + $0x58] sm:$0xff] %v403
        %v405 = vld [vmem:[%s379 + $0x60] sm:$0xff]
        %406 = vst [vmem:[%s380 + $0x60] sm:$0xff] %v405
        %v407 = vld [vmem:[%s379 + $0x68] sm:$0xff]
        %408 = vst [vmem:[%s380 + $0x68] sm:$0xff] %v407
        %v409 = vld [vmem:[%s379 + $0x70] sm:$0xff]
        %410 = vst [vmem:[%s380 + $0x70] sm:$0xff] %v409
        %v411 = vld [vmem:[%s379 + $0x78] sm:$0xff]
        %412 = vst [vmem:[%s380 + $0x78] sm:$0xff] %v411
        %v413 = vld [vmem:[%s379 + $0x80] sm:$0xff]
        %414 = vst [vmem:[%s380 + $0x80] sm:$0xff] %v413
        %v415 = vld [vmem:[%s379 + $0x88] sm:$0xff]
        %416 = vst [vmem:[%s380 + $0x88] sm:$0xff] %v415
        %v417 = vld [vmem:[%s379 + $0x90] sm:$0xff]
        %418 = vst [vmem:[%s380 + $0x90] sm:$0xff] %v417
        %v419 = vld [vmem:[%s379 + $0x98] sm:$0xff]
        %420 = vst [vmem:[%s380 + $0x98] sm:$0xff] %v419
        %v421 = vld [vmem:[%s379 + $0xa0] sm:$0xff]
        %422 = vst [vmem:[%s380 + $0xa0] sm:$0xff] %v421
        %v423 = vld [vmem:[%s379 + $0xa8] sm:$0xff]
        %424 = vst [vmem:[%s380 + $0xa8] sm:$0xff] %v423
        %v425 = vld [vmem:[%s379 + $0xb0] sm:$0xff]
        %426 = vst [vmem:[%s380 + $0xb0] sm:$0xff] %v425
        %v427 = vld [vmem:[%s379 + $0xb8] sm:$0xff]
        %428 = vst [vmem:[%s380 + $0xb8] sm:$0xff] %v427
        %v429 = vld [vmem:[%s379 + $0xc0] sm:$0xff]
        %430 = vst [vmem:[%s380 + $0xc0] sm:$0xff] %v429
        %v431 = vld [vmem:[%s379 + $0xc8] sm:$0xff]
        %432 = vst [vmem:[%s380 + $0xc8] sm:$0xff] %v431
        %v433 = vld [vmem:[%s379 + $0xd0] sm:$0xff]
        %434 = vst [vmem:[%s380 + $0xd0] sm:$0xff] %v433
        %v435 = vld [vmem:[%s379 + $0xd8] sm:$0xff]
        %436 = vst [vmem:[%s380 + $0xd8] sm:$0xff] %v435
        %v437 = vld [vmem:[%s379 + $0xe0] sm:$0xff]
        %438 = vst [vmem:[%s380 + $0xe0] sm:$0xff] %v437
        %v439 = vld [vmem:[%s379 + $0xe8] sm:$0xff]
        %440 = vst [vmem:[%s380 + $0xe8] sm:$0xff] %v439
        %v441 = vld [vmem:[%s379 + $0xf0] sm:$0xff]
        %442 = vst [vmem:[%s380 + $0xf0] sm:$0xff] %v441
        %v443 = vld [vmem:[%s379 + $0xf8] sm:$0xff]
        %444 = vst [vmem:[%s380 + $0xf8] sm:$0xff] %v443
      $region151: #{gru_model.1} parent=145 // loop_footer
        %s378 = sadd.s32 1, %s374
      $region152: #{gru_model.1} parent=145 // loop_footer_branch
        %373 = sbr.rel target = $region148
      $region153: #{gru_model.1} parent=145 // loop_exit
        _
    $region146: #{gru_model.1} parent=130 // pred_fallthru
      _
    %p445 = pneg %p369
    // Predicated region
    $region154: #{gru_model.1} parent=130 // pred_check
      _
    $region155: #{gru_model.1} parent=130 // pred_check_branch
      %447 = sbr.rel (%p369) target = $region157
    $region156: #{gru_model.1} parent=130 // pred_region
      %s448 = sand.u32 256, 7
    $region157: #{gru_model.1} parent=130 // pred_fallthru
      _
  $region131: #{gru_model.1} parent=0 // pred_fallthru
    _
  // Predicated region
  $region132: #{gru_model.1} parent=0 // pred_check
    %p353 = pneg %p349
  $region133: #{gru_model.1} parent=0 // pred_check_branch
    %355 = sbr.rel (%p353) target = $region135
  $region134: #{gru_model.1} parent=0 // pred_region
    %s356 = sshll.u32 1, 256
    %s357 = ssub.s32 %s356, 1
    loop: start=0, step=1, limit=1
    $region136: #{gru_model.1} parent=134 // loop_pre_header
      _
    $region137: #{gru_model.1} parent=134 // loop_header
      %s359 = sphi 0, %s363
      %p360 = scmp.ge.s32.totalorder %s359, 1
      %s364 = sphi %s345, %s345
      %s365 = sphi %s346, %s346
    $region138: #{gru_model.1} parent=134 // loop_header_branch
      %362 = sbr.rel (%p360) target = $region142
    $region139: #{gru_model.1} parent=134 // loop_body
      %v366 = vld [vmem:[%s364] sm:%s357]
      %367 = vst [vmem:[%s365] sm:%s357] %v366
    $region140: #{gru_model.1} parent=134 // loop_footer
      %s363 = sadd.s32 1, %s359
    $region141: #{gru_model.1} parent=134 // loop_footer_branch
      %358 = sbr.rel target = $region137
    $region142: #{gru_model.1} parent=134 // loop_exit
      _
  $region135: #{gru_model.1} parent=0 // pred_fallthru
    _
  // Predicated region
  $region158: #{gru_model.1} parent=0 // pred_check
    _
  $region159: #{gru_model.1} parent=0 // pred_check_branch
    %451 = sbr.rel (0) target = $region161
  $region160: #{gru_model.1} parent=0 // pred_region
    %452 = vsyncadd %s347, 4096
  $region161: #{gru_model.1} parent=0 // pred_fallthru
    _
  %v453 = vlaneseq
  %v454 = vand.u32 %v453, 127
  %vm455 = vcmp.lt.s32.totalorder %v454, 64
  %v456 = vsel %vm455, 1.0, 0.0
  %v457 = vld [vmem:[%s0] sm:$0xff]
  %s458 = scalar_lea.vmem %s0, 8
  %v459 = vld [vmem:[%s458] sm:$0xff]
  %s460 = scalar_lea.vmem %s0, 16
  %v461 = vld [vmem:[%s460] sm:$0xff]
  %s462 = scalar_lea.vmem %s0, 24
  %v463 = vld [vmem:[%s462] sm:$0xff]
  %s464 = scalar_lea.vmem %s0, 32
  %v465 = vld [vmem:[%s464] sm:$0xff]
  %s466 = scalar_lea.vmem %s0, 40
  %v467 = vld [vmem:[%s466] sm:$0xff]
  %s468 = scalar_lea.vmem %s0, 48
  %v469 = vld [vmem:[%s468] sm:$0xff]
  %s470 = smul.u32 8, 16
  %s471 = smul.u32 %s470, 2
  %s472 = sshll.u32 %s471, 4
  %473 = dma.done [#allocation3], %s472
  %v474 = vld [vmem:[#allocation2] sm:$0xff]
  %v475 = vld [vmem:[#allocation2 + $0x8] sm:$0xff]
  %v476 = vld [vmem:[#allocation2 + $0x10] sm:$0xff]
  %v477 = vld [vmem:[#allocation2 + $0x18] sm:$0xff]
  %v478 = vld [vmem:[#allocation2 + $0x20] sm:$0xff]
  %v479 = vld [vmem:[#allocation2 + $0x28] sm:$0xff]
  %v480 = vld [vmem:[#allocation2 + $0x30] sm:$0xff]
  %v481 = vld [vmem:[#allocation2 + $0x38] sm:$0xff]
  %v482 = vld [vmem:[#allocation2 + $0x40] sm:$0xff]
  %v483 = vld [vmem:[#allocation2 + $0x48] sm:$0xff]
  %v484 = vld [vmem:[#allocation2 + $0x50] sm:$0xff]
  %v485 = vld [vmem:[#allocation2 + $0x58] sm:$0xff]
  %v486 = vld [vmem:[#allocation2 + $0x60] sm:$0xff]
  %v487 = vld [vmem:[#allocation2 + $0x68] sm:$0xff]
  %v488 = vld [vmem:[#allocation2 + $0x70] sm:$0xff]
  %v489 = vld [vmem:[#allocation2 + $0x78] sm:$0xff]
  %v490 = vld [vmem:[#allocation2 + $0x80] sm:$0xff]
  %v491 = vld [vmem:[#allocation2 + $0x88] sm:$0xff]
  %v492 = vld [vmem:[#allocation2 + $0x90] sm:$0xff]
  %v493 = vld [vmem:[#allocation2 + $0x98] sm:$0xff]
  %v494 = vld [vmem:[#allocation2 + $0xa0] sm:$0xff]
  %v495 = vld [vmem:[#allocation2 + $0xa8] sm:$0xff]
  %v496 = vld [vmem:[#allocation2 + $0xb0] sm:$0xff]
  %v497 = vld [vmem:[#allocation2 + $0xb8] sm:$0xff]
  %v498 = vld [vmem:[#allocation2 + $0xc0] sm:$0xff]
  %v499 = vld [vmem:[#allocation2 + $0xc8] sm:$0xff]
  %v500 = vld [vmem:[#allocation2 + $0xd0] sm:$0xff]
  %v501 = vld [vmem:[#allocation2 + $0xd8] sm:$0xff]
  %v502 = vld [vmem:[#allocation2 + $0xe0] sm:$0xff]
  %v503 = vld [vmem:[#allocation2 + $0xe8] sm:$0xff]
  %v504 = vld [vmem:[#allocation2 + $0xf0] sm:$0xff]
  %v505 = vld [vmem:[#allocation2 + $0xf8] sm:$0xff]
  %v506 = vld [vmem:[%s1] sm:$0x3]
  %v508 = vlaneseq
  %v509 = vshrl.u32 %v508, 7
  %v510 = vsub.s32 0, %v509
  %v511 = vrot.slane %v506, %v510
  %v512 = vlaneseq
  %v513 = vshrl.u32 %v512, 7
  %v514 = vsub.s32 1, %v513
  %v515 = vrot.slane %v506, %v514
  %v518 = vadd.f32 %v457, 0.0
  %519 = vmatprep.subr.mxu0 %v505
  %520 = vmatpush1.msra.mxu0 %v504
  %521 = vmatprep.subr.mxu0 %v503
  %522 = vmatpush1.msra.mxu0 %v502
  %523 = vmatprep.subr.mxu0 %v501
  %524 = vmatpush1.msra.mxu0 %v500
  %525 = vmatprep.subr.mxu0 %v499
  %526 = vmatpush1.msra.mxu0 %v498
  %527 = vmatprep.subr.mxu0 %v497
  %528 = vmatpush1.msra.mxu0 %v496
  %529 = vmatprep.subr.mxu0 %v495
  %530 = vmatpush1.msra.mxu0 %v494
  %531 = vmatprep.subr.mxu0 %v493
  %532 = vmatpush1.msra.mxu0 %v492
  %533 = vmatprep.subr.mxu0 %v491
  %534 = vmatpush1.msra.mxu0 %v490
  %535 = vmatprep.subr.mxu0 %v489
  %536 = vmatpush1.msra.mxu0 %v488
  %537 = vmatprep.subr.mxu0 %v487
  %538 = vmatpush1.msra.mxu0 %v486
  %539 = vmatprep.subr.mxu0 %v485
  %540 = vmatpush1.msra.mxu0 %v484
  %541 = vmatprep.subr.mxu0 %v483
  %542 = vmatpush1.msra.mxu0 %v482
  %543 = vmatprep.subr.mxu0 %v481
  %544 = vmatpush1.msra.mxu0 %v480
  %545 = vmatprep.subr.mxu0 %v479
  %546 = vmatpush1.msra.mxu0 %v478
  %547 = vmatprep.subr.mxu0 %v477
  %548 = vmatpush1.msra.mxu0 %v476
  %549 = vmatprep.subr.mxu0 %v475
  %550 = vmatpush1.msra.mxu0 %v474
  %551 = vmatprep.subr.mxu0 0.0
  %552 = vmatpush2.msra.mxu0 0.0
  %553 = vmatprep.subr.mxu0 0.0
  %554 = vmatpush2.msra.mxu0 0.0
  %555 = vmatprep.subr.mxu0 0.0
  %556 = vmatpush2.msra.mxu0 0.0
  %557 = vmatprep.subr.mxu0 0.0
  %558 = vmatpush2.msra.mxu0 0.0
  %559 = vmatprep.subr.mxu0 0.0
  %560 = vmatpush2.msra.mxu0 0.0
  %561 = vmatprep.subr.mxu0 0.0
  %562 = vmatpush2.msra.mxu0 0.0
  %563 = vmatprep.subr.mxu0 0.0
  %564 = vmatpush2.msra.mxu0 0.0
  %565 = vmatprep.subr.mxu0 0.0
  %566 = vmatpush2.msra.mxu0 0.0
  %567 = vmatprep.subr.mxu0 0.0
  %568 = vmatpush2.msra.mxu0 0.0
  %569 = vmatprep.subr.mxu0 0.0
  %570 = vmatpush2.msra.mxu0 0.0
  %571 = vmatprep.subr.mxu0 0.0
  %572 = vmatpush2.msra.mxu0 0.0
  %573 = vmatprep.subr.mxu0 0.0
  %574 = vmatpush2.msra.mxu0 0.0
  %575 = vmatprep.subr.mxu0 0.0
  %576 = vmatpush2.msra.mxu0 0.0
  %577 = vmatprep.subr.mxu0 0.0
  %578 = vmatpush2.msra.mxu0 0.0
  %579 = vmatprep.subr.mxu0 0.0
  %580 = vmatpush2.msra.mxu0 0.0
  %581 = vmatprep.subr.mxu0 0.0
  %582 = vmatpush2.msra.mxu0 0.0
  %583 = vmatprep.mubr.f32.mxu0 0.0
  %584 = vmatmul.mubr.f32.gmra.mxu0 %v518
  %v585 = vpop.f32.mrf.mxu0
  %v586 = vadd.f32 %v511, %v585
  %v587 = vpop.f32.mrf.mxu0
  %v588 = vadd.f32 %v515, %v587
  %589 = vdwg.mxu0
  %v590 = vxor.u32 %v586, 2147483648
  %v591 = vmul.f32 %v590, 1.442695
  %v592 = vpow.pop %v591
  %v593 = vadd.f32 %v592, 1.0
  %v594 = vrcp.pop %v593
  %v595 = vmul.f32 1.0, %v594
  %596 = vrot.lane.b32.xlu0 %v588, 64
  %v597 = vpop.permute.xlu0 %596
  %v598 = vmul.f32 %v595, %v588
  %v599 = vadd.f32 %v598, %v597
  %v600 = vtanh.pop %v599
  %601 = vrot.lane.b32.xlu0 %v595, 64
  %v602 = vpop.permute.xlu0 %601
  %v603 = vsub.f32 1.0, %v602
  %v604 = vmul.f32 %v456, %v603
  %v605 = vmul.f32 %v604, %v600
  %v606 = vmul.f32 %v602, 0.0
  %v607 = vadd.f32 %v605, %v606
  %608 = vrot.lane.b32.xlu0 %v607, 64
  %v609 = vpop.permute.xlu0 %608
  %v610 = vadd.f32 %v607, %v459
  %611 = vmatprep.subr.mxu0 %v505
  %612 = vmatpush1.msra.mxu0 %v504
  %613 = vmatprep.subr.mxu0 %v503
  %614 = vmatpush1.msra.mxu0 %v502
  %615 = vmatprep.subr.mxu0 %v501
  %616 = vmatpush1.msra.mxu0 %v500
  %617 = vmatprep.subr.mxu0 %v499
  %618 = vmatpush1.msra.mxu0 %v498
  %619 = vmatprep.subr.mxu0 %v497
  %620 = vmatpush1.msra.mxu0 %v496
  %621 = vmatprep.subr.mxu0 %v495
  %622 = vmatpush1.msra.mxu0 %v494
  %623 = vmatprep.subr.mxu0 %v493
  %624 = vmatpush1.msra.mxu0 %v492
  %625 = vmatprep.subr.mxu0 %v491
  %626 = vmatpush1.msra.mxu0 %v490
  %627 = vmatprep.subr.mxu0 %v489
  %628 = vmatpush1.msra.mxu0 %v488
  %629 = vmatprep.subr.mxu0 %v487
  %630 = vmatpush1.msra.mxu0 %v486
  %631 = vmatprep.subr.mxu0 %v485
  %632 = vmatpush1.msra.mxu0 %v484
  %633 = vmatprep.subr.mxu0 %v483
  %634 = vmatpush1.msra.mxu0 %v482
  %635 = vmatprep.subr.mxu0 %v481
  %636 = vmatpush1.msra.mxu0 %v480
  %637 = vmatprep.subr.mxu0 %v479
  %638 = vmatpush1.msra.mxu0 %v478
  %639 = vmatprep.subr.mxu0 %v477
  %640 = vmatpush1.msra.mxu0 %v476
  %641 = vmatprep.subr.mxu0 %v475
  %642 = vmatpush1.msra.mxu0 %v474
  %643 = vmatprep.subr.mxu0 0.0
  %644 = vmatpush2.msra.mxu0 0.0
  %645 = vmatprep.subr.mxu0 0.0
  %646 = vmatpush2.msra.mxu0 0.0
  %647 = vmatprep.subr.mxu0 0.0
  %648 = vmatpush2.msra.mxu0 0.0
  %649 = vmatprep.subr.mxu0 0.0
  %650 = vmatpush2.msra.mxu0 0.0
  %651 = vmatprep.subr.mxu0 0.0
  %652 = vmatpush2.msra.mxu0 0.0
  %653 = vmatprep.subr.mxu0 0.0
  %654 = vmatpush2.msra.mxu0 0.0
  %655 = vmatprep.subr.mxu0 0.0
  %656 = vmatpush2.msra.mxu0 0.0
  %657 = vmatprep.subr.mxu0 0.0
  %658 = vmatpush2.msra.mxu0 0.0
  %659 = vmatprep.subr.mxu0 0.0
  %660 = vmatpush2.msra.mxu0 0.0
  %661 = vmatprep.subr.mxu0 0.0
  %662 = vmatpush2.msra.mxu0 0.0
  %663 = vmatprep.subr.mxu0 0.0
  %664 = vmatpush2.msra.mxu0 0.0
  %665 = vmatprep.subr.mxu0 0.0
  %666 = vmatpush2.msra.mxu0 0.0
  %667 = vmatprep.subr.mxu0 0.0
  %668 = vmatpush2.msra.mxu0 0.0
  %669 = vmatprep.subr.mxu0 0.0
  %670 = vmatpush2.msra.mxu0 0.0
  %671 = vmatprep.subr.mxu0 0.0
  %672 = vmatpush2.msra.mxu0 0.0
  %673 = vmatprep.subr.mxu0 0.0
  %674 = vmatpush2.msra.mxu0 0.0
  %675 = vmatprep.mubr.f32.mxu0 0.0
  %676 = vmatmul.mubr.f32.gmra.mxu0 %v610
  %v677 = vpop.f32.mrf.mxu0
  %v678 = vadd.f32 %v511, %v677
  %v679 = vpop.f32.mrf.mxu0
  %v680 = vadd.f32 %v515, %v679
  %681 = vdwg.mxu0
  %v682 = vxor.u32 %v678, 2147483648
  %v683 = vmul.f32 %v682, 1.442695
  %v684 = vpow.pop %v683
  %v685 = vadd.f32 %v684, 1.0
  %v686 = vrcp.pop %v685
  %v687 = vmul.f32 1.0, %v686
  %688 = vrot.lane.b32.xlu0 %v680, 64
  %v689 = vpop.permute.xlu0 %688
  %v690 = vmul.f32 %v687, %v680
  %v691 = vadd.f32 %v690, %v689
  %v692 = vtanh.pop %v691
  %693 = vrot.lane.b32.xlu0 %v687, 64
  %v694 = vpop.permute.xlu0 %693
  %v695 = vsub.f32 1.0, %v694
  %v696 = vmul.f32 %v456, %v695
  %v697 = vmul.f32 %v696, %v692
  %v698 = vmul.f32 %v694, %v607
  %v699 = vadd.f32 %v697, %v698
  %700 = vrot.lane.b32.xlu0 %v699, 64
  %v701 = vpop.permute.xlu0 %700
  %v702 = vadd.f32 %v699, %v461
  %703 = vmatprep.subr.mxu0 %v505
  %704 = vmatpush1.msra.mxu0 %v504
  %705 = vmatprep.subr.mxu0 %v503
  %706 = vmatpush1.msra.mxu0 %v502
  %707 = vmatprep.subr.mxu0 %v501
  %708 = vmatpush1.msra.mxu0 %v500
  %709 = vmatprep.subr.mxu0 %v499
  %710 = vmatpush1.msra.mxu0 %v498
  %711 = vmatprep.subr.mxu0 %v497
  %712 = vmatpush1.msra.mxu0 %v496
  %713 = vmatprep.subr.mxu0 %v495
  %714 = vmatpush1.msra.mxu0 %v494
  %715 = vmatprep.subr.mxu0 %v493
  %716 = vmatpush1.msra.mxu0 %v492
  %717 = vmatprep.subr.mxu0 %v491
  %718 = vmatpush1.msra.mxu0 %v490
  %719 = vmatprep.subr.mxu0 %v489
  %720 = vmatpush1.msra.mxu0 %v488
  %721 = vmatprep.subr.mxu0 %v487
  %722 = vmatpush1.msra.mxu0 %v486
  %723 = vmatprep.subr.mxu0 %v485
  %724 = vmatpush1.msra.mxu0 %v484
  %725 = vmatprep.subr.mxu0 %v483
  %726 = vmatpush1.msra.mxu0 %v482
  %727 = vmatprep.subr.mxu0 %v481
  %728 = vmatpush1.msra.mxu0 %v480
  %729 = vmatprep.subr.mxu0 %v479
  %730 = vmatpush1.msra.mxu0 %v478
  %731 = vmatprep.subr.mxu0 %v477
  %732 = vmatpush1.msra.mxu0 %v476
  %733 = vmatprep.subr.mxu0 %v475
  %734 = vmatpush1.msra.mxu0 %v474
  %735 = vmatprep.subr.mxu0 0.0
  %736 = vmatpush2.msra.mxu0 0.0
  %737 = vmatprep.subr.mxu0 0.0
  %738 = vmatpush2.msra.mxu0 0.0
  %739 = vmatprep.subr.mxu0 0.0
  %740 = vmatpush2.msra.mxu0 0.0
  %741 = vmatprep.subr.mxu0 0.0
  %742 = vmatpush2.msra.mxu0 0.0
  %743 = vmatprep.subr.mxu0 0.0
  %744 = vmatpush2.msra.mxu0 0.0
  %745 = vmatprep.subr.mxu0 0.0
  %746 = vmatpush2.msra.mxu0 0.0
  %747 = vmatprep.subr.mxu0 0.0
  %748 = vmatpush2.msra.mxu0 0.0
  %749 = vmatprep.subr.mxu0 0.0
  %750 = vmatpush2.msra.mxu0 0.0
  %751 = vmatprep.subr.mxu0 0.0
  %752 = vmatpush2.msra.mxu0 0.0
  %753 = vmatprep.subr.mxu0 0.0
  %754 = vmatpush2.msra.mxu0 0.0
  %755 = vmatprep.subr.mxu0 0.0
  %756 = vmatpush2.msra.mxu0 0.0
  %757 = vmatprep.subr.mxu0 0.0
  %758 = vmatpush2.msra.mxu0 0.0
  %759 = vmatprep.subr.mxu0 0.0
  %760 = vmatpush2.msra.mxu0 0.0
  %761 = vmatprep.subr.mxu0 0.0
  %762 = vmatpush2.msra.mxu0 0.0
  %763 = vmatprep.subr.mxu0 0.0
  %764 = vmatpush2.msra.mxu0 0.0
  %765 = vmatprep.subr.mxu0 0.0
  %766 = vmatpush2.msra.mxu0 0.0
  %767 = vmatprep.mubr.f32.mxu0 0.0
  %768 = vmatmul.mubr.f32.gmra.mxu0 %v702
  %v769 = vpop.f32.mrf.mxu0
  %v770 = vadd.f32 %v511, %v769
  %v771 = vpop.f32.mrf.mxu0
  %v772 = vadd.f32 %v515, %v771
  %773 = vdwg.mxu0
  %v774 = vxor.u32 %v770, 2147483648
  %v775 = vmul.f32 %v774, 1.442695
  %v776 = vpow.pop %v775
  %v777 = vadd.f32 %v776, 1.0
  %v778 = vrcp.pop %v777
  %v779 = vmul.f32 1.0, %v778
  %780 = vrot.lane.b32.xlu0 %v772, 64
  %v781 = vpop.permute.xlu0 %780
  %v782 = vmul.f32 %v779, %v772
  %v783 = vadd.f32 %v782, %v781
  %v784 = vtanh.pop %v783
  %785 = vrot.lane.b32.xlu0 %v779, 64
  %v786 = vpop.permute.xlu0 %785
  %v787 = vsub.f32 1.0, %v786
  %v788 = vmul.f32 %v456, %v787
  %v789 = vmul.f32 %v788, %v784
  %v790 = vmul.f32 %v786, %v699
  %v791 = vadd.f32 %v789, %v790
  %792 = vrot.lane.b32.xlu0 %v791, 64
  %v793 = vpop.permute.xlu0 %792
  %v794 = vadd.f32 %v791, %v463
  %795 = vmatprep.subr.mxu0 %v505
  %796 = vmatpush1.msra.mxu0 %v504
  %797 = vmatprep.subr.mxu0 %v503
  %798 = vmatpush1.msra.mxu0 %v502
  %799 = vmatprep.subr.mxu0 %v501
  %800 = vmatpush1.msra.mxu0 %v500
  %801 = vmatprep.subr.mxu0 %v499
  %802 = vmatpush1.msra.mxu0 %v498
  %803 = vmatprep.subr.mxu0 %v497
  %804 = vmatpush1.msra.mxu0 %v496
  %805 = vmatprep.subr.mxu0 %v495
  %806 = vmatpush1.msra.mxu0 %v494
  %807 = vmatprep.subr.mxu0 %v493
  %808 = vmatpush1.msra.mxu0 %v492
  %809 = vmatprep.subr.mxu0 %v491
  %810 = vmatpush1.msra.mxu0 %v490
  %811 = vmatprep.subr.mxu0 %v489
  %812 = vmatpush1.msra.mxu0 %v488
  %813 = vmatprep.subr.mxu0 %v487
  %814 = vmatpush1.msra.mxu0 %v486
  %815 = vmatprep.subr.mxu0 %v485
  %816 = vmatpush1.msra.mxu0 %v484
  %817 = vmatprep.subr.mxu0 %v483
  %818 = vmatpush1.msra.mxu0 %v482
  %819 = vmatprep.subr.mxu0 %v481
  %820 = vmatpush1.msra.mxu0 %v480
  %821 = vmatprep.subr.mxu0 %v479
  %822 = vmatpush1.msra.mxu0 %v478
  %823 = vmatprep.subr.mxu0 %v477
  %824 = vmatpush1.msra.mxu0 %v476
  %825 = vmatprep.subr.mxu0 %v475
  %826 = vmatpush1.msra.mxu0 %v474
  %827 = vmatprep.subr.mxu0 0.0
  %828 = vmatpush2.msra.mxu0 0.0
  %829 = vmatprep.subr.mxu0 0.0
  %830 = vmatpush2.msra.mxu0 0.0
  %831 = vmatprep.subr.mxu0 0.0
  %832 = vmatpush2.msra.mxu0 0.0
  %833 = vmatprep.subr.mxu0 0.0
  %834 = vmatpush2.msra.mxu0 0.0
  %835 = vmatprep.subr.mxu0 0.0
  %836 = vmatpush2.msra.mxu0 0.0
  %837 = vmatprep.subr.mxu0 0.0
  %838 = vmatpush2.msra.mxu0 0.0
  %839 = vmatprep.subr.mxu0 0.0
  %840 = vmatpush2.msra.mxu0 0.0
  %841 = vmatprep.subr.mxu0 0.0
  %842 = vmatpush2.msra.mxu0 0.0
  %843 = vmatprep.subr.mxu0 0.0
  %844 = vmatpush2.msra.mxu0 0.0
  %845 = vmatprep.subr.mxu0 0.0
  %846 = vmatpush2.msra.mxu0 0.0
  %847 = vmatprep.subr.mxu0 0.0
  %848 = vmatpush2.msra.mxu0 0.0
  %849 = vmatprep.subr.mxu0 0.0
  %850 = vmatpush2.msra.mxu0 0.0
  %851 = vmatprep.subr.mxu0 0.0
  %852 = vmatpush2.msra.mxu0 0.0
  %853 = vmatprep.subr.mxu0 0.0
  %854 = vmatpush2.msra.mxu0 0.0
  %855 = vmatprep.subr.mxu0 0.0
  %856 = vmatpush2.msra.mxu0 0.0
  %857 = vmatprep.subr.mxu0 0.0
  %858 = vmatpush2.msra.mxu0 0.0
  %859 = vmatprep.mubr.f32.mxu0 0.0
  %860 = vmatmul.mubr.f32.gmra.mxu0 %v794
  %v861 = vpop.f32.mrf.mxu0
  %v862 = vadd.f32 %v511, %v861
  %v863 = vpop.f32.mrf.mxu0
  %v864 = vadd.f32 %v515, %v863
  %865 = vdwg.mxu0
  %v866 = vxor.u32 %v862, 2147483648
  %v867 = vmul.f32 %v866, 1.442695
  %v868 = vpow.pop %v867
  %v869 = vadd.f32 %v868, 1.0
  %v870 = vrcp.pop %v869
  %v871 = vmul.f32 1.0, %v870
  %872 = vrot.lane.b32.xlu0 %v864, 64
  %v873 = vpop.permute.xlu0 %872
  %v874 = vmul.f32 %v871, %v864
  %v875 = vadd.f32 %v874, %v873
  %v876 = vtanh.pop %v875
  %877 = vrot.lane.b32.xlu0 %v871, 64
  %v878 = vpop.permute.xlu0 %877
  %v879 = vsub.f32 1.0, %v878
  %v880 = vmul.f32 %v456, %v879
  %v881 = vmul.f32 %v880, %v876
  %v882 = vmul.f32 %v878, %v791
  %v883 = vadd.f32 %v881, %v882
  %884 = vrot.lane.b32.xlu0 %v883, 64
  %v885 = vpop.permute.xlu0 %884
  %v886 = vadd.f32 %v883, %v465
  %887 = vmatprep.subr.mxu0 %v505
  %888 = vmatpush1.msra.mxu0 %v504
  %889 = vmatprep.subr.mxu0 %v503
  %890 = vmatpush1.msra.mxu0 %v502
  %891 = vmatprep.subr.mxu0 %v501
  %892 = vmatpush1.msra.mxu0 %v500
  %893 = vmatprep.subr.mxu0 %v499
  %894 = vmatpush1.msra.mxu0 %v498
  %895 = vmatprep.subr.mxu0 %v497
  %896 = vmatpush1.msra.mxu0 %v496
  %897 = vmatprep.subr.mxu0 %v495
  %898 = vmatpush1.msra.mxu0 %v494
  %899 = vmatprep.subr.mxu0 %v493
  %900 = vmatpush1.msra.mxu0 %v492
  %901 = vmatprep.subr.mxu0 %v491
  %902 = vmatpush1.msra.mxu0 %v490
  %903 = vmatprep.subr.mxu0 %v489
  %904 = vmatpush1.msra.mxu0 %v488
  %905 = vmatprep.subr.mxu0 %v487
  %906 = vmatpush1.msra.mxu0 %v486
  %907 = vmatprep.subr.mxu0 %v485
  %908 = vmatpush1.msra.mxu0 %v484
  %909 = vmatprep.subr.mxu0 %v483
  %910 = vmatpush1.msra.mxu0 %v482
  %911 = vmatprep.subr.mxu0 %v481
  %912 = vmatpush1.msra.mxu0 %v480
  %913 = vmatprep.subr.mxu0 %v479
  %914 = vmatpush1.msra.mxu0 %v478
  %915 = vmatprep.subr.mxu0 %v477
  %916 = vmatpush1.msra.mxu0 %v476
  %917 = vmatprep.subr.mxu0 %v475
  %918 = vmatpush1.msra.mxu0 %v474
  %919 = vmatprep.subr.mxu0 0.0
  %920 = vmatpush2.msra.mxu0 0.0
  %921 = vmatprep.subr.mxu0 0.0
  %922 = vmatpush2.msra.mxu0 0.0
  %923 = vmatprep.subr.mxu0 0.0
  %924 = vmatpush2.msra.mxu0 0.0
  %925 = vmatprep.subr.mxu0 0.0
  %926 = vmatpush2.msra.mxu0 0.0
  %927 = vmatprep.subr.mxu0 0.0
  %928 = vmatpush2.msra.mxu0 0.0
  %929 = vmatprep.subr.mxu0 0.0
  %930 = vmatpush2.msra.mxu0 0.0
  %931 = vmatprep.subr.mxu0 0.0
  %932 = vmatpush2.msra.mxu0 0.0
  %933 = vmatprep.subr.mxu0 0.0
  %934 = vmatpush2.msra.mxu0 0.0
  %935 = vmatprep.subr.mxu0 0.0
  %936 = vmatpush2.msra.mxu0 0.0
  %937 = vmatprep.subr.mxu0 0.0
  %938 = vmatpush2.msra.mxu0 0.0
  %939 = vmatprep.subr.mxu0 0.0
  %940 = vmatpush2.msra.mxu0 0.0
  %941 = vmatprep.subr.mxu0 0.0
  %942 = vmatpush2.msra.mxu0 0.0
  %943 = vmatprep.subr.mxu0 0.0
  %944 = vmatpush2.msra.mxu0 0.0
  %945 = vmatprep.subr.mxu0 0.0
  %946 = vmatpush2.msra.mxu0 0.0
  %947 = vmatprep.subr.mxu0 0.0
  %948 = vmatpush2.msra.mxu0 0.0
  %949 = vmatprep.subr.mxu0 0.0
  %950 = vmatpush2.msra.mxu0 0.0
  %951 = vmatprep.mubr.f32.mxu0 0.0
  %952 = vmatmul.mubr.f32.gmra.mxu0 %v886
  %v953 = vpop.f32.mrf.mxu0
  %v954 = vadd.f32 %v511, %v953
  %v955 = vpop.f32.mrf.mxu0
  %v956 = vadd.f32 %v515, %v955
  %957 = vdwg.mxu0
  %v958 = vxor.u32 %v954, 2147483648
  %v959 = vmul.f32 %v958, 1.442695
  %v960 = vpow.pop %v959
  %v961 = vadd.f32 %v960, 1.0
  %v962 = vrcp.pop %v961
  %v963 = vmul.f32 1.0, %v962
  %964 = vrot.lane.b32.xlu0 %v956, 64
  %v965 = vpop.permute.xlu0 %964
  %v966 = vmul.f32 %v963, %v956
  %v967 = vadd.f32 %v966, %v965
  %v968 = vtanh.pop %v967
  %969 = vrot.lane.b32.xlu0 %v963, 64
  %v970 = vpop.permute.xlu0 %969
  %v971 = vsub.f32 1.0, %v970
  %v972 = vmul.f32 %v456, %v971
  %v973 = vmul.f32 %v972, %v968
  %v974 = vmul.f32 %v970, %v883
  %v975 = vadd.f32 %v973, %v974
  %976 = vrot.lane.b32.xlu0 %v975, 64
  %v977 = vpop.permute.xlu0 %976
  %v978 = vadd.f32 %v975, %v467
  %979 = vmatprep.subr.mxu0 %v505
  %980 = vmatpush1.msra.mxu0 %v504
  %981 = vmatprep.subr.mxu0 %v503
  %982 = vmatpush1.msra.mxu0 %v502
  %983 = vmatprep.subr.mxu0 %v501
  %984 = vmatpush1.msra.mxu0 %v500
  %985 = vmatprep.subr.mxu0 %v499
  %986 = vmatpush1.msra.mxu0 %v498
  %987 = vmatprep.subr.mxu0 %v497
  %988 = vmatpush1.msra.mxu0 %v496
  %989 = vmatprep.subr.mxu0 %v495
  %990 = vmatpush1.msra.mxu0 %v494
  %991 = vmatprep.subr.mxu0 %v493
  %992 = vmatpush1.msra.mxu0 %v492
  %993 = vmatprep.subr.mxu0 %v491
  %994 = vmatpush1.msra.mxu0 %v490
  %995 = vmatprep.subr.mxu0 %v489
  %996 = vmatpush1.msra.mxu0 %v488
  %997 = vmatprep.subr.mxu0 %v487
  %998 = vmatpush1.msra.mxu0 %v486
  %999 = vmatprep.subr.mxu0 %v485
  %1000 = vmatpush1.msra.mxu0 %v484
  %1001 = vmatprep.subr.mxu0 %v483
  %1002 = vmatpush1.msra.mxu0 %v482
  %1003 = vmatprep.subr.mxu0 %v481
  %1004 = vmatpush1.msra.mxu0 %v480
  %1005 = vmatprep.subr.mxu0 %v479
  %1006 = vmatpush1.msra.mxu0 %v478
  %1007 = vmatprep.subr.mxu0 %v477
  %1008 = vmatpush1.msra.mxu0 %v476
  %1009 = vmatprep.subr.mxu0 %v475
  %1010 = vmatpush1.msra.mxu0 %v474
  %1011 = vmatprep.subr.mxu0 0.0
  %1012 = vmatpush2.msra.mxu0 0.0
  %1013 = vmatprep.subr.mxu0 0.0
  %1014 = vmatpush2.msra.mxu0 0.0
  %1015 = vmatprep.subr.mxu0 0.0
  %1016 = vmatpush2.msra.mxu0 0.0
  %1017 = vmatprep.subr.mxu0 0.0
  %1018 = vmatpush2.msra.mxu0 0.0
  %1019 = vmatprep.subr.mxu0 0.0
  %1020 = vmatpush2.msra.mxu0 0.0
  %1021 = vmatprep.subr.mxu0 0.0
  %1022 = vmatpush2.msra.mxu0 0.0
  %1023 = vmatprep.subr.mxu0 0.0
  %1024 = vmatpush2.msra.mxu0 0.0
  %1025 = vmatprep.subr.mxu0 0.0
  %1026 = vmatpush2.msra.mxu0 0.0
  %1027 = vmatprep.subr.mxu0 0.0
  %1028 = vmatpush2.msra.mxu0 0.0
  %1029 = vmatprep.subr.mxu0 0.0
  %1030 = vmatpush2.msra.mxu0 0.0
  %1031 = vmatprep.subr.mxu0 0.0
  %1032 = vmatpush2.msra.mxu0 0.0
  %1033 = vmatprep.subr.mxu0 0.0
  %1034 = vmatpush2.msra.mxu0 0.0
  %1035 = vmatprep.subr.mxu0 0.0
  %1036 = vmatpush2.msra.mxu0 0.0
  %1037 = vmatprep.subr.mxu0 0.0
  %1038 = vmatpush2.msra.mxu0 0.0
  %1039 = vmatprep.subr.mxu0 0.0
  %1040 = vmatpush2.msra.mxu0 0.0
  %1041 = vmatprep.subr.mxu0 0.0
  %1042 = vmatpush2.msra.mxu0 0.0
  %1043 = vmatprep.mubr.f32.mxu0 0.0
  %1044 = vmatmul.mubr.f32.gmra.mxu0 %v978
  %v1045 = vpop.f32.mrf.mxu0
  %v1046 = vadd.f32 %v511, %v1045
  %v1047 = vpop.f32.mrf.mxu0
  %v1048 = vadd.f32 %v515, %v1047
  %1049 = vdwg.mxu0
  %v1050 = vxor.u32 %v1046, 2147483648
  %v1051 = vmul.f32 %v1050, 1.442695
  %v1052 = vpow.pop %v1051
  %v1053 = vadd.f32 %v1052, 1.0
  %v1054 = vrcp.pop %v1053
  %v1055 = vmul.f32 1.0, %v1054
  %1056 = vrot.lane.b32.xlu0 %v1048, 64
  %v1057 = vpop.permute.xlu0 %1056
  %v1058 = vmul.f32 %v1055, %v1048
  %v1059 = vadd.f32 %v1058, %v1057
  %v1060 = vtanh.pop %v1059
  %1061 = vrot.lane.b32.xlu0 %v1055, 64
  %v1062 = vpop.permute.xlu0 %1061
  %v1063 = vsub.f32 1.0, %v1062
  %v1064 = vmul.f32 %v456, %v1063
  %v1065 = vmul.f32 %v1064, %v1060
  %v1066 = vmul.f32 %v1062, %v975
  %v1067 = vadd.f32 %v1065, %v1066
  %1068 = vrot.lane.b32.xlu0 %v1067, 64
  %v1069 = vpop.permute.xlu0 %1068
  %v1070 = vadd.f32 %v1067, %v469
  %1071 = vmatprep.subr.mxu0 %v505
  %1072 = vmatpush1.msra.mxu0 %v504
  %1073 = vmatprep.subr.mxu0 %v503
  %1074 = vmatpush1.msra.mxu0 %v502
  %1075 = vmatprep.subr.mxu0 %v501
  %1076 = vmatpush1.msra.mxu0 %v500
  %1077 = vmatprep.subr.mxu0 %v499
  %1078 = vmatpush1.msra.mxu0 %v498
  %1079 = vmatprep.subr.mxu0 %v497
  %1080 = vmatpush1.msra.mxu0 %v496
  %1081 = vmatprep.subr.mxu0 %v495
  %1082 = vmatpush1.msra.mxu0 %v494
  %1083 = vmatprep.subr.mxu0 %v493
  %1084 = vmatpush1.msra.mxu0 %v492
  %1085 = vmatprep.subr.mxu0 %v491
  %1086 = vmatpush1.msra.mxu0 %v490
  %1087 = vmatprep.subr.mxu0 %v489
  %1088 = vmatpush1.msra.mxu0 %v488
  %1089 = vmatprep.subr.mxu0 %v487
  %1090 = vmatpush1.msra.mxu0 %v486
  %1091 = vmatprep.subr.mxu0 %v485
  %1092 = vmatpush1.msra.mxu0 %v484
  %1093 = vmatprep.subr.mxu0 %v483
  %1094 = vmatpush1.msra.mxu0 %v482
  %1095 = vmatprep.subr.mxu0 %v481
  %1096 = vmatpush1.msra.mxu0 %v480
  %1097 = vmatprep.subr.mxu0 %v479
  %1098 = vmatpush1.msra.mxu0 %v478
  %1099 = vmatprep.subr.mxu0 %v477
  %1100 = vmatpush1.msra.mxu0 %v476
  %1101 = vmatprep.subr.mxu0 %v475
  %1102 = vmatpush1.msra.mxu0 %v474
  %1103 = vmatprep.subr.mxu0 0.0
  %1104 = vmatpush2.msra.mxu0 0.0
  %1105 = vmatprep.subr.mxu0 0.0
  %1106 = vmatpush2.msra.mxu0 0.0
  %1107 = vmatprep.subr.mxu0 0.0
  %1108 = vmatpush2.msra.mxu0 0.0
  %1109 = vmatprep.subr.mxu0 0.0
  %1110 = vmatpush2.msra.mxu0 0.0
  %1111 = vmatprep.subr.mxu0 0.0
  %1112 = vmatpush2.msra.mxu0 0.0
  %1113 = vmatprep.subr.mxu0 0.0
  %1114 = vmatpush2.msra.mxu0 0.0
  %1115 = vmatprep.subr.mxu0 0.0
  %1116 = vmatpush2.msra.mxu0 0.0
  %1117 = vmatprep.subr.mxu0 0.0
  %1118 = vmatpush2.msra.mxu0 0.0
  %1119 = vmatprep.subr.mxu0 0.0
  %1120 = vmatpush2.msra.mxu0 0.0
  %1121 = vmatprep.subr.mxu0 0.0
  %1122 = vmatpush2.msra.mxu0 0.0
  %1123 = vmatprep.subr.mxu0 0.0
  %1124 = vmatpush2.msra.mxu0 0.0
  %1125 = vmatprep.subr.mxu0 0.0
  %1126 = vmatpush2.msra.mxu0 0.0
  %1127 = vmatprep.subr.mxu0 0.0
  %1128 = vmatpush2.msra.mxu0 0.0
  %1129 = vmatprep.subr.mxu0 0.0
  %1130 = vmatpush2.msra.mxu0 0.0
  %1131 = vmatprep.subr.mxu0 0.0
  %1132 = vmatpush2.msra.mxu0 0.0
  %1133 = vmatprep.subr.mxu0 0.0
  %1134 = vmatpush2.msra.mxu0 0.0
  %1135 = vmatprep.mubr.f32.mxu0 0.0
  %1136 = vmatmul.mubr.f32.gmra.mxu0 %v1070
  %v1137 = vpop.f32.mrf.mxu0
  %v1138 = vadd.f32 %v511, %v1137
  %v1139 = vpop.f32.mrf.mxu0
  %v1140 = vadd.f32 %v515, %v1139
  %1141 = vdwg.mxu0
  %v1142 = vxor.u32 %v1138, 2147483648
  %v1143 = vmul.f32 %v1142, 1.442695
  %v1144 = vpow.pop %v1143
  %v1145 = vadd.f32 %v1144, 1.0
  %v1146 = vrcp.pop %v1145
  %v1147 = vmul.f32 1.0, %v1146
  %1148 = vrot.lane.b32.xlu0 %v1140, 64
  %v1149 = vpop.permute.xlu0 %1148
  %v1150 = vmul.f32 %v1147, %v1140
  %v1151 = vadd.f32 %v1150, %v1149
  %v1152 = vtanh.pop %v1151
  %1153 = vrot.lane.b32.xlu0 %v1147, 64
  %v1154 = vpop.permute.xlu0 %1153
  %v1155 = vsub.f32 1.0, %v1154
  %v1156 = vmul.f32 %v456, %v1155
  %v1157 = vmul.f32 %v1156, %v1152
  %v1158 = vmul.f32 %v1154, %v1067
  %v1159 = vadd.f32 %v1157, %v1158
  %1160 = vrot.lane.b32.xlu0 %v1159, 64
  %v1161 = vpop.permute.xlu0 %1160
  %s1162 = sshll.u32 %s471, 4
  %1163 = dma.done %s131, %s1162
  %v1164 = vld [vmem:[%s130] sm:$0xff]
  %v1165 = vld [vmem:[%s130 + $0x8] sm:$0xff]
  %v1166 = vld [vmem:[%s130 + $0x10] sm:$0xff]
  %v1167 = vld [vmem:[%s130 + $0x18] sm:$0xff]
  %v1168 = vld [vmem:[%s130 + $0x20] sm:$0xff]
  %v1169 = vld [vmem:[%s130 + $0x28] sm:$0xff]
  %v1170 = vld [vmem:[%s130 + $0x30] sm:$0xff]
  %v1171 = vld [vmem:[%s130 + $0x38] sm:$0xff]
  %v1172 = vld [vmem:[%s130 + $0x40] sm:$0xff]
  %v1173 = vld [vmem:[%s130 + $0x48] sm:$0xff]
  %v1174 = vld [vmem:[%s130 + $0x50] sm:$0xff]
  %v1175 = vld [vmem:[%s130 + $0x58] sm:$0xff]
  %v1176 = vld [vmem:[%s130 + $0x60] sm:$0xff]
  %v1177 = vld [vmem:[%s130 + $0x68] sm:$0xff]
  %v1178 = vld [vmem:[%s130 + $0x70] sm:$0xff]
  %v1179 = vld [vmem:[%s130 + $0x78] sm:$0xff]
  %v1180 = vld [vmem:[%s130 + $0x80] sm:$0xff]
  %v1181 = vld [vmem:[%s130 + $0x88] sm:$0xff]
  %v1182 = vld [vmem:[%s130 + $0x90] sm:$0xff]
  %v1183 = vld [vmem:[%s130 + $0x98] sm:$0xff]
  %v1184 = vld [vmem:[%s130 + $0xa0] sm:$0xff]
  %v1185 = vld [vmem:[%s130 + $0xa8] sm:$0xff]
  %v1186 = vld [vmem:[%s130 + $0xb0] sm:$0xff]
  %v1187 = vld [vmem:[%s130 + $0xb8] sm:$0xff]
  %v1188 = vld [vmem:[%s130 + $0xc0] sm:$0xff]
  %v1189 = vld [vmem:[%s130 + $0xc8] sm:$0xff]
  %v1190 = vld [vmem:[%s130 + $0xd0] sm:$0xff]
  %v1191 = vld [vmem:[%s130 + $0xd8] sm:$0xff]
  %v1192 = vld [vmem:[%s130 + $0xe0] sm:$0xff]
  %v1193 = vld [vmem:[%s130 + $0xe8] sm:$0xff]
  %v1194 = vld [vmem:[%s130 + $0xf0] sm:$0xff]
  %v1195 = vld [vmem:[%s130 + $0xf8] sm:$0xff]
  %s1196 = scalar_lea.vmem %s1, 2
  %v1197 = vld [vmem:[%s1196] sm:$0x3]
  %v1199 = vlaneseq
  %v1200 = vshrl.u32 %v1199, 7
  %v1201 = vsub.s32 0, %v1200
  %v1202 = vrot.slane %v1197, %v1201
  %v1203 = vlaneseq
  %v1204 = vshrl.u32 %v1203, 7
  %v1205 = vsub.s32 1, %v1204
  %v1206 = vrot.slane %v1197, %v1205
  %v1209 = vadd.f32 %v609, 0.0
  %1210 = vmatprep.subr.mxu0 %v1195
  %1211 = vmatpush1.msra.mxu0 %v1194
  %1212 = vmatprep.subr.mxu0 %v1193
  %1213 = vmatpush1.msra.mxu0 %v1192
  %1214 = vmatprep.subr.mxu0 %v1191
  %1215 = vmatpush1.msra.mxu0 %v1190
  %1216 = vmatprep.subr.mxu0 %v1189
  %1217 = vmatpush1.msra.mxu0 %v1188
  %1218 = vmatprep.subr.mxu0 %v1187
  %1219 = vmatpush1.msra.mxu0 %v1186
  %1220 = vmatprep.subr.mxu0 %v1185
  %1221 = vmatpush1.msra.mxu0 %v1184
  %1222 = vmatprep.subr.mxu0 %v1183
  %1223 = vmatpush1.msra.mxu0 %v1182
  %1224 = vmatprep.subr.mxu0 %v1181
  %1225 = vmatpush1.msra.mxu0 %v1180
  %1226 = vmatprep.subr.mxu0 %v1179
  %1227 = vmatpush1.msra.mxu0 %v1178
  %1228 = vmatprep.subr.mxu0 %v1177
  %1229 = vmatpush1.msra.mxu0 %v1176
  %1230 = vmatprep.subr.mxu0 %v1175
  %1231 = vmatpush1.msra.mxu0 %v1174
  %1232 = vmatprep.subr.mxu0 %v1173
  %1233 = vmatpush1.msra.mxu0 %v1172
  %1234 = vmatprep.subr.mxu0 %v1171
  %1235 = vmatpush1.msra.mxu0 %v1170
  %1236 = vmatprep.subr.mxu0 %v1169
  %1237 = vmatpush1.msra.mxu0 %v1168
  %1238 = vmatprep.subr.mxu0 %v1167
  %1239 = vmatpush1.msra.mxu0 %v1166
  %1240 = vmatprep.subr.mxu0 %v1165
  %1241 = vmatpush1.msra.mxu0 %v1164
  %1242 = vmatprep.subr.mxu0 0.0
  %1243 = vmatpush2.msra.mxu0 0.0
  %1244 = vmatprep.subr.mxu0 0.0
  %1245 = vmatpush2.msra.mxu0 0.0
  %1246 = vmatprep.subr.mxu0 0.0
  %1247 = vmatpush2.msra.mxu0 0.0
  %1248 = vmatprep.subr.mxu0 0.0
  %1249 = vmatpush2.msra.mxu0 0.0
  %1250 = vmatprep.subr.mxu0 0.0
  %1251 = vmatpush2.msra.mxu0 0.0
  %1252 = vmatprep.subr.mxu0 0.0
  %1253 = vmatpush2.msra.mxu0 0.0
  %1254 = vmatprep.subr.mxu0 0.0
  %1255 = vmatpush2.msra.mxu0 0.0
  %1256 = vmatprep.subr.mxu0 0.0
  %1257 = vmatpush2.msra.mxu0 0.0
  %1258 = vmatprep.subr.mxu0 0.0
  %1259 = vmatpush2.msra.mxu0 0.0
  %1260 = vmatprep.subr.mxu0 0.0
  %1261 = vmatpush2.msra.mxu0 0.0
  %1262 = vmatprep.subr.mxu0 0.0
  %1263 = vmatpush2.msra.mxu0 0.0
  %1264 = vmatprep.subr.mxu0 0.0
  %1265 = vmatpush2.msra.mxu0 0.0
  %1266 = vmatprep.subr.mxu0 0.0
  %1267 = vmatpush2.msra.mxu0 0.0
  %1268 = vmatprep.subr.mxu0 0.0
  %1269 = vmatpush2.msra.mxu0 0.0
  %1270 = vmatprep.subr.mxu0 0.0
  %1271 = vmatpush2.msra.mxu0 0.0
  %1272 = vmatprep.subr.mxu0 0.0
  %1273 = vmatpush2.msra.mxu0 0.0
  %1274 = vmatprep.mubr.f32.mxu0 0.0
  %1275 = vmatmul.mubr.f32.gmra.mxu0 %v1209
  %v1276 = vpop.f32.mrf.mxu0
  %v1277 = vadd.f32 %v1202, %v1276
  %v1278 = vpop.f32.mrf.mxu0
  %v1279 = vadd.f32 %v1206, %v1278
  %1280 = vdwg.mxu0
  %v1281 = vxor.u32 %v1277, 2147483648
  %v1282 = vmul.f32 %v1281, 1.442695
  %v1283 = vpow.pop %v1282
  %v1284 = vadd.f32 %v1283, 1.0
  %v1285 = vrcp.pop %v1284
  %v1286 = vmul.f32 1.0, %v1285
  %1287 = vrot.lane.b32.xlu0 %v1279, 64
  %v1288 = vpop.permute.xlu0 %1287
  %v1289 = vmul.f32 %v1286, %v1279
  %v1290 = vadd.f32 %v1289, %v1288
  %v1291 = vtanh.pop %v1290
  %1292 = vrot.lane.b32.xlu0 %v1286, 64
  %v1293 = vpop.permute.xlu0 %1292
  %v1294 = vsub.f32 1.0, %v1293
  %v1295 = vmul.f32 %v456, %v1294
  %v1296 = vmul.f32 %v1295, %v1291
  %v1297 = vmul.f32 %v1293, 0.0
  %v1298 = vadd.f32 %v1296, %v1297
  %1299 = vrot.lane.b32.xlu0 %v1298, 64
  %v1300 = vpop.permute.xlu0 %1299
  %v1301 = vadd.f32 %v1298, %v701
  %1302 = vmatprep.subr.mxu0 %v1195
  %1303 = vmatpush1.msra.mxu0 %v1194
  %1304 = vmatprep.subr.mxu0 %v1193
  %1305 = vmatpush1.msra.mxu0 %v1192
  %1306 = vmatprep.subr.mxu0 %v1191
  %1307 = vmatpush1.msra.mxu0 %v1190
  %1308 = vmatprep.subr.mxu0 %v1189
  %1309 = vmatpush1.msra.mxu0 %v1188
  %1310 = vmatprep.subr.mxu0 %v1187
  %1311 = vmatpush1.msra.mxu0 %v1186
  %1312 = vmatprep.subr.mxu0 %v1185
  %1313 = vmatpush1.msra.mxu0 %v1184
  %1314 = vmatprep.subr.mxu0 %v1183
  %1315 = vmatpush1.msra.mxu0 %v1182
  %1316 = vmatprep.subr.mxu0 %v1181
  %1317 = vmatpush1.msra.mxu0 %v1180
  %1318 = vmatprep.subr.mxu0 %v1179
  %1319 = vmatpush1.msra.mxu0 %v1178
  %1320 = vmatprep.subr.mxu0 %v1177
  %1321 = vmatpush1.msra.mxu0 %v1176
  %1322 = vmatprep.subr.mxu0 %v1175
  %1323 = vmatpush1.msra.mxu0 %v1174
  %1324 = vmatprep.subr.mxu0 %v1173
  %1325 = vmatpush1.msra.mxu0 %v1172
  %1326 = vmatprep.subr.mxu0 %v1171
  %1327 = vmatpush1.msra.mxu0 %v1170
  %1328 = vmatprep.subr.mxu0 %v1169
  %1329 = vmatpush1.msra.mxu0 %v1168
  %1330 = vmatprep.subr.mxu0 %v1167
  %1331 = vmatpush1.msra.mxu0 %v1166
  %1332 = vmatprep.subr.mxu0 %v1165
  %1333 = vmatpush1.msra.mxu0 %v1164
  %1334 = vmatprep.subr.mxu0 0.0
  %1335 = vmatpush2.msra.mxu0 0.0
  %1336 = vmatprep.subr.mxu0 0.0
  %1337 = vmatpush2.msra.mxu0 0.0
  %1338 = vmatprep.subr.mxu0 0.0
  %1339 = vmatpush2.msra.mxu0 0.0
  %1340 = vmatprep.subr.mxu0 0.0
  %1341 = vmatpush2.msra.mxu0 0.0
  %1342 = vmatprep.subr.mxu0 0.0
  %1343 = vmatpush2.msra.mxu0 0.0
  %1344 = vmatprep.subr.mxu0 0.0
  %1345 = vmatpush2.msra.mxu0 0.0
  %1346 = vmatprep.subr.mxu0 0.0
  %1347 = vmatpush2.msra.mxu0 0.0
  %1348 = vmatprep.subr.mxu0 0.0
  %1349 = vmatpush2.msra.mxu0 0.0
  %1350 = vmatprep.subr.mxu0 0.0
  %1351 = vmatpush2.msra.mxu0 0.0
  %1352 = vmatprep.subr.mxu0 0.0
  %1353 = vmatpush2.msra.mxu0 0.0
  %1354 = vmatprep.subr.mxu0 0.0
  %1355 = vmatpush2.msra.mxu0 0.0
  %1356 = vmatprep.subr.mxu0 0.0
  %1357 = vmatpush2.msra.mxu0 0.0
  %1358 = vmatprep.subr.mxu0 0.0
  %1359 = vmatpush2.msra.mxu0 0.0
  %1360 = vmatprep.subr.mxu0 0.0
  %1361 = vmatpush2.msra.mxu0 0.0
  %1362 = vmatprep.subr.mxu0 0.0
  %1363 = vmatpush2.msra.mxu0 0.0
  %1364 = vmatprep.subr.mxu0 0.0
  %1365 = vmatpush2.msra.mxu0 0.0
  %1366 = vmatprep.mubr.f32.mxu0 0.0
  %1367 = vmatmul.mubr.f32.gmra.mxu0 %v1301
  %v1368 = vpop.f32.mrf.mxu0
  %v1369 = vadd.f32 %v1202, %v1368
  %v1370 = vpop.f32.mrf.mxu0
  %v1371 = vadd.f32 %v1206, %v1370
  %1372 = vdwg.mxu0
  %v1373 = vxor.u32 %v1369, 2147483648
  %v1374 = vmul.f32 %v1373, 1.442695
  %v1375 = vpow.pop %v1374
  %v1376 = vadd.f32 %v1375, 1.0
  %v1377 = vrcp.pop %v1376
  %v1378 = vmul.f32 1.0, %v1377
  %1379 = vrot.lane.b32.xlu0 %v1371, 64
  %v1380 = vpop.permute.xlu0 %1379
  %v1381 = vmul.f32 %v1378, %v1371
  %v1382 = vadd.f32 %v1381, %v1380
  %v1383 = vtanh.pop %v1382
  %1384 = vrot.lane.b32.xlu0 %v1378, 64
  %v1385 = vpop.permute.xlu0 %1384
  %v1386 = vsub.f32 1.0, %v1385
  %v1387 = vmul.f32 %v456, %v1386
  %v1388 = vmul.f32 %v1387, %v1383
  %v1389 = vmul.f32 %v1385, %v1298
  %v1390 = vadd.f32 %v1388, %v1389
  %1391 = vrot.lane.b32.xlu0 %v1390, 64
  %v1392 = vpop.permute.xlu0 %1391
  %v1393 = vadd.f32 %v1390, %v793
  %1394 = vmatprep.subr.mxu0 %v1195
  %1395 = vmatpush1.msra.mxu0 %v1194
  %1396 = vmatprep.subr.mxu0 %v1193
  %1397 = vmatpush1.msra.mxu0 %v1192
  %1398 = vmatprep.subr.mxu0 %v1191
  %1399 = vmatpush1.msra.mxu0 %v1190
  %1400 = vmatprep.subr.mxu0 %v1189
  %1401 = vmatpush1.msra.mxu0 %v1188
  %1402 = vmatprep.subr.mxu0 %v1187
  %1403 = vmatpush1.msra.mxu0 %v1186
  %1404 = vmatprep.subr.mxu0 %v1185
  %1405 = vmatpush1.msra.mxu0 %v1184
  %1406 = vmatprep.subr.mxu0 %v1183
  %1407 = vmatpush1.msra.mxu0 %v1182
  %1408 = vmatprep.subr.mxu0 %v1181
  %1409 = vmatpush1.msra.mxu0 %v1180
  %1410 = vmatprep.subr.mxu0 %v1179
  %1411 = vmatpush1.msra.mxu0 %v1178
  %1412 = vmatprep.subr.mxu0 %v1177
  %1413 = vmatpush1.msra.mxu0 %v1176
  %1414 = vmatprep.subr.mxu0 %v1175
  %1415 = vmatpush1.msra.mxu0 %v1174
  %1416 = vmatprep.subr.mxu0 %v1173
  %1417 = vmatpush1.msra.mxu0 %v1172
  %1418 = vmatprep.subr.mxu0 %v1171
  %1419 = vmatpush1.msra.mxu0 %v1170
  %1420 = vmatprep.subr.mxu0 %v1169
  %1421 = vmatpush1.msra.mxu0 %v1168
  %1422 = vmatprep.subr.mxu0 %v1167
  %1423 = vmatpush1.msra.mxu0 %v1166
  %1424 = vmatprep.subr.mxu0 %v1165
  %1425 = vmatpush1.msra.mxu0 %v1164
  %1426 = vmatprep.subr.mxu0 0.0
  %1427 = vmatpush2.msra.mxu0 0.0
  %1428 = vmatprep.subr.mxu0 0.0
  %1429 = vmatpush2.msra.mxu0 0.0
  %1430 = vmatprep.subr.mxu0 0.0
  %1431 = vmatpush2.msra.mxu0 0.0
  %1432 = vmatprep.subr.mxu0 0.0
  %1433 = vmatpush2.msra.mxu0 0.0
  %1434 = vmatprep.subr.mxu0 0.0
  %1435 = vmatpush2.msra.mxu0 0.0
  %1436 = vmatprep.subr.mxu0 0.0
  %1437 = vmatpush2.msra.mxu0 0.0
  %1438 = vmatprep.subr.mxu0 0.0
  %1439 = vmatpush2.msra.mxu0 0.0
  %1440 = vmatprep.subr.mxu0 0.0
  %1441 = vmatpush2.msra.mxu0 0.0
  %1442 = vmatprep.subr.mxu0 0.0
  %1443 = vmatpush2.msra.mxu0 0.0
  %1444 = vmatprep.subr.mxu0 0.0
  %1445 = vmatpush2.msra.mxu0 0.0
  %1446 = vmatprep.subr.mxu0 0.0
  %1447 = vmatpush2.msra.mxu0 0.0
  %1448 = vmatprep.subr.mxu0 0.0
  %1449 = vmatpush2.msra.mxu0 0.0
  %1450 = vmatprep.subr.mxu0 0.0
  %1451 = vmatpush2.msra.mxu0 0.0
  %1452 = vmatprep.subr.mxu0 0.0
  %1453 = vmatpush2.msra.mxu0 0.0
  %1454 = vmatprep.subr.mxu0 0.0
  %1455 = vmatpush2.msra.mxu0 0.0
  %1456 = vmatprep.subr.mxu0 0.0
  %1457 = vmatpush2.msra.mxu0 0.0
  %1458 = vmatprep.mubr.f32.mxu0 0.0
  %1459 = vmatmul.mubr.f32.gmra.mxu0 %v1393
  %v1460 = vpop.f32.mrf.mxu0
  %v1461 = vadd.f32 %v1202, %v1460
  %v1462 = vpop.f32.mrf.mxu0
  %v1463 = vadd.f32 %v1206, %v1462
  %1464 = vdwg.mxu0
  %v1465 = vxor.u32 %v1461, 2147483648
  %v1466 = vmul.f32 %v1465, 1.442695
  %v1467 = vpow.pop %v1466
  %v1468 = vadd.f32 %v1467, 1.0
  %v1469 = vrcp.pop %v1468
  %v1470 = vmul.f32 1.0, %v1469
  %1471 = vrot.lane.b32.xlu0 %v1463, 64
  %v1472 = vpop.permute.xlu0 %1471
  %v1473 = vmul.f32 %v1470, %v1463
  %v1474 = vadd.f32 %v1473, %v1472
  %v1475 = vtanh.pop %v1474
  %1476 = vrot.lane.b32.xlu0 %v1470, 64
  %v1477 = vpop.permute.xlu0 %1476
  %v1478 = vsub.f32 1.0, %v1477
  %v1479 = vmul.f32 %v456, %v1478
  %v1480 = vmul.f32 %v1479, %v1475
  %v1481 = vmul.f32 %v1477, %v1390
  %v1482 = vadd.f32 %v1480, %v1481
  %1483 = vrot.lane.b32.xlu0 %v1482, 64
  %v1484 = vpop.permute.xlu0 %1483
  %v1485 = vadd.f32 %v1482, %v885
  %1486 = vmatprep.subr.mxu0 %v1195
  %1487 = vmatpush1.msra.mxu0 %v1194
  %1488 = vmatprep.subr.mxu0 %v1193
  %1489 = vmatpush1.msra.mxu0 %v1192
  %1490 = vmatprep.subr.mxu0 %v1191
  %1491 = vmatpush1.msra.mxu0 %v1190
  %1492 = vmatprep.subr.mxu0 %v1189
  %1493 = vmatpush1.msra.mxu0 %v1188
  %1494 = vmatprep.subr.mxu0 %v1187
  %1495 = vmatpush1.msra.mxu0 %v1186
  %1496 = vmatprep.subr.mxu0 %v1185
  %1497 = vmatpush1.msra.mxu0 %v1184
  %1498 = vmatprep.subr.mxu0 %v1183
  %1499 = vmatpush1.msra.mxu0 %v1182
  %1500 = vmatprep.subr.mxu0 %v1181
  %1501 = vmatpush1.msra.mxu0 %v1180
  %1502 = vmatprep.subr.mxu0 %v1179
  %1503 = vmatpush1.msra.mxu0 %v1178
  %1504 = vmatprep.subr.mxu0 %v1177
  %1505 = vmatpush1.msra.mxu0 %v1176
  %1506 = vmatprep.subr.mxu0 %v1175
  %1507 = vmatpush1.msra.mxu0 %v1174
  %1508 = vmatprep.subr.mxu0 %v1173
  %1509 = vmatpush1.msra.mxu0 %v1172
  %1510 = vmatprep.subr.mxu0 %v1171
  %1511 = vmatpush1.msra.mxu0 %v1170
  %1512 = vmatprep.subr.mxu0 %v1169
  %1513 = vmatpush1.msra.mxu0 %v1168
  %1514 = vmatprep.subr.mxu0 %v1167
  %1515 = vmatpush1.msra.mxu0 %v1166
  %1516 = vmatprep.subr.mxu0 %v1165
  %1517 = vmatpush1.msra.mxu0 %v1164
  %1518 = vmatprep.subr.mxu0 0.0
  %1519 = vmatpush2.msra.mxu0 0.0
  %1520 = vmatprep.subr.mxu0 0.0
  %1521 = vmatpush2.msra.mxu0 0.0
  %1522 = vmatprep.subr.mxu0 0.0
  %1523 = vmatpush2.msra.mxu0 0.0
  %1524 = vmatprep.subr.mxu0 0.0
  %1525 = vmatpush2.msra.mxu0 0.0
  %1526 = vmatprep.subr.mxu0 0.0
  %1527 = vmatpush2.msra.mxu0 0.0
  %1528 = vmatprep.subr.mxu0 0.0
  %1529 = vmatpush2.msra.mxu0 0.0
  %1530 = vmatprep.subr.mxu0 0.0
  %1531 = vmatpush2.msra.mxu0 0.0
  %1532 = vmatprep.subr.mxu0 0.0
  %1533 = vmatpush2.msra.mxu0 0.0
  %1534 = vmatprep.subr.mxu0 0.0
  %1535 = vmatpush2.msra.mxu0 0.0
  %1536 = vmatprep.subr.mxu0 0.0
  %1537 = vmatpush2.msra.mxu0 0.0
  %1538 = vmatprep.subr.mxu0 0.0
  %1539 = vmatpush2.msra.mxu0 0.0
  %1540 = vmatprep.subr.mxu0 0.0
  %1541 = vmatpush2.msra.mxu0 0.0
  %1542 = vmatprep.subr.mxu0 0.0
  %1543 = vmatpush2.msra.mxu0 0.0
  %1544 = vmatprep.subr.mxu0 0.0
  %1545 = vmatpush2.msra.mxu0 0.0
  %1546 = vmatprep.subr.mxu0 0.0
  %1547 = vmatpush2.msra.mxu0 0.0
  %1548 = vmatprep.subr.mxu0 0.0
  %1549 = vmatpush2.msra.mxu0 0.0
  %1550 = vmatprep.mubr.f32.mxu0 0.0
  %1551 = vmatmul.mubr.f32.gmra.mxu0 %v1485
  %v1552 = vpop.f32.mrf.mxu0
  %v1553 = vadd.f32 %v1202, %v1552
  %v1554 = vpop.f32.mrf.mxu0
  %v1555 = vadd.f32 %v1206, %v1554
  %1556 = vdwg.mxu0
  %v1557 = vxor.u32 %v1553, 2147483648
  %v1558 = vmul.f32 %v1557, 1.442695
  %v1559 = vpow.pop %v1558
  %v1560 = vadd.f32 %v1559, 1.0
  %v1561 = vrcp.pop %v1560
  %v1562 = vmul.f32 1.0, %v1561
  %1563 = vrot.lane.b32.xlu0 %v1555, 64
  %v1564 = vpop.permute.xlu0 %1563
  %v1565 = vmul.f32 %v1562, %v1555
  %v1566 = vadd.f32 %v1565, %v1564
  %v1567 = vtanh.pop %v1566
  %1568 = vrot.lane.b32.xlu0 %v1562, 64
  %v1569 = vpop.permute.xlu0 %1568
  %v1570 = vsub.f32 1.0, %v1569
  %v1571 = vmul.f32 %v456, %v1570
  %v1572 = vmul.f32 %v1571, %v1567
  %v1573 = vmul.f32 %v1569, %v1482
  %v1574 = vadd.f32 %v1572, %v1573
  %1575 = vrot.lane.b32.xlu0 %v1574, 64
  %v1576 = vpop.permute.xlu0 %1575
  %v1577 = vadd.f32 %v1574, %v977
  %1578 = vmatprep.subr.mxu0 %v1195
  %1579 = vmatpush1.msra.mxu0 %v1194
  %1580 = vmatprep.subr.mxu0 %v1193
  %1581 = vmatpush1.msra.mxu0 %v1192
  %1582 = vmatprep.subr.mxu0 %v1191
  %1583 = vmatpush1.msra.mxu0 %v1190
  %1584 = vmatprep.subr.mxu0 %v1189
  %1585 = vmatpush1.msra.mxu0 %v1188
  %1586 = vmatprep.subr.mxu0 %v1187
  %1587 = vmatpush1.msra.mxu0 %v1186
  %1588 = vmatprep.subr.mxu0 %v1185
  %1589 = vmatpush1.msra.mxu0 %v1184
  %1590 = vmatprep.subr.mxu0 %v1183
  %1591 = vmatpush1.msra.mxu0 %v1182
  %1592 = vmatprep.subr.mxu0 %v1181
  %1593 = vmatpush1.msra.mxu0 %v1180
  %1594 = vmatprep.subr.mxu0 %v1179
  %1595 = vmatpush1.msra.mxu0 %v1178
  %1596 = vmatprep.subr.mxu0 %v1177
  %1597 = vmatpush1.msra.mxu0 %v1176
  %1598 = vmatprep.subr.mxu0 %v1175
  %1599 = vmatpush1.msra.mxu0 %v1174
  %1600 = vmatprep.subr.mxu0 %v1173
  %1601 = vmatpush1.msra.mxu0 %v1172
  %1602 = vmatprep.subr.mxu0 %v1171
  %1603 = vmatpush1.msra.mxu0 %v1170
  %1604 = vmatprep.subr.mxu0 %v1169
  %1605 = vmatpush1.msra.mxu0 %v1168
  %1606 = vmatprep.subr.mxu0 %v1167
  %1607 = vmatpush1.msra.mxu0 %v1166
  %1608 = vmatprep.subr.mxu0 %v1165
  %1609 = vmatpush1.msra.mxu0 %v1164
  %1610 = vmatprep.subr.mxu0 0.0
  %1611 = vmatpush2.msra.mxu0 0.0
  %1612 = vmatprep.subr.mxu0 0.0
  %1613 = vmatpush2.msra.mxu0 0.0
  %1614 = vmatprep.subr.mxu0 0.0
  %1615 = vmatpush2.msra.mxu0 0.0
  %1616 = vmatprep.subr.mxu0 0.0
  %1617 = vmatpush2.msra.mxu0 0.0
  %1618 = vmatprep.subr.mxu0 0.0
  %1619 = vmatpush2.msra.mxu0 0.0
  %1620 = vmatprep.subr.mxu0 0.0
  %1621 = vmatpush2.msra.mxu0 0.0
  %1622 = vmatprep.subr.mxu0 0.0
  %1623 = vmatpush2.msra.mxu0 0.0
  %1624 = vmatprep.subr.mxu0 0.0
  %1625 = vmatpush2.msra.mxu0 0.0
  %1626 = vmatprep.subr.mxu0 0.0
  %1627 = vmatpush2.msra.mxu0 0.0
  %1628 = vmatprep.subr.mxu0 0.0
  %1629 = vmatpush2.msra.mxu0 0.0
  %1630 = vmatprep.subr.mxu0 0.0
  %1631 = vmatpush2.msra.mxu0 0.0
  %1632 = vmatprep.subr.mxu0 0.0
  %1633 = vmatpush2.msra.mxu0 0.0
  %1634 = vmatprep.subr.mxu0 0.0
  %1635 = vmatpush2.msra.mxu0 0.0
  %1636 = vmatprep.subr.mxu0 0.0
  %1637 = vmatpush2.msra.mxu0 0.0
  %1638 = vmatprep.subr.mxu0 0.0
  %1639 = vmatpush2.msra.mxu0 0.0
  %1640 = vmatprep.subr.mxu0 0.0
  %1641 = vmatpush2.msra.mxu0 0.0
  %1642 = vmatprep.mubr.f32.mxu0 0.0
  %1643 = vmatmul.mubr.f32.gmra.mxu0 %v1577
  %v1644 = vpop.f32.mrf.mxu0
  %v1645 = vadd.f32 %v1202, %v1644
  %v1646 = vpop.f32.mrf.mxu0
  %v1647 = vadd.f32 %v1206, %v1646
  %1648 = vdwg.mxu0
  %v1649 = vxor.u32 %v1645, 2147483648
  %v1650 = vmul.f32 %v1649, 1.442695
  %v1651 = vpow.pop %v1650
  %v1652 = vadd.f32 %v1651, 1.0
  %v1653 = vrcp.pop %v1652
  %v1654 = vmul.f32 1.0, %v1653
  %1655 = vrot.lane.b32.xlu0 %v1647, 64
  %v1656 = vpop.permute.xlu0 %1655
  %v1657 = vmul.f32 %v1654, %v1647
  %v1658 = vadd.f32 %v1657, %v1656
  %v1659 = vtanh.pop %v1658
  %1660 = vrot.lane.b32.xlu0 %v1654, 64
  %v1661 = vpop.permute.xlu0 %1660
  %v1662 = vsub.f32 1.0, %v1661
  %v1663 = vmul.f32 %v456, %v1662
  %v1664 = vmul.f32 %v1663, %v1659
  %v1665 = vmul.f32 %v1661, %v1574
  %v1666 = vadd.f32 %v1664, %v1665
  %1667 = vrot.lane.b32.xlu0 %v1666, 64
  %v1668 = vpop.permute.xlu0 %1667
  %v1669 = vadd.f32 %v1666, %v1069
  %1670 = vmatprep.subr.mxu0 %v1195
  %1671 = vmatpush1.msra.mxu0 %v1194
  %1672 = vmatprep.subr.mxu0 %v1193
  %1673 = vmatpush1.msra.mxu0 %v1192
  %1674 = vmatprep.subr.mxu0 %v1191
  %1675 = vmatpush1.msra.mxu0 %v1190
  %1676 = vmatprep.subr.mxu0 %v1189
  %1677 = vmatpush1.msra.mxu0 %v1188
  %1678 = vmatprep.subr.mxu0 %v1187
  %1679 = vmatpush1.msra.mxu0 %v1186
  %1680 = vmatprep.subr.mxu0 %v1185
  %1681 = vmatpush1.msra.mxu0 %v1184
  %1682 = vmatprep.subr.mxu0 %v1183
  %1683 = vmatpush1.msra.mxu0 %v1182
  %1684 = vmatprep.subr.mxu0 %v1181
  %1685 = vmatpush1.msra.mxu0 %v1180
  %1686 = vmatprep.subr.mxu0 %v1179
  %1687 = vmatpush1.msra.mxu0 %v1178
  %1688 = vmatprep.subr.mxu0 %v1177
  %1689 = vmatpush1.msra.mxu0 %v1176
  %1690 = vmatprep.subr.mxu0 %v1175
  %1691 = vmatpush1.msra.mxu0 %v1174
  %1692 = vmatprep.subr.mxu0 %v1173
  %1693 = vmatpush1.msra.mxu0 %v1172
  %1694 = vmatprep.subr.mxu0 %v1171
  %1695 = vmatpush1.msra.mxu0 %v1170
  %1696 = vmatprep.subr.mxu0 %v1169
  %1697 = vmatpush1.msra.mxu0 %v1168
  %1698 = vmatprep.subr.mxu0 %v1167
  %1699 = vmatpush1.msra.mxu0 %v1166
  %1700 = vmatprep.subr.mxu0 %v1165
  %1701 = vmatpush1.msra.mxu0 %v1164
  %1702 = vmatprep.subr.mxu0 0.0
  %1703 = vmatpush2.msra.mxu0 0.0
  %1704 = vmatprep.subr.mxu0 0.0
  %1705 = vmatpush2.msra.mxu0 0.0
  %1706 = vmatprep.subr.mxu0 0.0
  %1707 = vmatpush2.msra.mxu0 0.0
  %1708 = vmatprep.subr.mxu0 0.0
  %1709 = vmatpush2.msra.mxu0 0.0
  %1710 = vmatprep.subr.mxu0 0.0
  %1711 = vmatpush2.msra.mxu0 0.0
  %1712 = vmatprep.subr.mxu0 0.0
  %1713 = vmatpush2.msra.mxu0 0.0
  %1714 = vmatprep.subr.mxu0 0.0
  %1715 = vmatpush2.msra.mxu0 0.0
  %1716 = vmatprep.subr.mxu0 0.0
  %1717 = vmatpush2.msra.mxu0 0.0
  %1718 = vmatprep.subr.mxu0 0.0
  %1719 = vmatpush2.msra.mxu0 0.0
  %1720 = vmatprep.subr.mxu0 0.0
  %1721 = vmatpush2.msra.mxu0 0.0
  %1722 = vmatprep.subr.mxu0 0.0
  %1723 = vmatpush2.msra.mxu0 0.0
  %1724 = vmatprep.subr.mxu0 0.0
  %1725 = vmatpush2.msra.mxu0 0.0
  %1726 = vmatprep.subr.mxu0 0.0
  %1727 = vmatpush2.msra.mxu0 0.0
  %1728 = vmatprep.subr.mxu0 0.0
  %1729 = vmatpush2.msra.mxu0 0.0
  %1730 = vmatprep.subr.mxu0 0.0
  %1731 = vmatpush2.msra.mxu0 0.0
  %1732 = vmatprep.subr.mxu0 0.0
  %1733 = vmatpush2.msra.mxu0 0.0
  %1734 = vmatprep.mubr.f32.mxu0 0.0
  %1735 = vmatmul.mubr.f32.gmra.mxu0 %v1669
  %v1736 = vpop.f32.mrf.mxu0
  %v1737 = vadd.f32 %v1202, %v1736
  %v1738 = vpop.f32.mrf.mxu0
  %v1739 = vadd.f32 %v1206, %v1738
  %1740 = vdwg.mxu0
  %v1741 = vxor.u32 %v1737, 2147483648
  %v1742 = vmul.f32 %v1741, 1.442695
  %v1743 = vpow.pop %v1742
  %v1744 = vadd.f32 %v1743, 1.0
  %v1745 = vrcp.pop %v1744
  %v1746 = vmul.f32 1.0, %v1745
  %1747 = vrot.lane.b32.xlu0 %v1739, 64
  %v1748 = vpop.permute.xlu0 %1747
  %v1749 = vmul.f32 %v1746, %v1739
  %v1750 = vadd.f32 %v1749, %v1748
  %v1751 = vtanh.pop %v1750
  %1752 = vrot.lane.b32.xlu0 %v1746, 64
  %v1753 = vpop.permute.xlu0 %1752
  %v1754 = vsub.f32 1.0, %v1753
  %v1755 = vmul.f32 %v456, %v1754
  %v1756 = vmul.f32 %v1755, %v1751
  %v1757 = vmul.f32 %v1753, %v1666
  %v1758 = vadd.f32 %v1756, %v1757
  %1759 = vrot.lane.b32.xlu0 %v1758, 64
  %v1760 = vpop.permute.xlu0 %1759
  %v1761 = vadd.f32 %v1758, %v1161
  %1762 = vmatprep.subr.mxu0 %v1195
  %1763 = vmatpush1.msra.mxu0 %v1194
  %1764 = vmatprep.subr.mxu0 %v1193
  %1765 = vmatpush1.msra.mxu0 %v1192
  %1766 = vmatprep.subr.mxu0 %v1191
  %1767 = vmatpush1.msra.mxu0 %v1190
  %1768 = vmatprep.subr.mxu0 %v1189
  %1769 = vmatpush1.msra.mxu0 %v1188
  %1770 = vmatprep.subr.mxu0 %v1187
  %1771 = vmatpush1.msra.mxu0 %v1186
  %1772 = vmatprep.subr.mxu0 %v1185
  %1773 = vmatpush1.msra.mxu0 %v1184
  %1774 = vmatprep.subr.mxu0 %v1183
  %1775 = vmatpush1.msra.mxu0 %v1182
  %1776 = vmatprep.subr.mxu0 %v1181
  %1777 = vmatpush1.msra.mxu0 %v1180
  %1778 = vmatprep.subr.mxu0 %v1179
  %1779 = vmatpush1.msra.mxu0 %v1178
  %1780 = vmatprep.subr.mxu0 %v1177
  %1781 = vmatpush1.msra.mxu0 %v1176
  %1782 = vmatprep.subr.mxu0 %v1175
  %1783 = vmatpush1.msra.mxu0 %v1174
  %1784 = vmatprep.subr.mxu0 %v1173
  %1785 = vmatpush1.msra.mxu0 %v1172
  %1786 = vmatprep.subr.mxu0 %v1171
  %1787 = vmatpush1.msra.mxu0 %v1170
  %1788 = vmatprep.subr.mxu0 %v1169
  %1789 = vmatpush1.msra.mxu0 %v1168
  %1790 = vmatprep.subr.mxu0 %v1167
  %1791 = vmatpush1.msra.mxu0 %v1166
  %1792 = vmatprep.subr.mxu0 %v1165
  %1793 = vmatpush1.msra.mxu0 %v1164
  %1794 = vmatprep.subr.mxu0 0.0
  %1795 = vmatpush2.msra.mxu0 0.0
  %1796 = vmatprep.subr.mxu0 0.0
  %1797 = vmatpush2.msra.mxu0 0.0
  %1798 = vmatprep.subr.mxu0 0.0
  %1799 = vmatpush2.msra.mxu0 0.0
  %1800 = vmatprep.subr.mxu0 0.0
  %1801 = vmatpush2.msra.mxu0 0.0
  %1802 = vmatprep.subr.mxu0 0.0
  %1803 = vmatpush2.msra.mxu0 0.0
  %1804 = vmatprep.subr.mxu0 0.0
  %1805 = vmatpush2.msra.mxu0 0.0
  %1806 = vmatprep.subr.mxu0 0.0
  %1807 = vmatpush2.msra.mxu0 0.0
  %1808 = vmatprep.subr.mxu0 0.0
  %1809 = vmatpush2.msra.mxu0 0.0
  %1810 = vmatprep.subr.mxu0 0.0
  %1811 = vmatpush2.msra.mxu0 0.0
  %1812 = vmatprep.subr.mxu0 0.0
  %1813 = vmatpush2.msra.mxu0 0.0
  %1814 = vmatprep.subr.mxu0 0.0
  %1815 = vmatpush2.msra.mxu0 0.0
  %1816 = vmatprep.subr.mxu0 0.0
  %1817 = vmatpush2.msra.mxu0 0.0
  %1818 = vmatprep.subr.mxu0 0.0
  %1819 = vmatpush2.msra.mxu0 0.0
  %1820 = vmatprep.subr.mxu0 0.0
  %1821 = vmatpush2.msra.mxu0 0.0
  %1822 = vmatprep.subr.mxu0 0.0
  %1823 = vmatpush2.msra.mxu0 0.0
  %1824 = vmatprep.subr.mxu0 0.0
  %1825 = vmatpush2.msra.mxu0 0.0
  %1826 = vmatprep.mubr.f32.mxu0 0.0
  %1827 = vmatmul.mubr.f32.gmra.mxu0 %v1761
  %v1828 = vpop.f32.mrf.mxu0
  %v1829 = vadd.f32 %v1202, %v1828
  %v1830 = vpop.f32.mrf.mxu0
  %v1831 = vadd.f32 %v1206, %v1830
  %1832 = vdwg.mxu0
  %v1833 = vxor.u32 %v1829, 2147483648
  %v1834 = vmul.f32 %v1833, 1.442695
  %v1835 = vpow.pop %v1834
  %v1836 = vadd.f32 %v1835, 1.0
  %v1837 = vrcp.pop %v1836
  %v1838 = vmul.f32 1.0, %v1837
  %1839 = vrot.lane.b32.xlu0 %v1831, 64
  %v1840 = vpop.permute.xlu0 %1839
  %v1841 = vmul.f32 %v1838, %v1831
  %v1842 = vadd.f32 %v1841, %v1840
  %v1843 = vtanh.pop %v1842
  %1844 = vrot.lane.b32.xlu0 %v1838, 64
  %v1845 = vpop.permute.xlu0 %1844
  %v1846 = vsub.f32 1.0, %v1845
  %v1847 = vmul.f32 %v456, %v1846
  %v1848 = vmul.f32 %v1847, %v1843
  %v1849 = vmul.f32 %v1845, %v1758
  %v1850 = vadd.f32 %v1848, %v1849
  %1851 = vrot.lane.b32.xlu0 %v1850, 64
  %v1852 = vpop.permute.xlu0 %1851
  %s1853 = sshll.u32 %s471, 4
  %1854 = dma.done %s239, %s1853
  %v1855 = vld [vmem:[%s238] sm:$0xff]
  %v1856 = vld [vmem:[%s238 + $0x8] sm:$0xff]
  %v1857 = vld [vmem:[%s238 + $0x10] sm:$0xff]
  %v1858 = vld [vmem:[%s238 + $0x18] sm:$0xff]
  %v1859 = vld [vmem:[%s238 + $0x20] sm:$0xff]
  %v1860 = vld [vmem:[%s238 + $0x28] sm:$0xff]
  %v1861 = vld [vmem:[%s238 + $0x30] sm:$0xff]
  %v1862 = vld [vmem:[%s238 + $0x38] sm:$0xff]
  %v1863 = vld [vmem:[%s238 + $0x40] sm:$0xff]
  %v1864 = vld [vmem:[%s238 + $0x48] sm:$0xff]
  %v1865 = vld [vmem:[%s238 + $0x50] sm:$0xff]
  %v1866 = vld [vmem:[%s238 + $0x58] sm:$0xff]
  %v1867 = vld [vmem:[%s238 + $0x60] sm:$0xff]
  %v1868 = vld [vmem:[%s238 + $0x68] sm:$0xff]
  %v1869 = vld [vmem:[%s238 + $0x70] sm:$0xff]
  %v1870 = vld [vmem:[%s238 + $0x78] sm:$0xff]
  %v1871 = vld [vmem:[%s238 + $0x80] sm:$0xff]
  %v1872 = vld [vmem:[%s238 + $0x88] sm:$0xff]
  %v1873 = vld [vmem:[%s238 + $0x90] sm:$0xff]
  %v1874 = vld [vmem:[%s238 + $0x98] sm:$0xff]
  %v1875 = vld [vmem:[%s238 + $0xa0] sm:$0xff]
  %v1876 = vld [vmem:[%s238 + $0xa8] sm:$0xff]
  %v1877 = vld [vmem:[%s238 + $0xb0] sm:$0xff]
  %v1878 = vld [vmem:[%s238 + $0xb8] sm:$0xff]
  %v1879 = vld [vmem:[%s238 + $0xc0] sm:$0xff]
  %v1880 = vld [vmem:[%s238 + $0xc8] sm:$0xff]
  %v1881 = vld [vmem:[%s238 + $0xd0] sm:$0xff]
  %v1882 = vld [vmem:[%s238 + $0xd8] sm:$0xff]
  %v1883 = vld [vmem:[%s238 + $0xe0] sm:$0xff]
  %v1884 = vld [vmem:[%s238 + $0xe8] sm:$0xff]
  %v1885 = vld [vmem:[%s238 + $0xf0] sm:$0xff]
  %v1886 = vld [vmem:[%s238 + $0xf8] sm:$0xff]
  %s1887 = scalar_lea.vmem %s1, 4
  %v1888 = vld [vmem:[%s1887] sm:$0x3]
  %v1890 = vlaneseq
  %v1891 = vshrl.u32 %v1890, 7
  %v1892 = vsub.s32 0, %v1891
  %v1893 = vrot.slane %v1888, %v1892
  %v1894 = vlaneseq
  %v1895 = vshrl.u32 %v1894, 7
  %v1896 = vsub.s32 1, %v1895
  %v1897 = vrot.slane %v1888, %v1896
  %v1900 = vadd.f32 %v1300, 0.0
  %1901 = vmatprep.subr.mxu0 %v1886
  %1902 = vmatpush1.msra.mxu0 %v1885
  %1903 = vmatprep.subr.mxu0 %v1884
  %1904 = vmatpush1.msra.mxu0 %v1883
  %1905 = vmatprep.subr.mxu0 %v1882
  %1906 = vmatpush1.msra.mxu0 %v1881
  %1907 = vmatprep.subr.mxu0 %v1880
  %1908 = vmatpush1.msra.mxu0 %v1879
  %1909 = vmatprep.subr.mxu0 %v1878
  %1910 = vmatpush1.msra.mxu0 %v1877
  %1911 = vmatprep.subr.mxu0 %v1876
  %1912 = vmatpush1.msra.mxu0 %v1875
  %1913 = vmatprep.subr.mxu0 %v1874
  %1914 = vmatpush1.msra.mxu0 %v1873
  %1915 = vmatprep.subr.mxu0 %v1872
  %1916 = vmatpush1.msra.mxu0 %v1871
  %1917 = vmatprep.subr.mxu0 %v1870
  %1918 = vmatpush1.msra.mxu0 %v1869
  %1919 = vmatprep.subr.mxu0 %v1868
  %1920 = vmatpush1.msra.mxu0 %v1867
  %1921 = vmatprep.subr.mxu0 %v1866
  %1922 = vmatpush1.msra.mxu0 %v1865
  %1923 = vmatprep.subr.mxu0 %v1864
  %1924 = vmatpush1.msra.mxu0 %v1863
  %1925 = vmatprep.subr.mxu0 %v1862
  %1926 = vmatpush1.msra.mxu0 %v1861
  %1927 = vmatprep.subr.mxu0 %v1860
  %1928 = vmatpush1.msra.mxu0 %v1859
  %1929 = vmatprep.subr.mxu0 %v1858
  %1930 = vmatpush1.msra.mxu0 %v1857
  %1931 = vmatprep.subr.mxu0 %v1856
  %1932 = vmatpush1.msra.mxu0 %v1855
  %1933 = vmatprep.subr.mxu0 0.0
  %1934 = vmatpush2.msra.mxu0 0.0
  %1935 = vmatprep.subr.mxu0 0.0
  %1936 = vmatpush2.msra.mxu0 0.0
  %1937 = vmatprep.subr.mxu0 0.0
  %1938 = vmatpush2.msra.mxu0 0.0
  %1939 = vmatprep.subr.mxu0 0.0
  %1940 = vmatpush2.msra.mxu0 0.0
  %1941 = vmatprep.subr.mxu0 0.0
  %1942 = vmatpush2.msra.mxu0 0.0
  %1943 = vmatprep.subr.mxu0 0.0
  %1944 = vmatpush2.msra.mxu0 0.0
  %1945 = vmatprep.subr.mxu0 0.0
  %1946 = vmatpush2.msra.mxu0 0.0
  %1947 = vmatprep.subr.mxu0 0.0
  %1948 = vmatpush2.msra.mxu0 0.0
  %1949 = vmatprep.subr.mxu0 0.0
  %1950 = vmatpush2.msra.mxu0 0.0
  %1951 = vmatprep.subr.mxu0 0.0
  %1952 = vmatpush2.msra.mxu0 0.0
  %1953 = vmatprep.subr.mxu0 0.0
  %1954 = vmatpush2.msra.mxu0 0.0
  %1955 = vmatprep.subr.mxu0 0.0
  %1956 = vmatpush2.msra.mxu0 0.0
  %1957 = vmatprep.subr.mxu0 0.0
  %1958 = vmatpush2.msra.mxu0 0.0
  %1959 = vmatprep.subr.mxu0 0.0
  %1960 = vmatpush2.msra.mxu0 0.0
  %1961 = vmatprep.subr.mxu0 0.0
  %1962 = vmatpush2.msra.mxu0 0.0
  %1963 = vmatprep.subr.mxu0 0.0
  %1964 = vmatpush2.msra.mxu0 0.0
  %1965 = vmatprep.mubr.f32.mxu0 0.0
  %1966 = vmatmul.mubr.f32.gmra.mxu0 %v1900
  %v1967 = vpop.f32.mrf.mxu0
  %v1968 = vadd.f32 %v1893, %v1967
  %v1969 = vpop.f32.mrf.mxu0
  %v1970 = vadd.f32 %v1897, %v1969
  %1971 = vdwg.mxu0
  %v1972 = vxor.u32 %v1968, 2147483648
  %v1973 = vmul.f32 %v1972, 1.442695
  %v1974 = vpow.pop %v1973
  %v1975 = vadd.f32 %v1974, 1.0
  %v1976 = vrcp.pop %v1975
  %v1977 = vmul.f32 1.0, %v1976
  %1978 = vrot.lane.b32.xlu0 %v1970, 64
  %v1979 = vpop.permute.xlu0 %1978
  %v1980 = vmul.f32 %v1977, %v1970
  %v1981 = vadd.f32 %v1980, %v1979
  %v1982 = vtanh.pop %v1981
  %1983 = vrot.lane.b32.xlu0 %v1977, 64
  %v1984 = vpop.permute.xlu0 %1983
  %v1985 = vsub.f32 1.0, %v1984
  %v1986 = vmul.f32 %v456, %v1985
  %v1987 = vmul.f32 %v1986, %v1982
  %v1988 = vmul.f32 %v1984, 0.0
  %v1989 = vadd.f32 %v1987, %v1988
  %1990 = vrot.lane.b32.xlu0 %v1989, 64
  %v1991 = vpop.permute.xlu0 %1990
  %v1992 = vadd.f32 %v1989, %v1392
  %1993 = vmatprep.subr.mxu0 %v1886
  %1994 = vmatpush1.msra.mxu0 %v1885
  %1995 = vmatprep.subr.mxu0 %v1884
  %1996 = vmatpush1.msra.mxu0 %v1883
  %1997 = vmatprep.subr.mxu0 %v1882
  %1998 = vmatpush1.msra.mxu0 %v1881
  %1999 = vmatprep.subr.mxu0 %v1880
  %2000 = vmatpush1.msra.mxu0 %v1879
  %2001 = vmatprep.subr.mxu0 %v1878
  %2002 = vmatpush1.msra.mxu0 %v1877
  %2003 = vmatprep.subr.mxu0 %v1876
  %2004 = vmatpush1.msra.mxu0 %v1875
  %2005 = vmatprep.subr.mxu0 %v1874
  %2006 = vmatpush1.msra.mxu0 %v1873
  %2007 = vmatprep.subr.mxu0 %v1872
  %2008 = vmatpush1.msra.mxu0 %v1871
  %2009 = vmatprep.subr.mxu0 %v1870
  %2010 = vmatpush1.msra.mxu0 %v1869
  %2011 = vmatprep.subr.mxu0 %v1868
  %2012 = vmatpush1.msra.mxu0 %v1867
  %2013 = vmatprep.subr.mxu0 %v1866
  %2014 = vmatpush1.msra.mxu0 %v1865
  %2015 = vmatprep.subr.mxu0 %v1864
  %2016 = vmatpush1.msra.mxu0 %v1863
  %2017 = vmatprep.subr.mxu0 %v1862
  %2018 = vmatpush1.msra.mxu0 %v1861
  %2019 = vmatprep.subr.mxu0 %v1860
  %2020 = vmatpush1.msra.mxu0 %v1859
  %2021 = vmatprep.subr.mxu0 %v1858
  %2022 = vmatpush1.msra.mxu0 %v1857
  %2023 = vmatprep.subr.mxu0 %v1856
  %2024 = vmatpush1.msra.mxu0 %v1855
  %2025 = vmatprep.subr.mxu0 0.0
  %2026 = vmatpush2.msra.mxu0 0.0
  %2027 = vmatprep.subr.mxu0 0.0
  %2028 = vmatpush2.msra.mxu0 0.0
  %2029 = vmatprep.subr.mxu0 0.0
  %2030 = vmatpush2.msra.mxu0 0.0
  %2031 = vmatprep.subr.mxu0 0.0
  %2032 = vmatpush2.msra.mxu0 0.0
  %2033 = vmatprep.subr.mxu0 0.0
  %2034 = vmatpush2.msra.mxu0 0.0
  %2035 = vmatprep.subr.mxu0 0.0
  %2036 = vmatpush2.msra.mxu0 0.0
  %2037 = vmatprep.subr.mxu0 0.0
  %2038 = vmatpush2.msra.mxu0 0.0
  %2039 = vmatprep.subr.mxu0 0.0
  %2040 = vmatpush2.msra.mxu0 0.0
  %2041 = vmatprep.subr.mxu0 0.0
  %2042 = vmatpush2.msra.mxu0 0.0
  %2043 = vmatprep.subr.mxu0 0.0
  %2044 = vmatpush2.msra.mxu0 0.0
  %2045 = vmatprep.subr.mxu0 0.0
  %2046 = vmatpush2.msra.mxu0 0.0
  %2047 = vmatprep.subr.mxu0 0.0
  %2048 = vmatpush2.msra.mxu0 0.0
  %2049 = vmatprep.subr.mxu0 0.0
  %2050 = vmatpush2.msra.mxu0 0.0
  %2051 = vmatprep.subr.mxu0 0.0
  %2052 = vmatpush2.msra.mxu0 0.0
  %2053 = vmatprep.subr.mxu0 0.0
  %2054 = vmatpush2.msra.mxu0 0.0
  %2055 = vmatprep.subr.mxu0 0.0
  %2056 = vmatpush2.msra.mxu0 0.0
  %2057 = vmatprep.mubr.f32.mxu0 0.0
  %2058 = vmatmul.mubr.f32.gmra.mxu0 %v1992
  %v2059 = vpop.f32.mrf.mxu0
  %v2060 = vadd.f32 %v1893, %v2059
  %v2061 = vpop.f32.mrf.mxu0
  %v2062 = vadd.f32 %v1897, %v2061
  %2063 = vdwg.mxu0
  %v2064 = vxor.u32 %v2060, 2147483648
  %v2065 = vmul.f32 %v2064, 1.442695
  %v2066 = vpow.pop %v2065
  %v2067 = vadd.f32 %v2066, 1.0
  %v2068 = vrcp.pop %v2067
  %v2069 = vmul.f32 1.0, %v2068
  %2070 = vrot.lane.b32.xlu0 %v2062, 64
  %v2071 = vpop.permute.xlu0 %2070
  %v2072 = vmul.f32 %v2069, %v2062
  %v2073 = vadd.f32 %v2072, %v2071
  %v2074 = vtanh.pop %v2073
  %2075 = vrot.lane.b32.xlu0 %v2069, 64
  %v2076 = vpop.permute.xlu0 %2075
  %v2077 = vsub.f32 1.0, %v2076
  %v2078 = vmul.f32 %v456, %v2077
  %v2079 = vmul.f32 %v2078, %v2074
  %v2080 = vmul.f32 %v2076, %v1989
  %v2081 = vadd.f32 %v2079, %v2080
  %2082 = vrot.lane.b32.xlu0 %v2081, 64
  %v2083 = vpop.permute.xlu0 %2082
  %v2084 = vadd.f32 %v2081, %v1484
  %2085 = vmatprep.subr.mxu0 %v1886
  %2086 = vmatpush1.msra.mxu0 %v1885
  %2087 = vmatprep.subr.mxu0 %v1884
  %2088 = vmatpush1.msra.mxu0 %v1883
  %2089 = vmatprep.subr.mxu0 %v1882
  %2090 = vmatpush1.msra.mxu0 %v1881
  %2091 = vmatprep.subr.mxu0 %v1880
  %2092 = vmatpush1.msra.mxu0 %v1879
  %2093 = vmatprep.subr.mxu0 %v1878
  %2094 = vmatpush1.msra.mxu0 %v1877
  %2095 = vmatprep.subr.mxu0 %v1876
  %2096 = vmatpush1.msra.mxu0 %v1875
  %2097 = vmatprep.subr.mxu0 %v1874
  %2098 = vmatpush1.msra.mxu0 %v1873
  %2099 = vmatprep.subr.mxu0 %v1872
  %2100 = vmatpush1.msra.mxu0 %v1871
  %2101 = vmatprep.subr.mxu0 %v1870
  %2102 = vmatpush1.msra.mxu0 %v1869
  %2103 = vmatprep.subr.mxu0 %v1868
  %2104 = vmatpush1.msra.mxu0 %v1867
  %2105 = vmatprep.subr.mxu0 %v1866
  %2106 = vmatpush1.msra.mxu0 %v1865
  %2107 = vmatprep.subr.mxu0 %v1864
  %2108 = vmatpush1.msra.mxu0 %v1863
  %2109 = vmatprep.subr.mxu0 %v1862
  %2110 = vmatpush1.msra.mxu0 %v1861
  %2111 = vmatprep.subr.mxu0 %v1860
  %2112 = vmatpush1.msra.mxu0 %v1859
  %2113 = vmatprep.subr.mxu0 %v1858
  %2114 = vmatpush1.msra.mxu0 %v1857
  %2115 = vmatprep.subr.mxu0 %v1856
  %2116 = vmatpush1.msra.mxu0 %v1855
  %2117 = vmatprep.subr.mxu0 0.0
  %2118 = vmatpush2.msra.mxu0 0.0
  %2119 = vmatprep.subr.mxu0 0.0
  %2120 = vmatpush2.msra.mxu0 0.0
  %2121 = vmatprep.subr.mxu0 0.0
  %2122 = vmatpush2.msra.mxu0 0.0
  %2123 = vmatprep.subr.mxu0 0.0
  %2124 = vmatpush2.msra.mxu0 0.0
  %2125 = vmatprep.subr.mxu0 0.0
  %2126 = vmatpush2.msra.mxu0 0.0
  %2127 = vmatprep.subr.mxu0 0.0
  %2128 = vmatpush2.msra.mxu0 0.0
  %2129 = vmatprep.subr.mxu0 0.0
  %2130 = vmatpush2.msra.mxu0 0.0
  %2131 = vmatprep.subr.mxu0 0.0
  %2132 = vmatpush2.msra.mxu0 0.0
  %2133 = vmatprep.subr.mxu0 0.0
  %2134 = vmatpush2.msra.mxu0 0.0
  %2135 = vmatprep.subr.mxu0 0.0
  %2136 = vmatpush2.msra.mxu0 0.0
  %2137 = vmatprep.subr.mxu0 0.0
  %2138 = vmatpush2.msra.mxu0 0.0
  %2139 = vmatprep.subr.mxu0 0.0
  %2140 = vmatpush2.msra.mxu0 0.0
  %2141 = vmatprep.subr.mxu0 0.0
  %2142 = vmatpush2.msra.mxu0 0.0
  %2143 = vmatprep.subr.mxu0 0.0
  %2144 = vmatpush2.msra.mxu0 0.0
  %2145 = vmatprep.subr.mxu0 0.0
  %2146 = vmatpush2.msra.mxu0 0.0
  %2147 = vmatprep.subr.mxu0 0.0
  %2148 = vmatpush2.msra.mxu0 0.0
  %2149 = vmatprep.mubr.f32.mxu0 0.0
  %2150 = vmatmul.mubr.f32.gmra.mxu0 %v2084
  %v2151 = vpop.f32.mrf.mxu0
  %v2152 = vadd.f32 %v1893, %v2151
  %v2153 = vpop.f32.mrf.mxu0
  %v2154 = vadd.f32 %v1897, %v2153
  %2155 = vdwg.mxu0
  %v2156 = vxor.u32 %v2152, 2147483648
  %v2157 = vmul.f32 %v2156, 1.442695
  %v2158 = vpow.pop %v2157
  %v2159 = vadd.f32 %v2158, 1.0
  %v2160 = vrcp.pop %v2159
  %v2161 = vmul.f32 1.0, %v2160
  %2162 = vrot.lane.b32.xlu0 %v2154, 64
  %v2163 = vpop.permute.xlu0 %2162
  %v2164 = vmul.f32 %v2161, %v2154
  %v2165 = vadd.f32 %v2164, %v2163
  %v2166 = vtanh.pop %v2165
  %2167 = vrot.lane.b32.xlu0 %v2161, 64
  %v2168 = vpop.permute.xlu0 %2167
  %v2169 = vsub.f32 1.0, %v2168
  %v2170 = vmul.f32 %v456, %v2169
  %v2171 = vmul.f32 %v2170, %v2166
  %v2172 = vmul.f32 %v2168, %v2081
  %v2173 = vadd.f32 %v2171, %v2172
  %2174 = vrot.lane.b32.xlu0 %v2173, 64
  %v2175 = vpop.permute.xlu0 %2174
  %v2176 = vadd.f32 %v2173, %v1576
  %2177 = vmatprep.subr.mxu0 %v1886
  %2178 = vmatpush1.msra.mxu0 %v1885
  %2179 = vmatprep.subr.mxu0 %v1884
  %2180 = vmatpush1.msra.mxu0 %v1883
  %2181 = vmatprep.subr.mxu0 %v1882
  %2182 = vmatpush1.msra.mxu0 %v1881
  %2183 = vmatprep.subr.mxu0 %v1880
  %2184 = vmatpush1.msra.mxu0 %v1879
  %2185 = vmatprep.subr.mxu0 %v1878
  %2186 = vmatpush1.msra.mxu0 %v1877
  %2187 = vmatprep.subr.mxu0 %v1876
  %2188 = vmatpush1.msra.mxu0 %v1875
  %2189 = vmatprep.subr.mxu0 %v1874
  %2190 = vmatpush1.msra.mxu0 %v1873
  %2191 = vmatprep.subr.mxu0 %v1872
  %2192 = vmatpush1.msra.mxu0 %v1871
  %2193 = vmatprep.subr.mxu0 %v1870
  %2194 = vmatpush1.msra.mxu0 %v1869
  %2195 = vmatprep.subr.mxu0 %v1868
  %2196 = vmatpush1.msra.mxu0 %v1867
  %2197 = vmatprep.subr.mxu0 %v1866
  %2198 = vmatpush1.msra.mxu0 %v1865
  %2199 = vmatprep.subr.mxu0 %v1864
  %2200 = vmatpush1.msra.mxu0 %v1863
  %2201 = vmatprep.subr.mxu0 %v1862
  %2202 = vmatpush1.msra.mxu0 %v1861
  %2203 = vmatprep.subr.mxu0 %v1860
  %2204 = vmatpush1.msra.mxu0 %v1859
  %2205 = vmatprep.subr.mxu0 %v1858
  %2206 = vmatpush1.msra.mxu0 %v1857
  %2207 = vmatprep.subr.mxu0 %v1856
  %2208 = vmatpush1.msra.mxu0 %v1855
  %2209 = vmatprep.subr.mxu0 0.0
  %2210 = vmatpush2.msra.mxu0 0.0
  %2211 = vmatprep.subr.mxu0 0.0
  %2212 = vmatpush2.msra.mxu0 0.0
  %2213 = vmatprep.subr.mxu0 0.0
  %2214 = vmatpush2.msra.mxu0 0.0
  %2215 = vmatprep.subr.mxu0 0.0
  %2216 = vmatpush2.msra.mxu0 0.0
  %2217 = vmatprep.subr.mxu0 0.0
  %2218 = vmatpush2.msra.mxu0 0.0
  %2219 = vmatprep.subr.mxu0 0.0
  %2220 = vmatpush2.msra.mxu0 0.0
  %2221 = vmatprep.subr.mxu0 0.0
  %2222 = vmatpush2.msra.mxu0 0.0
  %2223 = vmatprep.subr.mxu0 0.0
  %2224 = vmatpush2.msra.mxu0 0.0
  %2225 = vmatprep.subr.mxu0 0.0
  %2226 = vmatpush2.msra.mxu0 0.0
  %2227 = vmatprep.subr.mxu0 0.0
  %2228 = vmatpush2.msra.mxu0 0.0
  %2229 = vmatprep.subr.mxu0 0.0
  %2230 = vmatpush2.msra.mxu0 0.0
  %2231 = vmatprep.subr.mxu0 0.0
  %2232 = vmatpush2.msra.mxu0 0.0
  %2233 = vmatprep.subr.mxu0 0.0
  %2234 = vmatpush2.msra.mxu0 0.0
  %2235 = vmatprep.subr.mxu0 0.0
  %2236 = vmatpush2.msra.mxu0 0.0
  %2237 = vmatprep.subr.mxu0 0.0
  %2238 = vmatpush2.msra.mxu0 0.0
  %2239 = vmatprep.subr.mxu0 0.0
  %2240 = vmatpush2.msra.mxu0 0.0
  %2241 = vmatprep.mubr.f32.mxu0 0.0
  %2242 = vmatmul.mubr.f32.gmra.mxu0 %v2176
  %v2243 = vpop.f32.mrf.mxu0
  %v2244 = vadd.f32 %v1893, %v2243
  %v2245 = vpop.f32.mrf.mxu0
  %v2246 = vadd.f32 %v1897, %v2245
  %2247 = vdwg.mxu0
  %v2248 = vxor.u32 %v2244, 2147483648
  %v2249 = vmul.f32 %v2248, 1.442695
  %v2250 = vpow.pop %v2249
  %v2251 = vadd.f32 %v2250, 1.0
  %v2252 = vrcp.pop %v2251
  %v2253 = vmul.f32 1.0, %v2252
  %2254 = vrot.lane.b32.xlu0 %v2246, 64
  %v2255 = vpop.permute.xlu0 %2254
  %v2256 = vmul.f32 %v2253, %v2246
  %v2257 = vadd.f32 %v2256, %v2255
  %v2258 = vtanh.pop %v2257
  %2259 = vrot.lane.b32.xlu0 %v2253, 64
  %v2260 = vpop.permute.xlu0 %2259
  %v2261 = vsub.f32 1.0, %v2260
  %v2262 = vmul.f32 %v456, %v2261
  %v2263 = vmul.f32 %v2262, %v2258
  %v2264 = vmul.f32 %v2260, %v2173
  %v2265 = vadd.f32 %v2263, %v2264
  %2266 = vrot.lane.b32.xlu0 %v2265, 64
  %v2267 = vpop.permute.xlu0 %2266
  %v2268 = vadd.f32 %v2265, %v1668
  %2269 = vmatprep.subr.mxu0 %v1886
  %2270 = vmatpush1.msra.mxu0 %v1885
  %2271 = vmatprep.subr.mxu0 %v1884
  %2272 = vmatpush1.msra.mxu0 %v1883
  %2273 = vmatprep.subr.mxu0 %v1882
  %2274 = vmatpush1.msra.mxu0 %v1881
  %2275 = vmatprep.subr.mxu0 %v1880
  %2276 = vmatpush1.msra.mxu0 %v1879
  %2277 = vmatprep.subr.mxu0 %v1878
  %2278 = vmatpush1.msra.mxu0 %v1877
  %2279 = vmatprep.subr.mxu0 %v1876
  %2280 = vmatpush1.msra.mxu0 %v1875
  %2281 = vmatprep.subr.mxu0 %v1874
  %2282 = vmatpush1.msra.mxu0 %v1873
  %2283 = vmatprep.subr.mxu0 %v1872
  %2284 = vmatpush1.msra.mxu0 %v1871
  %2285 = vmatprep.subr.mxu0 %v1870
  %2286 = vmatpush1.msra.mxu0 %v1869
  %2287 = vmatprep.subr.mxu0 %v1868
  %2288 = vmatpush1.msra.mxu0 %v1867
  %2289 = vmatprep.subr.mxu0 %v1866
  %2290 = vmatpush1.msra.mxu0 %v1865
  %2291 = vmatprep.subr.mxu0 %v1864
  %2292 = vmatpush1.msra.mxu0 %v1863
  %2293 = vmatprep.subr.mxu0 %v1862
  %2294 = vmatpush1.msra.mxu0 %v1861
  %2295 = vmatprep.subr.mxu0 %v1860
  %2296 = vmatpush1.msra.mxu0 %v1859
  %2297 = vmatprep.subr.mxu0 %v1858
  %2298 = vmatpush1.msra.mxu0 %v1857
  %2299 = vmatprep.subr.mxu0 %v1856
  %2300 = vmatpush1.msra.mxu0 %v1855
  %2301 = vmatprep.subr.mxu0 0.0
  %2302 = vmatpush2.msra.mxu0 0.0
  %2303 = vmatprep.subr.mxu0 0.0
  %2304 = vmatpush2.msra.mxu0 0.0
  %2305 = vmatprep.subr.mxu0 0.0
  %2306 = vmatpush2.msra.mxu0 0.0
  %2307 = vmatprep.subr.mxu0 0.0
  %2308 = vmatpush2.msra.mxu0 0.0
  %2309 = vmatprep.subr.mxu0 0.0
  %2310 = vmatpush2.msra.mxu0 0.0
  %2311 = vmatprep.subr.mxu0 0.0
  %2312 = vmatpush2.msra.mxu0 0.0
  %2313 = vmatprep.subr.mxu0 0.0
  %2314 = vmatpush2.msra.mxu0 0.0
  %2315 = vmatprep.subr.mxu0 0.0
  %2316 = vmatpush2.msra.mxu0 0.0
  %2317 = vmatprep.subr.mxu0 0.0
  %2318 = vmatpush2.msra.mxu0 0.0
  %2319 = vmatprep.subr.mxu0 0.0
  %2320 = vmatpush2.msra.mxu0 0.0
  %2321 = vmatprep.subr.mxu0 0.0
  %2322 = vmatpush2.msra.mxu0 0.0
  %2323 = vmatprep.subr.mxu0 0.0
  %2324 = vmatpush2.msra.mxu0 0.0
  %2325 = vmatprep.subr.mxu0 0.0
  %2326 = vmatpush2.msra.mxu0 0.0
  %2327 = vmatprep.subr.mxu0 0.0
  %2328 = vmatpush2.msra.mxu0 0.0
  %2329 = vmatprep.subr.mxu0 0.0
  %2330 = vmatpush2.msra.mxu0 0.0
  %2331 = vmatprep.subr.mxu0 0.0
  %2332 = vmatpush2.msra.mxu0 0.0
  %2333 = vmatprep.mubr.f32.mxu0 0.0
  %2334 = vmatmul.mubr.f32.gmra.mxu0 %v2268
  %v2335 = vpop.f32.mrf.mxu0
  %v2336 = vadd.f32 %v1893, %v2335
  %v2337 = vpop.f32.mrf.mxu0
  %v2338 = vadd.f32 %v1897, %v2337
  %2339 = vdwg.mxu0
  %v2340 = vxor.u32 %v2336, 2147483648
  %v2341 = vmul.f32 %v2340, 1.442695
  %v2342 = vpow.pop %v2341
  %v2343 = vadd.f32 %v2342, 1.0
  %v2344 = vrcp.pop %v2343
  %v2345 = vmul.f32 1.0, %v2344
  %2346 = vrot.lane.b32.xlu0 %v2338, 64
  %v2347 = vpop.permute.xlu0 %2346
  %v2348 = vmul.f32 %v2345, %v2338
  %v2349 = vadd.f32 %v2348, %v2347
  %v2350 = vtanh.pop %v2349
  %2351 = vrot.lane.b32.xlu0 %v2345, 64
  %v2352 = vpop.permute.xlu0 %2351
  %v2353 = vsub.f32 1.0, %v2352
  %v2354 = vmul.f32 %v456, %v2353
  %v2355 = vmul.f32 %v2354, %v2350
  %v2356 = vmul.f32 %v2352, %v2265
  %v2357 = vadd.f32 %v2355, %v2356
  %2358 = vrot.lane.b32.xlu0 %v2357, 64
  %v2359 = vpop.permute.xlu0 %2358
  %v2360 = vadd.f32 %v2357, %v1760
  %2361 = vmatprep.subr.mxu0 %v1886
  %2362 = vmatpush1.msra.mxu0 %v1885
  %2363 = vmatprep.subr.mxu0 %v1884
  %2364 = vmatpush1.msra.mxu0 %v1883
  %2365 = vmatprep.subr.mxu0 %v1882
  %2366 = vmatpush1.msra.mxu0 %v1881
  %2367 = vmatprep.subr.mxu0 %v1880
  %2368 = vmatpush1.msra.mxu0 %v1879
  %2369 = vmatprep.subr.mxu0 %v1878
  %2370 = vmatpush1.msra.mxu0 %v1877
  %2371 = vmatprep.subr.mxu0 %v1876
  %2372 = vmatpush1.msra.mxu0 %v1875
  %2373 = vmatprep.subr.mxu0 %v1874
  %2374 = vmatpush1.msra.mxu0 %v1873
  %2375 = vmatprep.subr.mxu0 %v1872
  %2376 = vmatpush1.msra.mxu0 %v1871
  %2377 = vmatprep.subr.mxu0 %v1870
  %2378 = vmatpush1.msra.mxu0 %v1869
  %2379 = vmatprep.subr.mxu0 %v1868
  %2380 = vmatpush1.msra.mxu0 %v1867
  %2381 = vmatprep.subr.mxu0 %v1866
  %2382 = vmatpush1.msra.mxu0 %v1865
  %2383 = vmatprep.subr.mxu0 %v1864
  %2384 = vmatpush1.msra.mxu0 %v1863
  %2385 = vmatprep.subr.mxu0 %v1862
  %2386 = vmatpush1.msra.mxu0 %v1861
  %2387 = vmatprep.subr.mxu0 %v1860
  %2388 = vmatpush1.msra.mxu0 %v1859
  %2389 = vmatprep.subr.mxu0 %v1858
  %2390 = vmatpush1.msra.mxu0 %v1857
  %2391 = vmatprep.subr.mxu0 %v1856
  %2392 = vmatpush1.msra.mxu0 %v1855
  %2393 = vmatprep.subr.mxu0 0.0
  %2394 = vmatpush2.msra.mxu0 0.0
  %2395 = vmatprep.subr.mxu0 0.0
  %2396 = vmatpush2.msra.mxu0 0.0
  %2397 = vmatprep.subr.mxu0 0.0
  %2398 = vmatpush2.msra.mxu0 0.0
  %2399 = vmatprep.subr.mxu0 0.0
  %2400 = vmatpush2.msra.mxu0 0.0
  %2401 = vmatprep.subr.mxu0 0.0
  %2402 = vmatpush2.msra.mxu0 0.0
  %2403 = vmatprep.subr.mxu0 0.0
  %2404 = vmatpush2.msra.mxu0 0.0
  %2405 = vmatprep.subr.mxu0 0.0
  %2406 = vmatpush2.msra.mxu0 0.0
  %2407 = vmatprep.subr.mxu0 0.0
  %2408 = vmatpush2.msra.mxu0 0.0
  %2409 = vmatprep.subr.mxu0 0.0
  %2410 = vmatpush2.msra.mxu0 0.0
  %2411 = vmatprep.subr.mxu0 0.0
  %2412 = vmatpush2.msra.mxu0 0.0
  %2413 = vmatprep.subr.mxu0 0.0
  %2414 = vmatpush2.msra.mxu0 0.0
  %2415 = vmatprep.subr.mxu0 0.0
  %2416 = vmatpush2.msra.mxu0 0.0
  %2417 = vmatprep.subr.mxu0 0.0
  %2418 = vmatpush2.msra.mxu0 0.0
  %2419 = vmatprep.subr.mxu0 0.0
  %2420 = vmatpush2.msra.mxu0 0.0
  %2421 = vmatprep.subr.mxu0 0.0
  %2422 = vmatpush2.msra.mxu0 0.0
  %2423 = vmatprep.subr.mxu0 0.0
  %2424 = vmatpush2.msra.mxu0 0.0
  %2425 = vmatprep.mubr.f32.mxu0 0.0
  %2426 = vmatmul.mubr.f32.gmra.mxu0 %v2360
  %v2427 = vpop.f32.mrf.mxu0
  %v2428 = vadd.f32 %v1893, %v2427
  %v2429 = vpop.f32.mrf.mxu0
  %v2430 = vadd.f32 %v1897, %v2429
  %2431 = vdwg.mxu0
  %v2432 = vxor.u32 %v2428, 2147483648
  %v2433 = vmul.f32 %v2432, 1.442695
  %v2434 = vpow.pop %v2433
  %v2435 = vadd.f32 %v2434, 1.0
  %v2436 = vrcp.pop %v2435
  %v2437 = vmul.f32 1.0, %v2436
  %2438 = vrot.lane.b32.xlu0 %v2430, 64
  %v2439 = vpop.permute.xlu0 %2438
  %v2440 = vmul.f32 %v2437, %v2430
  %v2441 = vadd.f32 %v2440, %v2439
  %v2442 = vtanh.pop %v2441
  %2443 = vrot.lane.b32.xlu0 %v2437, 64
  %v2444 = vpop.permute.xlu0 %2443
  %v2445 = vsub.f32 1.0, %v2444
  %v2446 = vmul.f32 %v456, %v2445
  %v2447 = vmul.f32 %v2446, %v2442
  %v2448 = vmul.f32 %v2444, %v2357
  %v2449 = vadd.f32 %v2447, %v2448
  %2450 = vrot.lane.b32.xlu0 %v2449, 64
  %v2451 = vpop.permute.xlu0 %2450
  %v2452 = vadd.f32 %v2449, %v1852
  %2453 = vmatprep.subr.mxu0 %v1886
  %2454 = vmatpush1.msra.mxu0 %v1885
  %2455 = vmatprep.subr.mxu0 %v1884
  %2456 = vmatpush1.msra.mxu0 %v1883
  %2457 = vmatprep.subr.mxu0 %v1882
  %2458 = vmatpush1.msra.mxu0 %v1881
  %2459 = vmatprep.subr.mxu0 %v1880
  %2460 = vmatpush1.msra.mxu0 %v1879
  %2461 = vmatprep.subr.mxu0 %v1878
  %2462 = vmatpush1.msra.mxu0 %v1877
  %2463 = vmatprep.subr.mxu0 %v1876
  %2464 = vmatpush1.msra.mxu0 %v1875
  %2465 = vmatprep.subr.mxu0 %v1874
  %2466 = vmatpush1.msra.mxu0 %v1873
  %2467 = vmatprep.subr.mxu0 %v1872
  %2468 = vmatpush1.msra.mxu0 %v1871
  %2469 = vmatprep.subr.mxu0 %v1870
  %2470 = vmatpush1.msra.mxu0 %v1869
  %2471 = vmatprep.subr.mxu0 %v1868
  %2472 = vmatpush1.msra.mxu0 %v1867
  %2473 = vmatprep.subr.mxu0 %v1866
  %2474 = vmatpush1.msra.mxu0 %v1865
  %2475 = vmatprep.subr.mxu0 %v1864
  %2476 = vmatpush1.msra.mxu0 %v1863
  %2477 = vmatprep.subr.mxu0 %v1862
  %2478 = vmatpush1.msra.mxu0 %v1861
  %2479 = vmatprep.subr.mxu0 %v1860
  %2480 = vmatpush1.msra.mxu0 %v1859
  %2481 = vmatprep.subr.mxu0 %v1858
  %2482 = vmatpush1.msra.mxu0 %v1857
  %2483 = vmatprep.subr.mxu0 %v1856
  %2484 = vmatpush1.msra.mxu0 %v1855
  %2485 = vmatprep.subr.mxu0 0.0
  %2486 = vmatpush2.msra.mxu0 0.0
  %2487 = vmatprep.subr.mxu0 0.0
  %2488 = vmatpush2.msra.mxu0 0.0
  %2489 = vmatprep.subr.mxu0 0.0
  %2490 = vmatpush2.msra.mxu0 0.0
  %2491 = vmatprep.subr.mxu0 0.0
  %2492 = vmatpush2.msra.mxu0 0.0
  %2493 = vmatprep.subr.mxu0 0.0
  %2494 = vmatpush2.msra.mxu0 0.0
  %2495 = vmatprep.subr.mxu0 0.0
  %2496 = vmatpush2.msra.mxu0 0.0
  %2497 = vmatprep.subr.mxu0 0.0
  %2498 = vmatpush2.msra.mxu0 0.0
  %2499 = vmatprep.subr.mxu0 0.0
  %2500 = vmatpush2.msra.mxu0 0.0
  %2501 = vmatprep.subr.mxu0 0.0
  %2502 = vmatpush2.msra.mxu0 0.0
  %2503 = vmatprep.subr.mxu0 0.0
  %2504 = vmatpush2.msra.mxu0 0.0
  %2505 = vmatprep.subr.mxu0 0.0
  %2506 = vmatpush2.msra.mxu0 0.0
  %2507 = vmatprep.subr.mxu0 0.0
  %2508 = vmatpush2.msra.mxu0 0.0
  %2509 = vmatprep.subr.mxu0 0.0
  %2510 = vmatpush2.msra.mxu0 0.0
  %2511 = vmatprep.subr.mxu0 0.0
  %2512 = vmatpush2.msra.mxu0 0.0
  %2513 = vmatprep.subr.mxu0 0.0
  %2514 = vmatpush2.msra.mxu0 0.0
  %2515 = vmatprep.subr.mxu0 0.0
  %2516 = vmatpush2.msra.mxu0 0.0
  %2517 = vmatprep.mubr.f32.mxu0 0.0
  %2518 = vmatmul.mubr.f32.gmra.mxu0 %v2452
  %v2519 = vpop.f32.mrf.mxu0
  %v2520 = vadd.f32 %v1893, %v2519
  %v2521 = vpop.f32.mrf.mxu0
  %v2522 = vadd.f32 %v1897, %v2521
  %2523 = vdwg.mxu0
  %v2524 = vxor.u32 %v2520, 2147483648
  %v2525 = vmul.f32 %v2524, 1.442695
  %v2526 = vpow.pop %v2525
  %v2527 = vadd.f32 %v2526, 1.0
  %v2528 = vrcp.pop %v2527
  %v2529 = vmul.f32 1.0, %v2528
  %2530 = vrot.lane.b32.xlu0 %v2522, 64
  %v2531 = vpop.permute.xlu0 %2530
  %v2532 = vmul.f32 %v2529, %v2522
  %v2533 = vadd.f32 %v2532, %v2531
  %v2534 = vtanh.pop %v2533
  %2535 = vrot.lane.b32.xlu0 %v2529, 64
  %v2536 = vpop.permute.xlu0 %2535
  %v2537 = vsub.f32 1.0, %v2536
  %v2538 = vmul.f32 %v456, %v2537
  %v2539 = vmul.f32 %v2538, %v2534
  %v2540 = vmul.f32 %v2536, %v2449
  %v2541 = vadd.f32 %v2539, %v2540
  %2542 = vrot.lane.b32.xlu0 %v2541, 64
  %v2543 = vpop.permute.xlu0 %2542
  %s2544 = sshll.u32 %s471, 4
  %2545 = dma.done %s347, %s2544
  %v2546 = vld [vmem:[%s346] sm:$0xff]
  %v2547 = vld [vmem:[%s346 + $0x8] sm:$0xff]
  %v2548 = vld [vmem:[%s346 + $0x10] sm:$0xff]
  %v2549 = vld [vmem:[%s346 + $0x18] sm:$0xff]
  %v2550 = vld [vmem:[%s346 + $0x20] sm:$0xff]
  %v2551 = vld [vmem:[%s346 + $0x28] sm:$0xff]
  %v2552 = vld [vmem:[%s346 + $0x30] sm:$0xff]
  %v2553 = vld [vmem:[%s346 + $0x38] sm:$0xff]
  %v2554 = vld [vmem:[%s346 + $0x40] sm:$0xff]
  %v2555 = vld [vmem:[%s346 + $0x48] sm:$0xff]
  %v2556 = vld [vmem:[%s346 + $0x50] sm:$0xff]
  %v2557 = vld [vmem:[%s346 + $0x58] sm:$0xff]
  %v2558 = vld [vmem:[%s346 + $0x60] sm:$0xff]
  %v2559 = vld [vmem:[%s346 + $0x68] sm:$0xff]
  %v2560 = vld [vmem:[%s346 + $0x70] sm:$0xff]
  %v2561 = vld [vmem:[%s346 + $0x78] sm:$0xff]
  %v2562 = vld [vmem:[%s346 + $0x80] sm:$0xff]
  %v2563 = vld [vmem:[%s346 + $0x88] sm:$0xff]
  %v2564 = vld [vmem:[%s346 + $0x90] sm:$0xff]
  %v2565 = vld [vmem:[%s346 + $0x98] sm:$0xff]
  %v2566 = vld [vmem:[%s346 + $0xa0] sm:$0xff]
  %v2567 = vld [vmem:[%s346 + $0xa8] sm:$0xff]
  %v2568 = vld [vmem:[%s346 + $0xb0] sm:$0xff]
  %v2569 = vld [vmem:[%s346 + $0xb8] sm:$0xff]
  %v2570 = vld [vmem:[%s346 + $0xc0] sm:$0xff]
  %v2571 = vld [vmem:[%s346 + $0xc8] sm:$0xff]
  %v2572 = vld [vmem:[%s346 + $0xd0] sm:$0xff]
  %v2573 = vld [vmem:[%s346 + $0xd8] sm:$0xff]
  %v2574 = vld [vmem:[%s346 + $0xe0] sm:$0xff]
  %v2575 = vld [vmem:[%s346 + $0xe8] sm:$0xff]
  %v2576 = vld [vmem:[%s346 + $0xf0] sm:$0xff]
  %v2577 = vld [vmem:[%s346 + $0xf8] sm:$0xff]
  %s2578 = scalar_lea.vmem %s1, 6
  %v2579 = vld [vmem:[%s2578] sm:$0x3]
  %v2581 = vlaneseq
  %v2582 = vshrl.u32 %v2581, 7
  %v2583 = vsub.s32 0, %v2582
  %v2584 = vrot.slane %v2579, %v2583
  %v2585 = vlaneseq
  %v2586 = vshrl.u32 %v2585, 7
  %v2587 = vsub.s32 1, %v2586
  %v2588 = vrot.slane %v2579, %v2587
  %v2591 = vadd.f32 %v1991, 0.0
  %2592 = vmatprep.subr.mxu0 %v2577
  %2593 = vmatpush1.msra.mxu0 %v2576
  %2594 = vmatprep.subr.mxu0 %v2575
  %2595 = vmatpush1.msra.mxu0 %v2574
  %2596 = vmatprep.subr.mxu0 %v2573
  %2597 = vmatpush1.msra.mxu0 %v2572
  %2598 = vmatprep.subr.mxu0 %v2571
  %2599 = vmatpush1.msra.mxu0 %v2570
  %2600 = vmatprep.subr.mxu0 %v2569
  %2601 = vmatpush1.msra.mxu0 %v2568
  %2602 = vmatprep.subr.mxu0 %v2567
  %2603 = vmatpush1.msra.mxu0 %v2566
  %2604 = vmatprep.subr.mxu0 %v2565
  %2605 = vmatpush1.msra.mxu0 %v2564
  %2606 = vmatprep.subr.mxu0 %v2563
  %2607 = vmatpush1.msra.mxu0 %v2562
  %2608 = vmatprep.subr.mxu0 %v2561
  %2609 = vmatpush1.msra.mxu0 %v2560
  %2610 = vmatprep.subr.mxu0 %v2559
  %2611 = vmatpush1.msra.mxu0 %v2558
  %2612 = vmatprep.subr.mxu0 %v2557
  %2613 = vmatpush1.msra.mxu0 %v2556
  %2614 = vmatprep.subr.mxu0 %v2555
  %2615 = vmatpush1.msra.mxu0 %v2554
  %2616 = vmatprep.subr.mxu0 %v2553
  %2617 = vmatpush1.msra.mxu0 %v2552
  %2618 = vmatprep.subr.mxu0 %v2551
  %2619 = vmatpush1.msra.mxu0 %v2550
  %2620 = vmatprep.subr.mxu0 %v2549
  %2621 = vmatpush1.msra.mxu0 %v2548
  %2622 = vmatprep.subr.mxu0 %v2547
  %2623 = vmatpush1.msra.mxu0 %v2546
  %2624 = vmatprep.subr.mxu0 0.0
  %2625 = vmatpush2.msra.mxu0 0.0
  %2626 = vmatprep.subr.mxu0 0.0
  %2627 = vmatpush2.msra.mxu0 0.0
  %2628 = vmatprep.subr.mxu0 0.0
  %2629 = vmatpush2.msra.mxu0 0.0
  %2630 = vmatprep.subr.mxu0 0.0
  %2631 = vmatpush2.msra.mxu0 0.0
  %2632 = vmatprep.subr.mxu0 0.0
  %2633 = vmatpush2.msra.mxu0 0.0
  %2634 = vmatprep.subr.mxu0 0.0
  %2635 = vmatpush2.msra.mxu0 0.0
  %2636 = vmatprep.subr.mxu0 0.0
  %2637 = vmatpush2.msra.mxu0 0.0
  %2638 = vmatprep.subr.mxu0 0.0
  %2639 = vmatpush2.msra.mxu0 0.0
  %2640 = vmatprep.subr.mxu0 0.0
  %2641 = vmatpush2.msra.mxu0 0.0
  %2642 = vmatprep.subr.mxu0 0.0
  %2643 = vmatpush2.msra.mxu0 0.0
  %2644 = vmatprep.subr.mxu0 0.0
  %2645 = vmatpush2.msra.mxu0 0.0
  %2646 = vmatprep.subr.mxu0 0.0
  %2647 = vmatpush2.msra.mxu0 0.0
  %2648 = vmatprep.subr.mxu0 0.0
  %2649 = vmatpush2.msra.mxu0 0.0
  %2650 = vmatprep.subr.mxu0 0.0
  %2651 = vmatpush2.msra.mxu0 0.0
  %2652 = vmatprep.subr.mxu0 0.0
  %2653 = vmatpush2.msra.mxu0 0.0
  %2654 = vmatprep.subr.mxu0 0.0
  %2655 = vmatpush2.msra.mxu0 0.0
  %2656 = vmatprep.mubr.f32.mxu0 0.0
  %2657 = vmatmul.mubr.f32.gmra.mxu0 %v2591
  %v2658 = vpop.f32.mrf.mxu0
  %v2659 = vadd.f32 %v2584, %v2658
  %v2660 = vpop.f32.mrf.mxu0
  %v2661 = vadd.f32 %v2588, %v2660
  %2662 = vdwg.mxu0
  %v2663 = vxor.u32 %v2659, 2147483648
  %v2664 = vmul.f32 %v2663, 1.442695
  %v2665 = vpow.pop %v2664
  %v2666 = vadd.f32 %v2665, 1.0
  %v2667 = vrcp.pop %v2666
  %v2668 = vmul.f32 1.0, %v2667
  %2669 = vrot.lane.b32.xlu0 %v2661, 64
  %v2670 = vpop.permute.xlu0 %2669
  %v2671 = vmul.f32 %v2668, %v2661
  %v2672 = vadd.f32 %v2671, %v2670
  %v2673 = vtanh.pop %v2672
  %2674 = vrot.lane.b32.xlu0 %v2668, 64
  %v2675 = vpop.permute.xlu0 %2674
  %v2676 = vsub.f32 1.0, %v2675
  %v2677 = vmul.f32 %v456, %v2676
  %v2678 = vmul.f32 %v2677, %v2673
  %v2679 = vmul.f32 %v2675, 0.0
  %v2680 = vadd.f32 %v2678, %v2679
  %v2681 = vadd.f32 %v2680, %v2083
  %2682 = vmatprep.subr.mxu0 %v2577
  %2683 = vmatpush1.msra.mxu0 %v2576
  %2684 = vmatprep.subr.mxu0 %v2575
  %2685 = vmatpush1.msra.mxu0 %v2574
  %2686 = vmatprep.subr.mxu0 %v2573
  %2687 = vmatpush1.msra.mxu0 %v2572
  %2688 = vmatprep.subr.mxu0 %v2571
  %2689 = vmatpush1.msra.mxu0 %v2570
  %2690 = vmatprep.subr.mxu0 %v2569
  %2691 = vmatpush1.msra.mxu0 %v2568
  %2692 = vmatprep.subr.mxu0 %v2567
  %2693 = vmatpush1.msra.mxu0 %v2566
  %2694 = vmatprep.subr.mxu0 %v2565
  %2695 = vmatpush1.msra.mxu0 %v2564
  %2696 = vmatprep.subr.mxu0 %v2563
  %2697 = vmatpush1.msra.mxu0 %v2562
  %2698 = vmatprep.subr.mxu0 %v2561
  %2699 = vmatpush1.msra.mxu0 %v2560
  %2700 = vmatprep.subr.mxu0 %v2559
  %2701 = vmatpush1.msra.mxu0 %v2558
  %2702 = vmatprep.subr.mxu0 %v2557
  %2703 = vmatpush1.msra.mxu0 %v2556
  %2704 = vmatprep.subr.mxu0 %v2555
  %2705 = vmatpush1.msra.mxu0 %v2554
  %2706 = vmatprep.subr.mxu0 %v2553
  %2707 = vmatpush1.msra.mxu0 %v2552
  %2708 = vmatprep.subr.mxu0 %v2551
  %2709 = vmatpush1.msra.mxu0 %v2550
  %2710 = vmatprep.subr.mxu0 %v2549
  %2711 = vmatpush1.msra.mxu0 %v2548
  %2712 = vmatprep.subr.mxu0 %v2547
  %2713 = vmatpush1.msra.mxu0 %v2546
  %2714 = vmatprep.subr.mxu0 0.0
  %2715 = vmatpush2.msra.mxu0 0.0
  %2716 = vmatprep.subr.mxu0 0.0
  %2717 = vmatpush2.msra.mxu0 0.0
  %2718 = vmatprep.subr.mxu0 0.0
  %2719 = vmatpush2.msra.mxu0 0.0
  %2720 = vmatprep.subr.mxu0 0.0
  %2721 = vmatpush2.msra.mxu0 0.0
  %2722 = vmatprep.subr.mxu0 0.0
  %2723 = vmatpush2.msra.mxu0 0.0
  %2724 = vmatprep.subr.mxu0 0.0
  %2725 = vmatpush2.msra.mxu0 0.0
  %2726 = vmatprep.subr.mxu0 0.0
  %2727 = vmatpush2.msra.mxu0 0.0
  %2728 = vmatprep.subr.mxu0 0.0
  %2729 = vmatpush2.msra.mxu0 0.0
  %2730 = vmatprep.subr.mxu0 0.0
  %2731 = vmatpush2.msra.mxu0 0.0
  %2732 = vmatprep.subr.mxu0 0.0
  %2733 = vmatpush2.msra.mxu0 0.0
  %2734 = vmatprep.subr.mxu0 0.0
  %2735 = vmatpush2.msra.mxu0 0.0
  %2736 = vmatprep.subr.mxu0 0.0
  %2737 = vmatpush2.msra.mxu0 0.0
  %2738 = vmatprep.subr.mxu0 0.0
  %2739 = vmatpush2.msra.mxu0 0.0
  %2740 = vmatprep.subr.mxu0 0.0
  %2741 = vmatpush2.msra.mxu0 0.0
  %2742 = vmatprep.subr.mxu0 0.0
  %2743 = vmatpush2.msra.mxu0 0.0
  %2744 = vmatprep.subr.mxu0 0.0
  %2745 = vmatpush2.msra.mxu0 0.0
  %2746 = vmatprep.mubr.f32.mxu0 0.0
  %2747 = vmatmul.mubr.f32.gmra.mxu0 %v2681
  %v2748 = vpop.f32.mrf.mxu0
  %v2749 = vadd.f32 %v2584, %v2748
  %v2750 = vpop.f32.mrf.mxu0
  %v2751 = vadd.f32 %v2588, %v2750
  %2752 = vdwg.mxu0
  %v2753 = vxor.u32 %v2749, 2147483648
  %v2754 = vmul.f32 %v2753, 1.442695
  %v2755 = vpow.pop %v2754
  %v2756 = vadd.f32 %v2755, 1.0
  %v2757 = vrcp.pop %v2756
  %v2758 = vmul.f32 1.0, %v2757
  %2759 = vrot.lane.b32.xlu0 %v2751, 64
  %v2760 = vpop.permute.xlu0 %2759
  %v2761 = vmul.f32 %v2758, %v2751
  %v2762 = vadd.f32 %v2761, %v2760
  %v2763 = vtanh.pop %v2762
  %2764 = vrot.lane.b32.xlu0 %v2758, 64
  %v2765 = vpop.permute.xlu0 %2764
  %v2766 = vsub.f32 1.0, %v2765
  %v2767 = vmul.f32 %v456, %v2766
  %v2768 = vmul.f32 %v2767, %v2763
  %v2769 = vmul.f32 %v2765, %v2680
  %v2770 = vadd.f32 %v2768, %v2769
  %v2771 = vadd.f32 %v2770, %v2175
  %2772 = vmatprep.subr.mxu0 %v2577
  %2773 = vmatpush1.msra.mxu0 %v2576
  %2774 = vmatprep.subr.mxu0 %v2575
  %2775 = vmatpush1.msra.mxu0 %v2574
  %2776 = vmatprep.subr.mxu0 %v2573
  %2777 = vmatpush1.msra.mxu0 %v2572
  %2778 = vmatprep.subr.mxu0 %v2571
  %2779 = vmatpush1.msra.mxu0 %v2570
  %2780 = vmatprep.subr.mxu0 %v2569
  %2781 = vmatpush1.msra.mxu0 %v2568
  %2782 = vmatprep.subr.mxu0 %v2567
  %2783 = vmatpush1.msra.mxu0 %v2566
  %2784 = vmatprep.subr.mxu0 %v2565
  %2785 = vmatpush1.msra.mxu0 %v2564
  %2786 = vmatprep.subr.mxu0 %v2563
  %2787 = vmatpush1.msra.mxu0 %v2562
  %2788 = vmatprep.subr.mxu0 %v2561
  %2789 = vmatpush1.msra.mxu0 %v2560
  %2790 = vmatprep.subr.mxu0 %v2559
  %2791 = vmatpush1.msra.mxu0 %v2558
  %2792 = vmatprep.subr.mxu0 %v2557
  %2793 = vmatpush1.msra.mxu0 %v2556
  %2794 = vmatprep.subr.mxu0 %v2555
  %2795 = vmatpush1.msra.mxu0 %v2554
  %2796 = vmatprep.subr.mxu0 %v2553
  %2797 = vmatpush1.msra.mxu0 %v2552
  %2798 = vmatprep.subr.mxu0 %v2551
  %2799 = vmatpush1.msra.mxu0 %v2550
  %2800 = vmatprep.subr.mxu0 %v2549
  %2801 = vmatpush1.msra.mxu0 %v2548
  %2802 = vmatprep.subr.mxu0 %v2547
  %2803 = vmatpush1.msra.mxu0 %v2546
  %2804 = vmatprep.subr.mxu0 0.0
  %2805 = vmatpush2.msra.mxu0 0.0
  %2806 = vmatprep.subr.mxu0 0.0
  %2807 = vmatpush2.msra.mxu0 0.0
  %2808 = vmatprep.subr.mxu0 0.0
  %2809 = vmatpush2.msra.mxu0 0.0
  %2810 = vmatprep.subr.mxu0 0.0
  %2811 = vmatpush2.msra.mxu0 0.0
  %2812 = vmatprep.subr.mxu0 0.0
  %2813 = vmatpush2.msra.mxu0 0.0
  %2814 = vmatprep.subr.mxu0 0.0
  %2815 = vmatpush2.msra.mxu0 0.0
  %2816 = vmatprep.subr.mxu0 0.0
  %2817 = vmatpush2.msra.mxu0 0.0
  %2818 = vmatprep.subr.mxu0 0.0
  %2819 = vmatpush2.msra.mxu0 0.0
  %2820 = vmatprep.subr.mxu0 0.0
  %2821 = vmatpush2.msra.mxu0 0.0
  %2822 = vmatprep.subr.mxu0 0.0
  %2823 = vmatpush2.msra.mxu0 0.0
  %2824 = vmatprep.subr.mxu0 0.0
  %2825 = vmatpush2.msra.mxu0 0.0
  %2826 = vmatprep.subr.mxu0 0.0
  %2827 = vmatpush2.msra.mxu0 0.0
  %2828 = vmatprep.subr.mxu0 0.0
  %2829 = vmatpush2.msra.mxu0 0.0
  %2830 = vmatprep.subr.mxu0 0.0
  %2831 = vmatpush2.msra.mxu0 0.0
  %2832 = vmatprep.subr.mxu0 0.0
  %2833 = vmatpush2.msra.mxu0 0.0
  %2834 = vmatprep.subr.mxu0 0.0
  %2835 = vmatpush2.msra.mxu0 0.0
  %2836 = vmatprep.mubr.f32.mxu0 0.0
  %2837 = vmatmul.mubr.f32.gmra.mxu0 %v2771
  %v2838 = vpop.f32.mrf.mxu0
  %v2839 = vadd.f32 %v2584, %v2838
  %v2840 = vpop.f32.mrf.mxu0
  %v2841 = vadd.f32 %v2588, %v2840
  %2842 = vdwg.mxu0
  %v2843 = vxor.u32 %v2839, 2147483648
  %v2844 = vmul.f32 %v2843, 1.442695
  %v2845 = vpow.pop %v2844
  %v2846 = vadd.f32 %v2845, 1.0
  %v2847 = vrcp.pop %v2846
  %v2848 = vmul.f32 1.0, %v2847
  %2849 = vrot.lane.b32.xlu0 %v2841, 64
  %v2850 = vpop.permute.xlu0 %2849
  %v2851 = vmul.f32 %v2848, %v2841
  %v2852 = vadd.f32 %v2851, %v2850
  %v2853 = vtanh.pop %v2852
  %2854 = vrot.lane.b32.xlu0 %v2848, 64
  %v2855 = vpop.permute.xlu0 %2854
  %v2856 = vsub.f32 1.0, %v2855
  %v2857 = vmul.f32 %v456, %v2856
  %v2858 = vmul.f32 %v2857, %v2853
  %v2859 = vmul.f32 %v2855, %v2770
  %v2860 = vadd.f32 %v2858, %v2859
  %v2861 = vadd.f32 %v2860, %v2267
  %2862 = vmatprep.subr.mxu0 %v2577
  %2863 = vmatpush1.msra.mxu0 %v2576
  %2864 = vmatprep.subr.mxu0 %v2575
  %2865 = vmatpush1.msra.mxu0 %v2574
  %2866 = vmatprep.subr.mxu0 %v2573
  %2867 = vmatpush1.msra.mxu0 %v2572
  %2868 = vmatprep.subr.mxu0 %v2571
  %2869 = vmatpush1.msra.mxu0 %v2570
  %2870 = vmatprep.subr.mxu0 %v2569
  %2871 = vmatpush1.msra.mxu0 %v2568
  %2872 = vmatprep.subr.mxu0 %v2567
  %2873 = vmatpush1.msra.mxu0 %v2566
  %2874 = vmatprep.subr.mxu0 %v2565
  %2875 = vmatpush1.msra.mxu0 %v2564
  %2876 = vmatprep.subr.mxu0 %v2563
  %2877 = vmatpush1.msra.mxu0 %v2562
  %2878 = vmatprep.subr.mxu0 %v2561
  %2879 = vmatpush1.msra.mxu0 %v2560
  %2880 = vmatprep.subr.mxu0 %v2559
  %2881 = vmatpush1.msra.mxu0 %v2558
  %2882 = vmatprep.subr.mxu0 %v2557
  %2883 = vmatpush1.msra.mxu0 %v2556
  %2884 = vmatprep.subr.mxu0 %v2555
  %2885 = vmatpush1.msra.mxu0 %v2554
  %2886 = vmatprep.subr.mxu0 %v2553
  %2887 = vmatpush1.msra.mxu0 %v2552
  %2888 = vmatprep.subr.mxu0 %v2551
  %2889 = vmatpush1.msra.mxu0 %v2550
  %2890 = vmatprep.subr.mxu0 %v2549
  %2891 = vmatpush1.msra.mxu0 %v2548
  %2892 = vmatprep.subr.mxu0 %v2547
  %2893 = vmatpush1.msra.mxu0 %v2546
  %2894 = vmatprep.subr.mxu0 0.0
  %2895 = vmatpush2.msra.mxu0 0.0
  %2896 = vmatprep.subr.mxu0 0.0
  %2897 = vmatpush2.msra.mxu0 0.0
  %2898 = vmatprep.subr.mxu0 0.0
  %2899 = vmatpush2.msra.mxu0 0.0
  %2900 = vmatprep.subr.mxu0 0.0
  %2901 = vmatpush2.msra.mxu0 0.0
  %2902 = vmatprep.subr.mxu0 0.0
  %2903 = vmatpush2.msra.mxu0 0.0
  %2904 = vmatprep.subr.mxu0 0.0
  %2905 = vmatpush2.msra.mxu0 0.0
  %2906 = vmatprep.subr.mxu0 0.0
  %2907 = vmatpush2.msra.mxu0 0.0
  %2908 = vmatprep.subr.mxu0 0.0
  %2909 = vmatpush2.msra.mxu0 0.0
  %2910 = vmatprep.subr.mxu0 0.0
  %2911 = vmatpush2.msra.mxu0 0.0
  %2912 = vmatprep.subr.mxu0 0.0
  %2913 = vmatpush2.msra.mxu0 0.0
  %2914 = vmatprep.subr.mxu0 0.0
  %2915 = vmatpush2.msra.mxu0 0.0
  %2916 = vmatprep.subr.mxu0 0.0
  %2917 = vmatpush2.msra.mxu0 0.0
  %2918 = vmatprep.subr.mxu0 0.0
  %2919 = vmatpush2.msra.mxu0 0.0
  %2920 = vmatprep.subr.mxu0 0.0
  %2921 = vmatpush2.msra.mxu0 0.0
  %2922 = vmatprep.subr.mxu0 0.0
  %2923 = vmatpush2.msra.mxu0 0.0
  %2924 = vmatprep.subr.mxu0 0.0
  %2925 = vmatpush2.msra.mxu0 0.0
  %2926 = vmatprep.mubr.f32.mxu0 0.0
  %2927 = vmatmul.mubr.f32.gmra.mxu0 %v2861
  %v2928 = vpop.f32.mrf.mxu0
  %v2929 = vadd.f32 %v2584, %v2928
  %v2930 = vpop.f32.mrf.mxu0
  %v2931 = vadd.f32 %v2588, %v2930
  %2932 = vdwg.mxu0
  %v2933 = vxor.u32 %v2929, 2147483648
  %v2934 = vmul.f32 %v2933, 1.442695
  %v2935 = vpow.pop %v2934
  %v2936 = vadd.f32 %v2935, 1.0
  %v2937 = vrcp.pop %v2936
  %v2938 = vmul.f32 1.0, %v2937
  %2939 = vrot.lane.b32.xlu0 %v2931, 64
  %v2940 = vpop.permute.xlu0 %2939
  %v2941 = vmul.f32 %v2938, %v2931
  %v2942 = vadd.f32 %v2941, %v2940
  %v2943 = vtanh.pop %v2942
  %2944 = vrot.lane.b32.xlu0 %v2938, 64
  %v2945 = vpop.permute.xlu0 %2944
  %v2946 = vsub.f32 1.0, %v2945
  %v2947 = vmul.f32 %v456, %v2946
  %v2948 = vmul.f32 %v2947, %v2943
  %v2949 = vmul.f32 %v2945, %v2860
  %v2950 = vadd.f32 %v2948, %v2949
  %v2951 = vadd.f32 %v2950, %v2359
  %2952 = vmatprep.subr.mxu0 %v2577
  %2953 = vmatpush1.msra.mxu0 %v2576
  %2954 = vmatprep.subr.mxu0 %v2575
  %2955 = vmatpush1.msra.mxu0 %v2574
  %2956 = vmatprep.subr.mxu0 %v2573
  %2957 = vmatpush1.msra.mxu0 %v2572
  %2958 = vmatprep.subr.mxu0 %v2571
  %2959 = vmatpush1.msra.mxu0 %v2570
  %2960 = vmatprep.subr.mxu0 %v2569
  %2961 = vmatpush1.msra.mxu0 %v2568
  %2962 = vmatprep.subr.mxu0 %v2567
  %2963 = vmatpush1.msra.mxu0 %v2566
  %2964 = vmatprep.subr.mxu0 %v2565
  %2965 = vmatpush1.msra.mxu0 %v2564
  %2966 = vmatprep.subr.mxu0 %v2563
  %2967 = vmatpush1.msra.mxu0 %v2562
  %2968 = vmatprep.subr.mxu0 %v2561
  %2969 = vmatpush1.msra.mxu0 %v2560
  %2970 = vmatprep.subr.mxu0 %v2559
  %2971 = vmatpush1.msra.mxu0 %v2558
  %2972 = vmatprep.subr.mxu0 %v2557
  %2973 = vmatpush1.msra.mxu0 %v2556
  %2974 = vmatprep.subr.mxu0 %v2555
  %2975 = vmatpush1.msra.mxu0 %v2554
  %2976 = vmatprep.subr.mxu0 %v2553
  %2977 = vmatpush1.msra.mxu0 %v2552
  %2978 = vmatprep.subr.mxu0 %v2551
  %2979 = vmatpush1.msra.mxu0 %v2550
  %2980 = vmatprep.subr.mxu0 %v2549
  %2981 = vmatpush1.msra.mxu0 %v2548
  %2982 = vmatprep.subr.mxu0 %v2547
  %2983 = vmatpush1.msra.mxu0 %v2546
  %2984 = vmatprep.subr.mxu0 0.0
  %2985 = vmatpush2.msra.mxu0 0.0
  %2986 = vmatprep.subr.mxu0 0.0
  %2987 = vmatpush2.msra.mxu0 0.0
  %2988 = vmatprep.subr.mxu0 0.0
  %2989 = vmatpush2.msra.mxu0 0.0
  %2990 = vmatprep.subr.mxu0 0.0
  %2991 = vmatpush2.msra.mxu0 0.0
  %2992 = vmatprep.subr.mxu0 0.0
  %2993 = vmatpush2.msra.mxu0 0.0
  %2994 = vmatprep.subr.mxu0 0.0
  %2995 = vmatpush2.msra.mxu0 0.0
  %2996 = vmatprep.subr.mxu0 0.0
  %2997 = vmatpush2.msra.mxu0 0.0
  %2998 = vmatprep.subr.mxu0 0.0
  %2999 = vmatpush2.msra.mxu0 0.0
  %3000 = vmatprep.subr.mxu0 0.0
  %3001 = vmatpush2.msra.mxu0 0.0
  %3002 = vmatprep.subr.mxu0 0.0
  %3003 = vmatpush2.msra.mxu0 0.0
  %3004 = vmatprep.subr.mxu0 0.0
  %3005 = vmatpush2.msra.mxu0 0.0
  %3006 = vmatprep.subr.mxu0 0.0
  %3007 = vmatpush2.msra.mxu0 0.0
  %3008 = vmatprep.subr.mxu0 0.0
  %3009 = vmatpush2.msra.mxu0 0.0
  %3010 = vmatprep.subr.mxu0 0.0
  %3011 = vmatpush2.msra.mxu0 0.0
  %3012 = vmatprep.subr.mxu0 0.0
  %3013 = vmatpush2.msra.mxu0 0.0
  %3014 = vmatprep.subr.mxu0 0.0
  %3015 = vmatpush2.msra.mxu0 0.0
  %3016 = vmatprep.mubr.f32.mxu0 0.0
  %3017 = vmatmul.mubr.f32.gmra.mxu0 %v2951
  %v3018 = vpop.f32.mrf.mxu0
  %v3019 = vadd.f32 %v2584, %v3018
  %v3020 = vpop.f32.mrf.mxu0
  %v3021 = vadd.f32 %v2588, %v3020
  %3022 = vdwg.mxu0
  %v3023 = vxor.u32 %v3019, 2147483648
  %v3024 = vmul.f32 %v3023, 1.442695
  %v3025 = vpow.pop %v3024
  %v3026 = vadd.f32 %v3025, 1.0
  %v3027 = vrcp.pop %v3026
  %v3028 = vmul.f32 1.0, %v3027
  %3029 = vrot.lane.b32.xlu0 %v3021, 64
  %v3030 = vpop.permute.xlu0 %3029
  %v3031 = vmul.f32 %v3028, %v3021
  %v3032 = vadd.f32 %v3031, %v3030
  %v3033 = vtanh.pop %v3032
  %3034 = vrot.lane.b32.xlu0 %v3028, 64
  %v3035 = vpop.permute.xlu0 %3034
  %v3036 = vsub.f32 1.0, %v3035
  %v3037 = vmul.f32 %v456, %v3036
  %v3038 = vmul.f32 %v3037, %v3033
  %v3039 = vmul.f32 %v3035, %v2950
  %v3040 = vadd.f32 %v3038, %v3039
  %v3041 = vadd.f32 %v3040, %v2451
  %3042 = vmatprep.subr.mxu0 %v2577
  %3043 = vmatpush1.msra.mxu0 %v2576
  %3044 = vmatprep.subr.mxu0 %v2575
  %3045 = vmatpush1.msra.mxu0 %v2574
  %3046 = vmatprep.subr.mxu0 %v2573
  %3047 = vmatpush1.msra.mxu0 %v2572
  %3048 = vmatprep.subr.mxu0 %v2571
  %3049 = vmatpush1.msra.mxu0 %v2570
  %3050 = vmatprep.subr.mxu0 %v2569
  %3051 = vmatpush1.msra.mxu0 %v2568
  %3052 = vmatprep.subr.mxu0 %v2567
  %3053 = vmatpush1.msra.mxu0 %v2566
  %3054 = vmatprep.subr.mxu0 %v2565
  %3055 = vmatpush1.msra.mxu0 %v2564
  %3056 = vmatprep.subr.mxu0 %v2563
  %3057 = vmatpush1.msra.mxu0 %v2562
  %3058 = vmatprep.subr.mxu0 %v2561
  %3059 = vmatpush1.msra.mxu0 %v2560
  %3060 = vmatprep.subr.mxu0 %v2559
  %3061 = vmatpush1.msra.mxu0 %v2558
  %3062 = vmatprep.subr.mxu0 %v2557
  %3063 = vmatpush1.msra.mxu0 %v2556
  %3064 = vmatprep.subr.mxu0 %v2555
  %3065 = vmatpush1.msra.mxu0 %v2554
  %3066 = vmatprep.subr.mxu0 %v2553
  %3067 = vmatpush1.msra.mxu0 %v2552
  %3068 = vmatprep.subr.mxu0 %v2551
  %3069 = vmatpush1.msra.mxu0 %v2550
  %3070 = vmatprep.subr.mxu0 %v2549
  %3071 = vmatpush1.msra.mxu0 %v2548
  %3072 = vmatprep.subr.mxu0 %v2547
  %3073 = vmatpush1.msra.mxu0 %v2546
  %3074 = vmatprep.subr.mxu0 0.0
  %3075 = vmatpush2.msra.mxu0 0.0
  %3076 = vmatprep.subr.mxu0 0.0
  %3077 = vmatpush2.msra.mxu0 0.0
  %3078 = vmatprep.subr.mxu0 0.0
  %3079 = vmatpush2.msra.mxu0 0.0
  %3080 = vmatprep.subr.mxu0 0.0
  %3081 = vmatpush2.msra.mxu0 0.0
  %3082 = vmatprep.subr.mxu0 0.0
  %3083 = vmatpush2.msra.mxu0 0.0
  %3084 = vmatprep.subr.mxu0 0.0
  %3085 = vmatpush2.msra.mxu0 0.0
  %3086 = vmatprep.subr.mxu0 0.0
  %3087 = vmatpush2.msra.mxu0 0.0
  %3088 = vmatprep.subr.mxu0 0.0
  %3089 = vmatpush2.msra.mxu0 0.0
  %3090 = vmatprep.subr.mxu0 0.0
  %3091 = vmatpush2.msra.mxu0 0.0
  %3092 = vmatprep.subr.mxu0 0.0
  %3093 = vmatpush2.msra.mxu0 0.0
  %3094 = vmatprep.subr.mxu0 0.0
  %3095 = vmatpush2.msra.mxu0 0.0
  %3096 = vmatprep.subr.mxu0 0.0
  %3097 = vmatpush2.msra.mxu0 0.0
  %3098 = vmatprep.subr.mxu0 0.0
  %3099 = vmatpush2.msra.mxu0 0.0
  %3100 = vmatprep.subr.mxu0 0.0
  %3101 = vmatpush2.msra.mxu0 0.0
  %3102 = vmatprep.subr.mxu0 0.0
  %3103 = vmatpush2.msra.mxu0 0.0
  %3104 = vmatprep.subr.mxu0 0.0
  %3105 = vmatpush2.msra.mxu0 0.0
  %3106 = vmatprep.mubr.f32.mxu0 0.0
  %3107 = vmatmul.mubr.f32.gmra.mxu0 %v3041
  %v3108 = vpop.f32.mrf.mxu0
  %v3109 = vadd.f32 %v2584, %v3108
  %v3110 = vpop.f32.mrf.mxu0
  %v3111 = vadd.f32 %v2588, %v3110
  %3112 = vdwg.mxu0
  %v3113 = vxor.u32 %v3109, 2147483648
  %v3114 = vmul.f32 %v3113, 1.442695
  %v3115 = vpow.pop %v3114
  %v3116 = vadd.f32 %v3115, 1.0
  %v3117 = vrcp.pop %v3116
  %v3118 = vmul.f32 1.0, %v3117
  %3119 = vrot.lane.b32.xlu0 %v3111, 64
  %v3120 = vpop.permute.xlu0 %3119
  %v3121 = vmul.f32 %v3118, %v3111
  %v3122 = vadd.f32 %v3121, %v3120
  %v3123 = vtanh.pop %v3122
  %3124 = vrot.lane.b32.xlu0 %v3118, 64
  %v3125 = vpop.permute.xlu0 %3124
  %v3126 = vsub.f32 1.0, %v3125
  %v3127 = vmul.f32 %v456, %v3126
  %v3128 = vmul.f32 %v3127, %v3123
  %v3129 = vmul.f32 %v3125, %v3040
  %v3130 = vadd.f32 %v3128, %v3129
  %v3131 = vadd.f32 %v3130, %v2543
  %3132 = vmatprep.subr.mxu0 %v2577
  %3133 = vmatpush1.msra.mxu0 %v2576
  %3134 = vmatprep.subr.mxu0 %v2575
  %3135 = vmatpush1.msra.mxu0 %v2574
  %3136 = vmatprep.subr.mxu0 %v2573
  %3137 = vmatpush1.msra.mxu0 %v2572
  %3138 = vmatprep.subr.mxu0 %v2571
  %3139 = vmatpush1.msra.mxu0 %v2570
  %3140 = vmatprep.subr.mxu0 %v2569
  %3141 = vmatpush1.msra.mxu0 %v2568
  %3142 = vmatprep.subr.mxu0 %v2567
  %3143 = vmatpush1.msra.mxu0 %v2566
  %3144 = vmatprep.subr.mxu0 %v2565
  %3145 = vmatpush1.msra.mxu0 %v2564
  %3146 = vmatprep.subr.mxu0 %v2563
  %3147 = vmatpush1.msra.mxu0 %v2562
  %3148 = vmatprep.subr.mxu0 %v2561
  %3149 = vmatpush1.msra.mxu0 %v2560
  %3150 = vmatprep.subr.mxu0 %v2559
  %3151 = vmatpush1.msra.mxu0 %v2558
  %3152 = vmatprep.subr.mxu0 %v2557
  %3153 = vmatpush1.msra.mxu0 %v2556
  %3154 = vmatprep.subr.mxu0 %v2555
  %3155 = vmatpush1.msra.mxu0 %v2554
  %3156 = vmatprep.subr.mxu0 %v2553
  %3157 = vmatpush1.msra.mxu0 %v2552
  %3158 = vmatprep.subr.mxu0 %v2551
  %3159 = vmatpush1.msra.mxu0 %v2550
  %3160 = vmatprep.subr.mxu0 %v2549
  %3161 = vmatpush1.msra.mxu0 %v2548
  %3162 = vmatprep.subr.mxu0 %v2547
  %3163 = vmatpush1.msra.mxu0 %v2546
  %3164 = vmatprep.subr.mxu0 0.0
  %3165 = vmatpush2.msra.mxu0 0.0
  %3166 = vmatprep.subr.mxu0 0.0
  %3167 = vmatpush2.msra.mxu0 0.0
  %3168 = vmatprep.subr.mxu0 0.0
  %3169 = vmatpush2.msra.mxu0 0.0
  %3170 = vmatprep.subr.mxu0 0.0
  %3171 = vmatpush2.msra.mxu0 0.0
  %3172 = vmatprep.subr.mxu0 0.0
  %3173 = vmatpush2.msra.mxu0 0.0
  %3174 = vmatprep.subr.mxu0 0.0
  %3175 = vmatpush2.msra.mxu0 0.0
  %3176 = vmatprep.subr.mxu0 0.0
  %3177 = vmatpush2.msra.mxu0 0.0
  %3178 = vmatprep.subr.mxu0 0.0
  %3179 = vmatpush2.msra.mxu0 0.0
  %3180 = vmatprep.subr.mxu0 0.0
  %3181 = vmatpush2.msra.mxu0 0.0
  %3182 = vmatprep.subr.mxu0 0.0
  %3183 = vmatpush2.msra.mxu0 0.0
  %3184 = vmatprep.subr.mxu0 0.0
  %3185 = vmatpush2.msra.mxu0 0.0
  %3186 = vmatprep.subr.mxu0 0.0
  %3187 = vmatpush2.msra.mxu0 0.0
  %3188 = vmatprep.subr.mxu0 0.0
  %3189 = vmatpush2.msra.mxu0 0.0
  %3190 = vmatprep.subr.mxu0 0.0
  %3191 = vmatpush2.msra.mxu0 0.0
  %3192 = vmatprep.subr.mxu0 0.0
  %3193 = vmatpush2.msra.mxu0 0.0
  %3194 = vmatprep.subr.mxu0 0.0
  %3195 = vmatpush2.msra.mxu0 0.0
  %3196 = vmatprep.mubr.f32.mxu0 0.0
  %3197 = vmatmul.mubr.f32.gmra.mxu0 %v3131
  %v3198 = vpop.f32.mrf.mxu0
  %v3199 = vadd.f32 %v2584, %v3198
  %v3200 = vpop.f32.mrf.mxu0
  %v3201 = vadd.f32 %v2588, %v3200
  %3202 = vdwg.mxu0
  %v3203 = vxor.u32 %v3199, 2147483648
  %v3204 = vmul.f32 %v3203, 1.442695
  %v3205 = vpow.pop %v3204
  %v3206 = vadd.f32 %v3205, 1.0
  %v3207 = vrcp.pop %v3206
  %v3208 = vmul.f32 1.0, %v3207
  %3209 = vrot.lane.b32.xlu0 %v3201, 64
  %v3210 = vpop.permute.xlu0 %3209
  %v3211 = vmul.f32 %v3208, %v3201
  %v3212 = vadd.f32 %v3211, %v3210
  %v3213 = vtanh.pop %v3212
  %3214 = vrot.lane.b32.xlu0 %v3208, 64
  %v3215 = vpop.permute.xlu0 %3214
  %v3216 = vsub.f32 1.0, %v3215
  %v3217 = vmul.f32 %v456, %v3216
  %v3218 = vmul.f32 %v3217, %v3213
  %v3219 = vmul.f32 %v3215, %v3130
  %v3220 = vadd.f32 %v3218, %v3219
  %v3221 = vmax.f32 %v3220, 0.0
  %v3222 = vld [vmem:[%s2] sm:$0xff]
  %v3223 = vld [vmem:[%s2 + $0x8] sm:$0xff]
  %v3224 = vld [vmem:[%s2 + $0x10] sm:$0xff]
  %v3225 = vld [vmem:[%s2 + $0x18] sm:$0xff]
  %v3226 = vld [vmem:[%s2 + $0x20] sm:$0xff]
  %v3227 = vld [vmem:[%s2 + $0x28] sm:$0xff]
  %v3228 = vld [vmem:[%s2 + $0x30] sm:$0xff]
  %v3229 = vld [vmem:[%s2 + $0x38] sm:$0xff]
  %v3230 = vld [vmem:[%s2 + $0x40] sm:$0xff]
  %v3231 = vld [vmem:[%s2 + $0x48] sm:$0xff]
  %v3232 = vld [vmem:[%s2 + $0x50] sm:$0xff]
  %v3233 = vld [vmem:[%s2 + $0x58] sm:$0xff]
  %v3234 = vld [vmem:[%s2 + $0x60] sm:$0xff]
  %v3235 = vld [vmem:[%s2 + $0x68] sm:$0xff]
  %v3236 = vld [vmem:[%s2 + $0x70] sm:$0xff]
  %v3237 = vld [vmem:[%s2 + $0x78] sm:$0xff]
  %v3238 = vld [vmem:[%s3] sm:$0x1]
  %v3240 = vlaneseq
  %v3241 = vshrl.u32 %v3240, 7
  %v3242 = vsub.s32 0, %v3241
  %v3243 = vrot.slane %v3238, %v3242
  %3245 = vmatprep.subr.mxu0 0.0
  %3246 = vmatpush1.msra.mxu0 %v3237
  %3247 = vmatprep.subr.mxu0 0.0
  %3248 = vmatpush1.msra.mxu0 %v3236
  %3249 = vmatprep.subr.mxu0 0.0
  %3250 = vmatpush1.msra.mxu0 %v3235
  %3251 = vmatprep.subr.mxu0 0.0
  %3252 = vmatpush1.msra.mxu0 %v3234
  %3253 = vmatprep.subr.mxu0 0.0
  %3254 = vmatpush1.msra.mxu0 %v3233
  %3255 = vmatprep.subr.mxu0 0.0
  %3256 = vmatpush1.msra.mxu0 %v3232
  %3257 = vmatprep.subr.mxu0 0.0
  %3258 = vmatpush1.msra.mxu0 %v3231
  %3259 = vmatprep.subr.mxu0 0.0
  %3260 = vmatpush1.msra.mxu0 %v3230
  %3261 = vmatprep.subr.mxu0 0.0
  %3262 = vmatpush1.msra.mxu0 %v3229
  %3263 = vmatprep.subr.mxu0 0.0
  %3264 = vmatpush1.msra.mxu0 %v3228
  %3265 = vmatprep.subr.mxu0 0.0
  %3266 = vmatpush1.msra.mxu0 %v3227
  %3267 = vmatprep.subr.mxu0 0.0
  %3268 = vmatpush1.msra.mxu0 %v3226
  %3269 = vmatprep.subr.mxu0 0.0
  %3270 = vmatpush1.msra.mxu0 %v3225
  %3271 = vmatprep.subr.mxu0 0.0
  %3272 = vmatpush1.msra.mxu0 %v3224
  %3273 = vmatprep.subr.mxu0 0.0
  %3274 = vmatpush1.msra.mxu0 %v3223
  %3275 = vmatprep.subr.mxu0 0.0
  %3276 = vmatpush1.msra.mxu0 %v3222
  %3277 = vmatprep.subr.mxu0 0.0
  %3278 = vmatpush2.msra.mxu0 0.0
  %3279 = vmatprep.subr.mxu0 0.0
  %3280 = vmatpush2.msra.mxu0 0.0
  %3281 = vmatprep.subr.mxu0 0.0
  %3282 = vmatpush2.msra.mxu0 0.0
  %3283 = vmatprep.subr.mxu0 0.0
  %3284 = vmatpush2.msra.mxu0 0.0
  %3285 = vmatprep.subr.mxu0 0.0
  %3286 = vmatpush2.msra.mxu0 0.0
  %3287 = vmatprep.subr.mxu0 0.0
  %3288 = vmatpush2.msra.mxu0 0.0
  %3289 = vmatprep.subr.mxu0 0.0
  %3290 = vmatpush2.msra.mxu0 0.0
  %3291 = vmatprep.subr.mxu0 0.0
  %3292 = vmatpush2.msra.mxu0 0.0
  %3293 = vmatprep.subr.mxu0 0.0
  %3294 = vmatpush2.msra.mxu0 0.0
  %3295 = vmatprep.subr.mxu0 0.0
  %3296 = vmatpush2.msra.mxu0 0.0
  %3297 = vmatprep.subr.mxu0 0.0
  %3298 = vmatpush2.msra.mxu0 0.0
  %3299 = vmatprep.subr.mxu0 0.0
  %3300 = vmatpush2.msra.mxu0 0.0
  %3301 = vmatprep.subr.mxu0 0.0
  %3302 = vmatpush2.msra.mxu0 0.0
  %3303 = vmatprep.subr.mxu0 0.0
  %3304 = vmatpush2.msra.mxu0 0.0
  %3305 = vmatprep.subr.mxu0 0.0
  %3306 = vmatpush2.msra.mxu0 0.0
  %3307 = vmatprep.subr.mxu0 0.0
  %3308 = vmatpush2.msra.mxu0 0.0
  %3309 = vmatprep.mubr.f32.mxu0 0.0
  %3310 = vmatmul.mubr.f32.gmra.mxu0 %v3221
  %v3311 = vpop.f32.mrf.mxu0
  %v3312 = vadd.f32 %v3243, %v3311
  %v3313 = vpop.f32.mrf.mxu0
  %3314 = vdwg.mxu0
  %v3315 = vmax.f32 %v3312, 0.0
  %v3316 = vld [vmem:[%s4] sm:$0xff]
  %v3317 = vld [vmem:[%s4 + $0x8] sm:$0xff]
  %v3318 = vld [vmem:[%s4 + $0x10] sm:$0xff]
  %v3319 = vld [vmem:[%s4 + $0x18] sm:$0xff]
  %v3320 = vld [vmem:[%s4 + $0x20] sm:$0xff]
  %v3321 = vld [vmem:[%s4 + $0x28] sm:$0xff]
  %v3322 = vld [vmem:[%s4 + $0x30] sm:$0xff]
  %v3323 = vld [vmem:[%s4 + $0x38] sm:$0xff]
  %v3324 = vld [vmem:[%s4 + $0x40] sm:$0xff]
  %v3325 = vld [vmem:[%s4 + $0x48] sm:$0xff]
  %v3326 = vld [vmem:[%s4 + $0x50] sm:$0xff]
  %v3327 = vld [vmem:[%s4 + $0x58] sm:$0xff]
  %v3328 = vld [vmem:[%s4 + $0x60] sm:$0xff]
  %v3329 = vld [vmem:[%s4 + $0x68] sm:$0xff]
  %v3330 = vld [vmem:[%s4 + $0x70] sm:$0xff]
  %v3331 = vld [vmem:[%s4 + $0x78] sm:$0xff]
  %v3332 = vld [vmem:[%s5] sm:$0x1]
  %v3334 = vlaneseq
  %v3335 = vshrl.u32 %v3334, 7
  %v3336 = vsub.s32 0, %v3335
  %v3337 = vrot.slane %v3332, %v3336
  %3339 = vmatprep.subr.mxu0 0.0
  %3340 = vmatpush1.msra.mxu0 %v3331
  %3341 = vmatprep.subr.mxu0 0.0
  %3342 = vmatpush1.msra.mxu0 %v3330
  %3343 = vmatprep.subr.mxu0 0.0
  %3344 = vmatpush1.msra.mxu0 %v3329
  %3345 = vmatprep.subr.mxu0 0.0
  %3346 = vmatpush1.msra.mxu0 %v3328
  %3347 = vmatprep.subr.mxu0 0.0
  %3348 = vmatpush1.msra.mxu0 %v3327
  %3349 = vmatprep.subr.mxu0 0.0
  %3350 = vmatpush1.msra.mxu0 %v3326
  %3351 = vmatprep.subr.mxu0 0.0
  %3352 = vmatpush1.msra.mxu0 %v3325
  %3353 = vmatprep.subr.mxu0 0.0
  %3354 = vmatpush1.msra.mxu0 %v3324
  %3355 = vmatprep.subr.mxu0 0.0
  %3356 = vmatpush1.msra.mxu0 %v3323
  %3357 = vmatprep.subr.mxu0 0.0
  %3358 = vmatpush1.msra.mxu0 %v3322
  %3359 = vmatprep.subr.mxu0 0.0
  %3360 = vmatpush1.msra.mxu0 %v3321
  %3361 = vmatprep.subr.mxu0 0.0
  %3362 = vmatpush1.msra.mxu0 %v3320
  %3363 = vmatprep.subr.mxu0 0.0
  %3364 = vmatpush1.msra.mxu0 %v3319
  %3365 = vmatprep.subr.mxu0 0.0
  %3366 = vmatpush1.msra.mxu0 %v3318
  %3367 = vmatprep.subr.mxu0 0.0
  %3368 = vmatpush1.msra.mxu0 %v3317
  %3369 = vmatprep.subr.mxu0 0.0
  %3370 = vmatpush1.msra.mxu0 %v3316
  %3371 = vmatprep.subr.mxu0 0.0
  %3372 = vmatpush2.msra.mxu0 0.0
  %3373 = vmatprep.subr.mxu0 0.0
  %3374 = vmatpush2.msra.mxu0 0.0
  %3375 = vmatprep.subr.mxu0 0.0
  %3376 = vmatpush2.msra.mxu0 0.0
  %3377 = vmatprep.subr.mxu0 0.0
  %3378 = vmatpush2.msra.mxu0 0.0
  %3379 = vmatprep.subr.mxu0 0.0
  %3380 = vmatpush2.msra.mxu0 0.0
  %3381 = vmatprep.subr.mxu0 0.0
  %3382 = vmatpush2.msra.mxu0 0.0
  %3383 = vmatprep.subr.mxu0 0.0
  %3384 = vmatpush2.msra.mxu0 0.0
  %3385 = vmatprep.subr.mxu0 0.0
  %3386 = vmatpush2.msra.mxu0 0.0
  %3387 = vmatprep.subr.mxu0 0.0
  %3388 = vmatpush2.msra.mxu0 0.0
  %3389 = vmatprep.subr.mxu0 0.0
  %3390 = vmatpush2.msra.mxu0 0.0
  %3391 = vmatprep.subr.mxu0 0.0
  %3392 = vmatpush2.msra.mxu0 0.0
  %3393 = vmatprep.subr.mxu0 0.0
  %3394 = vmatpush2.msra.mxu0 0.0
  %3395 = vmatprep.subr.mxu0 0.0
  %3396 = vmatpush2.msra.mxu0 0.0
  %3397 = vmatprep.subr.mxu0 0.0
  %3398 = vmatpush2.msra.mxu0 0.0
  %3399 = vmatprep.subr.mxu0 0.0
  %3400 = vmatpush2.msra.mxu0 0.0
  %3401 = vmatprep.subr.mxu0 0.0
  %3402 = vmatpush2.msra.mxu0 0.0
  %3403 = vmatprep.mubr.f32.mxu0 0.0
  %3404 = vmatmul.mubr.f32.gmra.mxu0 %v3315
  %v3405 = vpop.f32.mrf.mxu0
  %v3406 = vadd.f32 %v3337, %v3405
  %v3407 = vpop.f32.mrf.mxu0
  %3408 = vdwg.mxu0
  %3409 = vst [vmem:[%s7] sm:$0xff] %v3406
  // Predicated region
  $region162: #{gru_model.1} parent=0 // pred_check
    _
  $region163: #{gru_model.1} parent=0 // pred_check_branch
    %3411 = sbr.rel (0) target = $region165
  $region164: #{gru_model.1} parent=0 // pred_region
    _
  $region165: #{gru_model.1} parent=0 // pred_fallthru
    _
  // Predicated region
  $region166: #{gru_model.1} parent=0 // pred_check
    _
  $region167: #{gru_model.1} parent=0 // pred_check_branch
    %3413 = sbr.rel (0) target = $region169
  $region168: #{gru_model.1} parent=0 // pred_region
    _
  $region169: #{gru_model.1} parent=0 // pred_fallthru
    _
  %3414 = vsyncmov [#allocation3]
  %s3415 = vpop.sfrf %3414
  %p3416 = scmp.eq.s32.totalorder %s3415, 0
  %p3417 = pneg %p3416
  %3419 = shalt.err (%p3417)
  %s3420 = scalar_lea.sflag [#allocation3], 1
  %3421 = vsyncmov %s3420
  %s3422 = vpop.sfrf %3421
  %p3423 = scmp.eq.s32.totalorder %s3422, 0
  %p3424 = pneg %p3423
  %3426 = shalt.err (%p3424)
  %s3427 = scalar_lea.sflag [#allocation3], 2
  %3428 = vsyncmov %s3427
  %s3429 = vpop.sfrf %3428
  %p3430 = scmp.eq.s32.totalorder %s3429, 0
  %p3431 = pneg %p3430
  %3433 = shalt.err (%p3431)
  %s3434 = scalar_lea.sflag [#allocation3], 3
  %3435 = vsyncmov %s3434
  %s3436 = vpop.sfrf %3435
  %p3437 = scmp.eq.s32.totalorder %s3436, 0
  %p3438 = pneg %p3437
  %3440 = shalt.err (%p3438)

</llo_original>
